<compile_context>
chip_gen: v6e
topology: v6e:2x2x1
jax: 0.10.0
libtpu: 0.0.40
codegen_flags: <defaults>
</compile_context>

<pallas_src>
import jax
import jax.numpy as jnp
from jax.experimental import pallas as pl
from jax.experimental.pallas import tpu as pltpu


def classifier11_kernel(x_ref, w1_ref, b1_ref, w2_ref, b2_ref, o_ref, acc_ref):
    # x_ref: (TILE_N, C, TILE_HW) -- channels on sublanes, spatial on lanes.
    s = pl.program_id(1)

    @pl.when(s == 0)
    def _():
        acc_ref[...] = jnp.zeros_like(acc_ref)

    # AdaptiveAvgPool2d((1,1)): accumulate a raw spatial sum over the lane
    # (spatial) axis; the 1/(H*W) scale is folded into w1 on the host.
    acc_ref[...] += jnp.sum(x_ref[...].astype(jnp.float32), axis=-1)

    @pl.when(s == pl.num_programs(1) - 1)
    def _():
        pooled = acc_ref[...]                                    # (TILE_N, C)
        # Linear(256 -> 2048) + SiLU
        h = jnp.dot(pooled, w1_ref[...],
                    preferred_element_type=jnp.float32) + b1_ref[...]
        h = h * jax.nn.sigmoid(h)
        # TODO(synk): nn.Dropout() is identity in eval mode; training-mode
        # p=0.5 scaled masking is not implemented here.
        # Linear(2048 -> padded num_classes), lane-dense output store.
        out = jnp.dot(h, w2_ref[...],
                      preferred_element_type=jnp.float32) + b2_ref[...]
        o_ref[...] = out.astype(o_ref.dtype)


def classifier11_forward(x_nchw, w1, b1, w2, b2, *, max_tile_hw=2048):
    """x_nchw: (N, C, H, W).  w1:(C,hidden) b1:(1,hidden) w2:(hidden,nc) b2:(1,nc).
    Returns (N, num_classes) f32 (eval-mode forward)."""
    N, C, H, W = x_nchw.shape
    HW = H * W
    hidden = w1.shape[1]
    num_classes = w2.shape[1]

    # ---- host-side layout: contiguous reshape only, NO transpose ----------
    x = x_nchw.reshape(N, C, HW)

    # Fold 1/(H*W) into w1 so the kernel accumulates a raw spatial sum.
    w1s = (w1 * (1.0 / HW)).astype(jnp.float32)
    b1f = b1.astype(jnp.float32)

    # Lane-dense output: pad num_classes -> 128 with zero columns.
    OUT_PAD = 128
    w2p = jnp.zeros((hidden, OUT_PAD), jnp.float32).at[:, :num_classes].set(w2)
    b2p = jnp.zeros((1, OUT_PAD), jnp.float32).at[:, :num_classes].set(b2)

    # ---- batch tiling ------------------------------------------------------
    if N <= 8:
        TILE_N, N_pad = N, N
    else:
        TILE_N = 8                       # >=2 batch blocks for megacore when N>=16
        N_pad = pl.cdiv(N, 8) * 8
    if N_pad != N:
        x = jnp.pad(x, ((0, N_pad - N), (0, 0), (0, 0)))

    # ---- generation-aware VMEM budget -> spatial tile ----------------------
    try:
        vmem_cap = pltpu.get_tpu_info().vmem_capacity_bytes
    except Exception:
        vmem_cap = 64 << 20              # v7x worst case
    vmem_budget = int(vmem_cap * 0.75)

    f32b = 4
    xb = jnp.dtype(x.dtype).itemsize
    weight_bytes = (w1s.size + b1f.size + w2p.size + b2p.size) * f32b  # single-buffered
    misc_bytes = 2 * TILE_N * OUT_PAD * f32b + TILE_N * C * f32b + (2 << 20)

    x_budget = max(vmem_budget - weight_bytes - misc_bytes,
                   2 * TILE_N * C * 128 * xb)
    fit_hw = x_budget // (2 * TILE_N * C * xb)          # double-buffered x tile
    HW128 = pl.cdiv(HW, 128) * 128
    TILE_HW = max(128, min(HW128, max_tile_hw, (fit_hw // 128) * 128))
    HW_pad = pl.cdiv(HW, TILE_HW) * TILE_HW
    if HW_pad != HW:
        # Zero spatial padding does not change the sum.
        x = jnp.pad(x, ((0, 0), (0, 0), (0, HW_pad - HW)))

    grid = (N_pad // TILE_N, HW_pad // TILE_HW)

    need = 2 * TILE_N * C * TILE_HW * xb + weight_bytes + misc_bytes
    vmem_limit = int(min(max(int(need * 1.25), 16 << 20), vmem_budget))

    resident = pl.Buffered(1)            # weights never re-fetched: single buffer

    out_padded = pl.pallas_call(
        classifier11_kernel,
        out_shape=jax.ShapeDtypeStruct((N_pad, OUT_PAD), jnp.float32),
        grid_spec=pltpu.PrefetchScalarGridSpec(
            num_scalar_prefetch=0,
            grid=grid,
            in_specs=[
                pl.BlockSpec((TILE_N, C, TILE_HW), lambda b, s: (b, 0, s)),
                pl.BlockSpec((C, hidden), lambda b, s: (0, 0),
                             pipeline_mode=resident),
                pl.BlockSpec((1, hidden), lambda b, s: (0, 0),
                             pipeline_mode=resident),
                pl.BlockSpec((hidden, OUT_PAD), lambda b, s: (0, 0),
                             pipeline_mode=resident),
                pl.BlockSpec((1, OUT_PAD), lambda b, s: (0, 0),
                             pipeline_mode=resident),
            ],
            out_specs=pl.BlockSpec((TILE_N, OUT_PAD), lambda b, s: (b, 0)),
            scratch_shapes=[pltpu.VMEM((TILE_N, C), jnp.float32)],
        ),
        compiler_params=pltpu.CompilerParams(
            dimension_semantics=("parallel", "arbitrary"),
            vmem_limit_bytes=vmem_limit,
        ),
    )(x, w1s, b1f, w2p, b2p)

    return out_padded[:N, :num_classes]


def init_params(key, group_num=2, num_classes=2):
    in_features = 128 * group_num  # 256
    hidden = 2048
    k1, k2, k3, k4 = jax.random.split(key, 4)
    # PyTorch default Linear init: U(-1/sqrt(fan_in), 1/sqrt(fan_in))
    lim1 = 1.0 / jnp.sqrt(in_features)
    lim2 = 1.0 / jnp.sqrt(hidden)
    w1 = jax.random.uniform(k1, (in_features, hidden), jnp.float32, -lim1, lim1)
    b1 = jax.random.uniform(k2, (1, hidden), jnp.float32, -lim1, lim1)
    w2 = jax.random.uniform(k3, (hidden, num_classes), jnp.float32, -lim2, lim2)
    b2 = jax.random.uniform(k4, (1, num_classes), jnp.float32, -lim2, lim2)
    return w1, b1, w2, b2


if __name__ == "__main__":
    key = jax.random.PRNGKey(0)
    k_x, k_p = jax.random.split(key)

    # Small but shape-consistent input: C must equal 128*group_num = 256.
    N, C, H, W = 2, 256, 16, 16
    x = jax.random.normal(k_x, (N, C, H, W), jnp.float32)

    w1, b1, w2, b2 = init_params(k_p)

    # max_tile_hw=128 -> 2 streamed spatial grid steps even at this small demo
    # size, exercising the pipelined accumulator path.
    out = classifier11_forward(x, w1, b1, w2, b2, max_tile_hw=128)
    out = jax.block_until_ready(out)

    # Reference in plain JAX (eval-mode dropout = identity).
    pooled = jnp.mean(x, axis=(2, 3))
    h = pooled @ w1 + b1
    h = h * jax.nn.sigmoid(h)
    ref = h @ w2 + b2

    assert out.shape == (N, 2)
    assert jnp.allclose(out, ref, atol=1e-4, rtol=1e-4), float(
        jnp.max(jnp.abs(out - ref)))

    print("KERNEL_OK")
</pallas_src>

<mosaic_0001>
module attributes {stable_mosaic.version = 11 : i64} {
  func.func @classifier11_kernel(%arg0: i32, %arg1: i32, %arg2: memref<2x256x128xf32, #tpu.memory_space<vmem>>, %arg3: memref<256x2048xf32, #tpu.memory_space<vmem>>, %arg4: memref<1x2048xf32, #tpu.memory_space<vmem>>, %arg5: memref<2048x128xf32, #tpu.memory_space<vmem>>, %arg6: memref<1x128xf32, #tpu.memory_space<vmem>>, %arg7: memref<2x128xf32, #tpu.memory_space<vmem>>, %arg8: memref<2x256xf32, #tpu.memory_space<vmem>>) attributes {dimension_semantics = [#tpu.dimension_semantics<parallel>, #tpu.dimension_semantics<arbitrary>], iteration_bounds = array<i64: 1, 2>, scalar_prefetch = 0 : i64, scratch_operands = 1 : i64, tpu.core_type = #tpu.core_type<tc>, window_params = [{transform_indices = @transform_0, window_bounds = array<i64: 2, 256, 128>}, {pipeline_mode = #tpu.pipeline_mode<synchronous>, transform_indices = @transform_1, window_bounds = array<i64: 256, 2048>}, {pipeline_mode = #tpu.pipeline_mode<synchronous>, transform_indices = @transform_2, window_bounds = array<i64: 1, 2048>}, {pipeline_mode = #tpu.pipeline_mode<synchronous>, transform_indices = @transform_3, window_bounds = array<i64: 2048, 128>}, {pipeline_mode = #tpu.pipeline_mode<synchronous>, transform_indices = @transform_4, window_bounds = array<i64: 1, 128>}, {transform_indices = @transform_5, window_bounds = array<i64: 2, 128>}]} {
    %c0_i32 = arith.constant 0 : i32
    %0 = arith.cmpi eq, %arg1, %c0_i32 : i32
    %1 = arith.extui %0 : i1 to i32
    %c0_i32_0 = arith.constant 0 : i32
    %2 = arith.cmpi ne, %1, %c0_i32_0 : i32
    scf.if %2 {
      %cst_8 = arith.constant 0.000000e+00 : f32
      %11 = vector.broadcast %cst_8 : f32 to vector<2x256xf32>
      %c0_9 = arith.constant 0 : index
      %c0_10 = arith.constant 0 : index
      %12 = vector.load %arg8[%c0_9, %c0_10] : memref<2x256xf32, #tpu.memory_space<vmem>>, vector<2x256xf32>
      tpu.vector_store %arg8[%c0_9, %c0_10], %11 {strides = array<i32>} : memref<2x256xf32, #tpu.memory_space<vmem>>, vector<2x256xf32>,
    } else {
    }
    %c0 = arith.constant 0 : index
    %c0_1 = arith.constant 0 : index
    %3 = vector.load %arg8[%c0, %c0_1] : memref<2x256xf32, #tpu.memory_space<vmem>>, vector<2x256xf32>
    %c0_2 = arith.constant 0 : index
    %c0_3 = arith.constant 0 : index
    %c0_4 = arith.constant 0 : index
    %4 = vector.load %arg2[%c0_2, %c0_3, %c0_4] : memref<2x256x128xf32, #tpu.memory_space<vmem>>, vector<2x256x128xf32>
    %cst = arith.constant dense<0.000000e+00> : vector<2x256xf32>
    %5 = vector.multi_reduction <add>, %4, %cst [2] : vector<2x256x128xf32> to vector<2x256xf32>
    %6 = arith.addf %3, %5 : vector<2x256xf32>
    %c0_5 = arith.constant 0 : index
    %c0_6 = arith.constant 0 : index
    %7 = vector.load %arg8[%c0_5, %c0_6] : memref<2x256xf32, #tpu.memory_space<vmem>>, vector<2x256xf32>
    tpu.vector_store %arg8[%c0_5, %c0_6], %6 {strides = array<i32>} : memref<2x256xf32, #tpu.memory_space<vmem>>, vector<2x256xf32>,
    %c1_i32 = arith.constant 1 : i32
    %8 = arith.cmpi eq, %arg1, %c1_i32 : i32
    %9 = arith.extui %8 : i1 to i32
    %c0_i32_7 = arith.constant 0 : i32
    %10 = arith.cmpi ne, %9, %c0_i32_7 : i32
    scf.if %10 {
      %c0_8 = arith.constant 0 : index
      %c0_9 = arith.constant 0 : index
      %11 = vector.load %arg8[%c0_8, %c0_9] : memref<2x256xf32, #tpu.memory_space<vmem>>, vector<2x256xf32>
      %c0_10 = arith.constant 0 : index
      %c0_11 = arith.constant 0 : index
      %12 = vector.load %arg3[%c0_10, %c0_11] : memref<256x2048xf32, #tpu.memory_space<vmem>>, vector<256x2048xf32>
      %cst_12 = arith.constant dense<0.000000e+00> : vector<2x2048xf32>
      %13 = tpu.matmul %11, %12, %cst_12 {dimension_numbers = #tpu.dot_dimension_numbers<[1], [0], [0], [1], [0, 0, 1, 1], [], []>} : vector<2x256xf32>, vector<256x2048xf32>, vector<2x2048xf32> -> vector<2x2048xf32>
      %c0_13 = arith.constant 0 : index
      %c0_14 = arith.constant 0 : index
      %14 = vector.load %arg4[%c0_13, %c0_14] : memref<1x2048xf32, #tpu.memory_space<vmem>>, vector<1x2048xf32>
      %15 = vector.broadcast %14 : vector<1x2048xf32> to vector<2x2048xf32>
      %16 = arith.addf %13, %15 : vector<2x2048xf32>
      %17 = arith.negf %16 : vector<2x2048xf32>
      %18 = math.exp %17 : vector<2x2048xf32>
      %cst_15 = arith.constant 1.000000e+00 : f32
      %19 = vector.broadcast %cst_15 : f32 to vector<2x2048xf32>
      %20 = arith.addf %19, %18 : vector<2x2048xf32>
      %21 = arith.divf %19, %20 : vector<2x2048xf32>
      %22 = arith.mulf %16, %21 : vector<2x2048xf32>
      %c0_16 = arith.constant 0 : index
      %c0_17 = arith.constant 0 : index
      %23 = vector.load %arg5[%c0_16, %c0_17] : memref<2048x128xf32, #tpu.memory_space<vmem>>, vector<2048x128xf32>
      %cst_18 = arith.constant dense<0.000000e+00> : vector<2x128xf32>
      %24 = tpu.matmul %22, %23, %cst_18 {dimension_numbers = #tpu.dot_dimension_numbers<[1], [0], [0], [1], [0, 0, 1, 1], [], []>} : vector<2x2048xf32>, vector<2048x128xf32>, vector<2x128xf32> -> vector<2x128xf32>
      %c0_19 = arith.constant 0 : index
      %c0_20 = arith.constant 0 : index
      %25 = vector.load %arg6[%c0_19, %c0_20] : memref<1x128xf32, #tpu.memory_space<vmem>>, vector<1x128xf32>
      %26 = vector.broadcast %25 : vector<1x128xf32> to vector<2x128xf32>
      %27 = arith.addf %24, %26 : vector<2x128xf32>
      %c0_21 = arith.constant 0 : index
      %c0_22 = arith.constant 0 : index
      %28 = vector.load %arg7[%c0_21, %c0_22] : memref<2x128xf32, #tpu.memory_space<vmem>>, vector<2x128xf32>
      tpu.vector_store %arg7[%c0_21, %c0_22], %27 {strides = array<i32>} : memref<2x128xf32, #tpu.memory_space<vmem>>, vector<2x128xf32>,
    } else {
    }
    return
  }
  func.func @transform_0(%arg0: i32, %arg1: i32) -> (i32, i32, i32) {
    %c0_i32 = arith.constant 0 : i32
    %c0_i32_0 = arith.constant 0 : i32
    return %arg0, %c0_i32, %arg1 : i32, i32, i32
  }
  func.func @transform_1(%arg0: i32, %arg1: i32) -> (i32, i32) {
    %c0_i32 = arith.constant 0 : i32
    %c0_i32_0 = arith.constant 0 : i32
    %c0_i32_1 = arith.constant 0 : i32
    return %c0_i32, %c0_i32_0 : i32, i32
  }
  func.func @transform_2(%arg0: i32, %arg1: i32) -> (i32, i32) {
    %c0_i32 = arith.constant 0 : i32
    %c0_i32_0 = arith.constant 0 : i32
    %c0_i32_1 = arith.constant 0 : i32
    return %c0_i32, %c0_i32_0 : i32, i32
  }
  func.func @transform_3(%arg0: i32, %arg1: i32) -> (i32, i32) {
    %c0_i32 = arith.constant 0 : i32
    %c0_i32_0 = arith.constant 0 : i32
    %c0_i32_1 = arith.constant 0 : i32
    return %c0_i32, %c0_i32_0 : i32, i32
  }
  func.func @transform_4(%arg0: i32, %arg1: i32) -> (i32, i32) {
    %c0_i32 = arith.constant 0 : i32
    %c0_i32_0 = arith.constant 0 : i32
    %c0_i32_1 = arith.constant 0 : i32
    return %c0_i32, %c0_i32_0 : i32, i32
  }
  func.func @transform_5(%arg0: i32, %arg1: i32) -> (i32, i32) {
    %c0_i32 = arith.constant 0 : i32
    %c0_i32_0 = arith.constant 0 : i32
    return %arg0, %c0_i32 : i32, i32
  }
}

</mosaic_0001>

<llo_original>
// kernel: tpu_custom_call.1
$region0: #{tpu_custom_call.1}
  #allocation0 [shape = 'u32[]', space=smem, size = 0x4, offset = 0x4, fixed_abs, tag = 'smem constant byte address 0x4 - core index']
  #allocation1 [shape = 'u32[144,128]{1,0:T(1,128)}', space=vmem, size = 0x12000, scoped, tag = 'internal scratch']
  #allocation2 [shape = 'f32[2,256]{1,0:T(2,128)}', space=vmem, size = 0x800, scoped, tag = 'scratch operand']
  %s0 = inlined_call_operand.hbm [shape: f32[2,256,256], index: 0, kind: input, shape index: {}]
  %s1 = inlined_call_operand.hbm [shape: f32[256,2048], index: 1, kind: input, shape index: {}]
  %s2 = inlined_call_operand.hbm [shape: f32[1,2048], index: 2, kind: input, shape index: {}]
  %s3 = inlined_call_operand.hbm [shape: f32[2048,128], index: 3, kind: input, shape index: {}]
  %s4 = inlined_call_operand.hbm [shape: f32[1,128], index: 4, kind: input, shape index: {}]
  %s5 = inlined_call_operand.hbm [shape: f32[2,128], index: 5, kind: output, shape index: {}]
  %s6 = sld [smem:[#allocation0]]
  $region81: #{tpu_custom_call.1} parent=0
    _
  %s8 = ssub.s32 1, %s6
  %s9 = scalar_select 0, %s8, %s6
  $region1: #{tpu_custom_call.1} parent=0
    #allocation3 [shape = 'u8[524288]{0}', space=vmem, size = 0x80000, scoped, tag = 'input window, operand 0']
    #allocation4 [shape = 's32[2]{0}', space=sflag, size = 0x8, scoped, tag = 'scoped memory for tpu_custom_call.1']
    #allocation5 [shape = 's32[2]{0}', space=sflag, size = 0x8, scoped, tag = 'scoped memory for tpu_custom_call.1']
    #allocation6 [shape = 'u8[2097152]{0}', space=vmem, size = 0x200000, scoped, tag = 'input window, operand 1, single buffered']
    #allocation7 [shape = 's32[1]{0}', space=sflag, size = 0x4, scoped, tag = 'scoped memory for tpu_custom_call.1']
    #allocation8 [shape = 'u8[8192]{0}', space=vmem, size = 0x2000, scoped, tag = 'input window, operand 2, single buffered']
    #allocation9 [shape = 'u8[1048576]{0}', space=vmem, size = 0x100000, scoped, tag = 'input window, operand 3, single buffered']
    #allocation10 [shape = 's32[1]{0}', space=sflag, size = 0x4, scoped, tag = 'scoped memory for tpu_custom_call.1']
    #allocation11 [shape = 'u8[512]{0}', space=vmem, size = 0x400, scoped, tag = 'input window, operand 4, single buffered']
    #allocation12 [shape = 'u8[1024]{0}', space=vmem, size = 0x400, scoped, tag = 'output window, operand 0, single buffered']
    %10 = vsyncpa [#allocation4], 0
    %s11 = scalar_lea.sflag [#allocation4], 1
    %12 = vsyncpa %s11, 0
    %13 = vsyncpa [#allocation7], 0
    %14 = vsyncpa [#allocation10], 0
    %15 = vsyncpa [#allocation5], 0
    loop: start=0, step=1, limit=4
    $region2: #{tpu_custom_call.1} parent=1 // loop_pre_header
      _
    $region3: #{tpu_custom_call.1} parent=1 // loop_header
      %s17 = sphi 0, %s21
      %p18 = scmp.ge.s32.totalorder %s17, 4
      %s24 = sphi 0, %s36
      %s25 = sphi 0, %s32
      %s26 = sphi 0, %s24
      %s27 = sphi 0, %s25
      %s28 = sphi 0, %s26
      %s29 = sphi 0, %s27
      %s41 = sphi 0, %s43
      %s44 = sphi 0, %s41
      %s45 = sphi 0, %s44
      %s61 = sphi 0, %s45
      %s65 = sphi 0, %s65
      %s67 = sphi 0, %s65
      %s68 = sphi 0, %s67
      %s82 = sphi 0, %s68
      %s86 = sphi 0, %s86
      %s88 = sphi 0, %s86
      %s89 = sphi 0, %s88
      %s103 = sphi 0, %s89
      %s107 = sphi 0, %s107
      %s109 = sphi 0, %s107
      %s110 = sphi 0, %s109
      %s124 = sphi 0, %s110
      %s128 = sphi 0, %s128
      %s130 = sphi 0, %s128
      %s131 = sphi 0, %s130
      %s145 = sphi 0, %s131
      %s151 = sphi 0, %s153
      %s154 = sphi 0, %s151
      %s155 = sphi 0, %s154
      %s171 = sphi 0, %s155
    $region4: #{tpu_custom_call.1} parent=1 // loop_header_branch
      %20 = sbr.rel (%p18) target = $region8
    $region5: #{tpu_custom_call.1} parent=1 // loop_body
      %s22 = ssub.s32 %s17, 1
      %s23 = ssub.s32 %s17, 2
      %s30 = sadd.s32 1, %s25
      %p31 = scmp.ge.s32.totalorder %s30, 2
      %s32 = scalar_select %p31, 0, %s30
      %s33 = sadd.s32 1, %s24
      %s34 = scalar_select %p31, %s33, %s24
      %p35 = scmp.ge.s32.totalorder %s34, 1
      %s36 = scalar_select %p35, 0, %s34
      %s37 = ssub.s32 %s24, %s36
      %s38 = ssub.s32 %s25, %s32
      %s39 = sor.u32 %s37, %s38
      %p40 = scmp.eq.s32.totalorder %s39, 0
      %s42 = sadd.s32 %s41, 1
      %s43 = scalar_select %p40, %s41, %s42
      %p46 = pneg %p40
      %p47 = scmp.eq.s32.totalorder %s17, 1
      %p48 = por %p46, %p47
      %p49 = scmp.ne.s32.totalorder %s41, %s44
      %p50 = scmp.eq.s32.totalorder %s17, 0
      %p51 = por %p49, %p50
      %p52 = scmp.ne.s32.totalorder %s41, %s44
      %p53 = scmp.eq.s32.totalorder %s22, 1
      %p54 = por %p52, %p53
      %p55 = scmp.ne.s32.totalorder %s44, %s45
      %p56 = scmp.eq.s32.totalorder %s22, 0
      %p57 = por %p55, %p56
      %p58 = scmp.ne.s32.totalorder %s44, %s45
      %p59 = scmp.eq.s32.totalorder %s23, 1
      %p60 = por %p58, %p59
      %p62 = scmp.ne.s32.totalorder %s45, %s61
      %p63 = scmp.eq.s32.totalorder %s23, 0
      %p64 = por %p62, %p63
      %s66 = sadd.s32 %s65, 1
      %p69 = scmp.eq.s32.totalorder %s17, 1
      %p70 = scmp.ne.s32.totalorder %s65, %s67
      %p71 = scmp.eq.s32.totalorder %s17, 0
      %p72 = por %p70, %p71
      %p73 = scmp.ne.s32.totalorder %s65, %s67
      %p74 = scmp.eq.s32.totalorder %s22, 1
      %p75 = por %p73, %p74
      %p76 = scmp.ne.s32.totalorder %s67, %s68
      %p77 = scmp.eq.s32.totalorder %s22, 0
      %p78 = por %p76, %p77
      %p79 = scmp.ne.s32.totalorder %s67, %s68
      %p80 = scmp.eq.s32.totalorder %s23, 1
      %p81 = por %p79, %p80
      %p83 = scmp.ne.s32.totalorder %s68, %s82
      %p84 = scmp.eq.s32.totalorder %s23, 0
      %p85 = por %p83, %p84
      %s87 = sadd.s32 %s86, 1
      %p90 = scmp.eq.s32.totalorder %s17, 1
      %p91 = scmp.ne.s32.totalorder %s86, %s88
      %p92 = scmp.eq.s32.totalorder %s17, 0
      %p93 = por %p91, %p92
      %p94 = scmp.ne.s32.totalorder %s86, %s88
      %p95 = scmp.eq.s32.totalorder %s22, 1
      %p96 = por %p94, %p95
      %p97 = scmp.ne.s32.totalorder %s88, %s89
      %p98 = scmp.eq.s32.totalorder %s22, 0
      %p99 = por %p97, %p98
      %p100 = scmp.ne.s32.totalorder %s88, %s89
      %p101 = scmp.eq.s32.totalorder %s23, 1
      %p102 = por %p100, %p101
      %p104 = scmp.ne.s32.totalorder %s89, %s103
      %p105 = scmp.eq.s32.totalorder %s23, 0
      %p106 = por %p104, %p105
      %s108 = sadd.s32 %s107, 1
      %p111 = scmp.eq.s32.totalorder %s17, 1
      %p112 = scmp.ne.s32.totalorder %s107, %s109
      %p113 = scmp.eq.s32.totalorder %s17, 0
      %p114 = por %p112, %p113
      %p115 = scmp.ne.s32.totalorder %s107, %s109
      %p116 = scmp.eq.s32.totalorder %s22, 1
      %p117 = por %p115, %p116
      %p118 = scmp.ne.s32.totalorder %s109, %s110
      %p119 = scmp.eq.s32.totalorder %s22, 0
      %p120 = por %p118, %p119
      %p121 = scmp.ne.s32.totalorder %s109, %s110
      %p122 = scmp.eq.s32.totalorder %s23, 1
      %p123 = por %p121, %p122
      %p125 = scmp.ne.s32.totalorder %s110, %s124
      %p126 = scmp.eq.s32.totalorder %s23, 0
      %p127 = por %p125, %p126
      %s129 = sadd.s32 %s128, 1
      %p132 = scmp.eq.s32.totalorder %s17, 1
      %p133 = scmp.ne.s32.totalorder %s128, %s130
      %p134 = scmp.eq.s32.totalorder %s17, 0
      %p135 = por %p133, %p134
      %p136 = scmp.ne.s32.totalorder %s128, %s130
      %p137 = scmp.eq.s32.totalorder %s22, 1
      %p138 = por %p136, %p137
      %p139 = scmp.ne.s32.totalorder %s130, %s131
      %p140 = scmp.eq.s32.totalorder %s22, 0
      %p141 = por %p139, %p140
      %p142 = scmp.ne.s32.totalorder %s130, %s131
      %p143 = scmp.eq.s32.totalorder %s23, 1
      %p144 = por %p142, %p143
      %p146 = scmp.ne.s32.totalorder %s131, %s145
      %p147 = scmp.eq.s32.totalorder %s23, 0
      %p148 = por %p146, %p147
      %s149 = ssub.s32 %s24, %s36
      %p150 = scmp.eq.s32.totalorder %s149, 0
      %s152 = sadd.s32 %s151, 1
      %s153 = scalar_select %p150, %s151, %s152
      %p156 = pneg %p150
      %p157 = scmp.eq.s32.totalorder %s17, 1
      %p158 = por %p156, %p157
      %p159 = scmp.ne.s32.totalorder %s151, %s154
      %p160 = scmp.eq.s32.totalorder %s17, 0
      %p161 = por %p159, %p160
      %p162 = scmp.ne.s32.totalorder %s151, %s154
      %p163 = scmp.eq.s32.totalorder %s22, 1
      %p164 = por %p162, %p163
      %p165 = scmp.ne.s32.totalorder %s154, %s155
      %p166 = scmp.eq.s32.totalorder %s22, 0
      %p167 = por %p165, %p166
      %p168 = scmp.ne.s32.totalorder %s154, %s155
      %p169 = scmp.eq.s32.totalorder %s23, 1
      %p170 = por %p168, %p169
      %p172 = scmp.ne.s32.totalorder %s155, %s171
      %p173 = scmp.eq.s32.totalorder %s23, 0
      %p174 = por %p172, %p173
      %p175 = scmp.le.s32.totalorder 1, %s17
      %p176 = scmp.lt.s32.totalorder %s17, 3
      %p177 = pnand %p175, %p176
      %p178 = pneg %p177
      // Predicated region
      $region9: #{tpu_custom_call.1} parent=5 // pred_check
        _
      $region10: #{tpu_custom_call.1} parent=5 // pred_check_branch
        %180 = sbr.rel (%p177) target = $region12
      $region11: #{tpu_custom_call.1} parent=5 // pred_region
        %s181 = ssub.s32 %s17, 1
        // Predicated region
        $region13: #{tpu_custom_call.1} parent=11 // pred_check
          %p182 = pneg %p78
        $region14: #{tpu_custom_call.1} parent=11 // pred_check_branch
          %184 = sbr.rel (%p182) target = $region16
        $region15: #{tpu_custom_call.1} parent=11 // pred_region
          %s186 = ssub.s32 65536, 65536
          %187 = vsyncadd [#allocation7], %s186
          %s188 = sshll.u32 [#allocation6], 4
          %s189 = int_to_ptr.vmem [resolvable:$true] %s188
          %194 = dma.hbm_to_vmem [thread:$0]  %s1, 65536, %s189, [#allocation7], 2048, 2048, 128
        $region16: #{tpu_custom_call.1} parent=11 // pred_fallthru
          _
        // Predicated region
        $region17: #{tpu_custom_call.1} parent=11 // pred_check
          %p195 = pneg %p99
        $region18: #{tpu_custom_call.1} parent=11 // pred_check_branch
          %197 = sbr.rel (%p195) target = $region20
        $region19: #{tpu_custom_call.1} parent=11 // pred_region
          %s199 = ssub.s32 256, 256
          %200 = vsyncadd [#allocation7], %s199
          %s202 = sshll.u32 [#allocation8], 4
          %s203 = int_to_ptr.vmem [resolvable:$true] %s202
          %205 = dma.hbm_to_vmem [thread:$0]  %s2, 256, %s203, [#allocation7]
        $region20: #{tpu_custom_call.1} parent=11 // pred_fallthru
          _
        // Predicated region
        $region21: #{tpu_custom_call.1} parent=11 // pred_check
          %p206 = pneg %p120
        $region22: #{tpu_custom_call.1} parent=11 // pred_check_branch
          %208 = sbr.rel (%p206) target = $region24
        $region23: #{tpu_custom_call.1} parent=11 // pred_region
          %s210 = ssub.s32 32768, 32768
          %211 = vsyncadd [#allocation10], %s210
          %s212 = sshll.u32 [#allocation9], 4
          %s213 = int_to_ptr.vmem [resolvable:$true] %s212
          %218 = dma.hbm_to_vmem [thread:$0]  %s3, 32768, %s213, [#allocation10], 128, 128, 8
        $region24: #{tpu_custom_call.1} parent=11 // pred_fallthru
          _
        // Predicated region
        $region25: #{tpu_custom_call.1} parent=11 // pred_check
          %p219 = pneg %p141
        $region26: #{tpu_custom_call.1} parent=11 // pred_check_branch
          %221 = sbr.rel (%p219) target = $region28
        $region27: #{tpu_custom_call.1} parent=11 // pred_region
          %s223 = ssub.s32 16, 16
          %224 = vsyncadd [#allocation10], %s223
          %s226 = sshll.u32 [#allocation11], 4
          %s227 = int_to_ptr.vmem [resolvable:$true] %s226
          %229 = dma.hbm_to_vmem [thread:$0]  %s4, 16, %s227, [#allocation10]
        $region28: #{tpu_custom_call.1} parent=11 // pred_fallthru
          _
      $region12: #{tpu_custom_call.1} parent=5 // pred_fallthru
        _
      %p230 = scmp.lt.s32.totalorder %s17, 2
      // Predicated region
      $region29: #{tpu_custom_call.1} parent=5 // pred_check
        %p231 = pneg %p230
      $region30: #{tpu_custom_call.1} parent=5 // pred_check_branch
        %233 = sbr.rel (%p231) target = $region32
      $region31: #{tpu_custom_call.1} parent=5 // pred_region
        // Predicated region
        $region33: #{tpu_custom_call.1} parent=31 // pred_check
          %p234 = pneg %p51
        $region34: #{tpu_custom_call.1} parent=31 // pred_check_branch
          %236 = sbr.rel (%p234) target = $region36
        $region35: #{tpu_custom_call.1} parent=31 // pred_region
          %s237 = sand.u32 %s41, 1
          %s238 = scalar_lea.sflag [#allocation4], %s237
          %s239 = sand.u32 %s41, 1
          %s240 = smul.addr %s239, 512
          %s241 = scalar_lea.vmem [#allocation3], %s240
          %s242 = smul.u32 2, %s24
          %s244 = ssub.s32 8192, 8192
          %245 = vsyncadd %s238, %s244
          %s246 = smul.addr %s242, 64
          %s247 = sadd.s32 %s25, %s246
          %s248 = smul.addr %s247, 128
          %s249 = scalar_lea.hbm %s0, %s248
          %s250 = sshll.u32 %s241, 4
          %s251 = int_to_ptr.vmem [resolvable:$true] %s250
          %256 = dma.hbm_to_vmem [thread:$0]  %s249, 8192, %s251, %s238, 256, 128, 8
        $region36: #{tpu_custom_call.1} parent=31 // pred_fallthru
          _
      $region32: #{tpu_custom_call.1} parent=5 // pred_fallthru
        _
      %p257 = scmp.le.s32.totalorder 1, %s17
      %p258 = scmp.lt.s32.totalorder %s17, 3
      %p259 = pnand %p257, %p258
      %p260 = pneg %p259
      // Predicated region
      $region37: #{tpu_custom_call.1} parent=5 // pred_check
        _
      $region38: #{tpu_custom_call.1} parent=5 // pred_check_branch
        %262 = sbr.rel (%p259) target = $region40
      $region39: #{tpu_custom_call.1} parent=5 // pred_region
        %s263 = ssub.s32 %s17, 1
        %s264 = sand.u32 %s44, 1
        %s265 = scalar_lea.sflag [#allocation4], %s264
        %s266 = sand.u32 %s44, 1
        %s267 = smul.addr %s266, 512
        %s268 = scalar_lea.vmem [#allocation3], %s267
        // Predicated region
        $region41: #{tpu_custom_call.1} parent=39 // pred_check
          %p269 = pneg %p57
        $region42: #{tpu_custom_call.1} parent=39 // pred_check_branch
          %271 = sbr.rel (%p269) target = $region44
        $region43: #{tpu_custom_call.1} parent=39 // pred_region
          %272 = dma.done %s265, 8192
        $region44: #{tpu_custom_call.1} parent=39 // pred_fallthru
          _
        // Predicated region
        $region45: #{tpu_custom_call.1} parent=39 // pred_check
          %p273 = pneg %p78
        $region46: #{tpu_custom_call.1} parent=39 // pred_check_branch
          %275 = sbr.rel (%p273) target = $region48
        $region47: #{tpu_custom_call.1} parent=39 // pred_region
          %276 = dma.done [#allocation7], 65536
        $region48: #{tpu_custom_call.1} parent=39 // pred_fallthru
          _
        // Predicated region
        $region49: #{tpu_custom_call.1} parent=39 // pred_check
          %p277 = pneg %p99
        $region50: #{tpu_custom_call.1} parent=39 // pred_check_branch
          %279 = sbr.rel (%p277) target = $region52
        $region51: #{tpu_custom_call.1} parent=39 // pred_region
          %280 = dma.done [#allocation7], 256
        $region52: #{tpu_custom_call.1} parent=39 // pred_fallthru
          _
        // Predicated region
        $region53: #{tpu_custom_call.1} parent=39 // pred_check
          %p281 = pneg %p120
        $region54: #{tpu_custom_call.1} parent=39 // pred_check_branch
          %283 = sbr.rel (%p281) target = $region56
        $region55: #{tpu_custom_call.1} parent=39 // pred_region
          %284 = dma.done [#allocation10], 32768
        $region56: #{tpu_custom_call.1} parent=39 // pred_fallthru
          _
        // Predicated region
        $region57: #{tpu_custom_call.1} parent=39 // pred_check
          %p285 = pneg %p141
        $region58: #{tpu_custom_call.1} parent=39 // pred_check_branch
          %287 = sbr.rel (%p285) target = $region60
        $region59: #{tpu_custom_call.1} parent=39 // pred_region
          %288 = dma.done [#allocation10], 16
        $region60: #{tpu_custom_call.1} parent=39 // pred_fallthru
          _
        %s289 = sand.u32 %s44, 1
        %s290 = scalar_lea.sflag [#allocation4], %s289
        %s291 = sand.u32 %s44, 1
        %s292 = smul.addr %s291, 512
        %s293 = scalar_lea.vmem [#allocation3], %s292
        %p294 = pneg %p57
        %p295 = pneg %p54
        %p296 = pneg %p78
        %p297 = pneg %p75
        %p298 = pneg %p99
        %p299 = pneg %p96
        %p300 = pneg %p120
        %p301 = pneg %p117
        %p302 = pneg %p141
        %p303 = pneg %p138
        %p304 = pneg %p167
        %p305 = pneg %p164
        %s306 = smul.u32 2, %s26
        %p307 = scmp.eq.s32.totalorder %s27, 0
        // Predicated region
        $region61: #{tpu_custom_call.1} parent=39 // pred_check
          %p308 = pneg %p307
        $region62: #{tpu_custom_call.1} parent=39 // pred_check_branch
          %310 = sbr.rel (%p308) target = $region64
        $region63: #{tpu_custom_call.1} parent=39 // pred_region
          %311 = vst [vmem:[#allocation2] sm:$0xf] 0.0
        $region64: #{tpu_custom_call.1} parent=39 // pred_fallthru
          _
        %v312 = vld [vmem:[#allocation2] sm:$0xf]
        %v313 = vld [vmem:[%s268] sm:$0xff]
        %v314 = vld [vmem:[%s268 + $0x8] sm:$0xff]
        %v315 = vld [vmem:[%s268 + $0x10] sm:$0xff]
        %v316 = vld [vmem:[%s268 + $0x18] sm:$0xff]
        %v317 = vld [vmem:[%s268 + $0x20] sm:$0xff]
        %v318 = vld [vmem:[%s268 + $0x28] sm:$0xff]
        %v319 = vld [vmem:[%s268 + $0x30] sm:$0xff]
        %v320 = vld [vmem:[%s268 + $0x38] sm:$0xff]
        %v321 = vld [vmem:[%s268 + $0x40] sm:$0xff]
        %v322 = vld [vmem:[%s268 + $0x48] sm:$0xff]
        %v323 = vld [vmem:[%s268 + $0x50] sm:$0xff]
        %v324 = vld [vmem:[%s268 + $0x58] sm:$0xff]
        %v325 = vld [vmem:[%s268 + $0x60] sm:$0xff]
        %v326 = vld [vmem:[%s268 + $0x68] sm:$0xff]
        %v327 = vld [vmem:[%s268 + $0x70] sm:$0xff]
        %v328 = vld [vmem:[%s268 + $0x78] sm:$0xff]
        %v329 = vld [vmem:[%s268 + $0x80] sm:$0xff]
        %v330 = vld [vmem:[%s268 + $0x88] sm:$0xff]
        %v331 = vld [vmem:[%s268 + $0x90] sm:$0xff]
        %v332 = vld [vmem:[%s268 + $0x98] sm:$0xff]
        %v333 = vld [vmem:[%s268 + $0xa0] sm:$0xff]
        %v334 = vld [vmem:[%s268 + $0xa8] sm:$0xff]
        %v335 = vld [vmem:[%s268 + $0xb0] sm:$0xff]
        %v336 = vld [vmem:[%s268 + $0xb8] sm:$0xff]
        %v337 = vld [vmem:[%s268 + $0xc0] sm:$0xff]
        %v338 = vld [vmem:[%s268 + $0xc8] sm:$0xff]
        %v339 = vld [vmem:[%s268 + $0xd0] sm:$0xff]
        %v340 = vld [vmem:[%s268 + $0xd8] sm:$0xff]
        %v341 = vld [vmem:[%s268 + $0xe0] sm:$0xff]
        %v342 = vld [vmem:[%s268 + $0xe8] sm:$0xff]
        %v343 = vld [vmem:[%s268 + $0xf0] sm:$0xff]
        %v344 = vld [vmem:[%s268 + $0xf8] sm:$0xff]
        %v345 = vld [vmem:[%s268 + $0x100] sm:$0xff]
        %v346 = vld [vmem:[%s268 + $0x108] sm:$0xff]
        %v347 = vld [vmem:[%s268 + $0x110] sm:$0xff]
        %v348 = vld [vmem:[%s268 + $0x118] sm:$0xff]
        %v349 = vld [vmem:[%s268 + $0x120] sm:$0xff]
        %v350 = vld [vmem:[%s268 + $0x128] sm:$0xff]
        %v351 = vld [vmem:[%s268 + $0x130] sm:$0xff]
        %v352 = vld [vmem:[%s268 + $0x138] sm:$0xff]
        %v353 = vld [vmem:[%s268 + $0x140] sm:$0xff]
        %v354 = vld [vmem:[%s268 + $0x148] sm:$0xff]
        %v355 = vld [vmem:[%s268 + $0x150] sm:$0xff]
        %v356 = vld [vmem:[%s268 + $0x158] sm:$0xff]
        %v357 = vld [vmem:[%s268 + $0x160] sm:$0xff]
        %v358 = vld [vmem:[%s268 + $0x168] sm:$0xff]
        %v359 = vld [vmem:[%s268 + $0x170] sm:$0xff]
        %v360 = vld [vmem:[%s268 + $0x178] sm:$0xff]
        %v361 = vld [vmem:[%s268 + $0x180] sm:$0xff]
        %v362 = vld [vmem:[%s268 + $0x188] sm:$0xff]
        %v363 = vld [vmem:[%s268 + $0x190] sm:$0xff]
        %v364 = vld [vmem:[%s268 + $0x198] sm:$0xff]
        %v365 = vld [vmem:[%s268 + $0x1a0] sm:$0xff]
        %v366 = vld [vmem:[%s268 + $0x1a8] sm:$0xff]
        %v367 = vld [vmem:[%s268 + $0x1b0] sm:$0xff]
        %v368 = vld [vmem:[%s268 + $0x1b8] sm:$0xff]
        %v369 = vld [vmem:[%s268 + $0x1c0] sm:$0xff]
        %v370 = vld [vmem:[%s268 + $0x1c8] sm:$0xff]
        %v371 = vld [vmem:[%s268 + $0x1d0] sm:$0xff]
        %v372 = vld [vmem:[%s268 + $0x1d8] sm:$0xff]
        %v373 = vld [vmem:[%s268 + $0x1e0] sm:$0xff]
        %v374 = vld [vmem:[%s268 + $0x1e8] sm:$0xff]
        %v375 = vld [vmem:[%s268 + $0x1f0] sm:$0xff]
        %v376 = vld [vmem:[%s268 + $0x1f8] sm:$0xff]
        %377 = vadd.xlane.f32.xlu0 %v313
        %v378 = vpop.xlane.xlu0 %377
        %379 = vadd.xlane.f32.xlu0 %v314
        %v380 = vpop.xlane.xlu0 %379
        %381 = vadd.xlane.f32.xlu0 %v315
        %v382 = vpop.xlane.xlu0 %381
        %383 = vadd.xlane.f32.xlu0 %v316
        %v384 = vpop.xlane.xlu0 %383
        %385 = vadd.xlane.f32.xlu0 %v317
        %v386 = vpop.xlane.xlu0 %385
        %387 = vadd.xlane.f32.xlu0 %v318
        %v388 = vpop.xlane.xlu0 %387
        %389 = vadd.xlane.f32.xlu0 %v319
        %v390 = vpop.xlane.xlu0 %389
        %391 = vadd.xlane.f32.xlu0 %v320
        %v392 = vpop.xlane.xlu0 %391
        %393 = vadd.xlane.f32.xlu0 %v321
        %v394 = vpop.xlane.xlu0 %393
        %395 = vadd.xlane.f32.xlu0 %v322
        %v396 = vpop.xlane.xlu0 %395
        %397 = vadd.xlane.f32.xlu0 %v323
        %v398 = vpop.xlane.xlu0 %397
        %399 = vadd.xlane.f32.xlu0 %v324
        %v400 = vpop.xlane.xlu0 %399
        %401 = vadd.xlane.f32.xlu0 %v325
        %v402 = vpop.xlane.xlu0 %401
        %403 = vadd.xlane.f32.xlu0 %v326
        %v404 = vpop.xlane.xlu0 %403
        %405 = vadd.xlane.f32.xlu0 %v327
        %v406 = vpop.xlane.xlu0 %405
        %407 = vadd.xlane.f32.xlu0 %v328
        %v408 = vpop.xlane.xlu0 %407
        %409 = vadd.xlane.f32.xlu0 %v329
        %v410 = vpop.xlane.xlu0 %409
        %411 = vadd.xlane.f32.xlu0 %v330
        %v412 = vpop.xlane.xlu0 %411
        %413 = vadd.xlane.f32.xlu0 %v331
        %v414 = vpop.xlane.xlu0 %413
        %415 = vadd.xlane.f32.xlu0 %v332
        %v416 = vpop.xlane.xlu0 %415
        %417 = vadd.xlane.f32.xlu0 %v333
        %v418 = vpop.xlane.xlu0 %417
        %419 = vadd.xlane.f32.xlu0 %v334
        %v420 = vpop.xlane.xlu0 %419
        %421 = vadd.xlane.f32.xlu0 %v335
        %v422 = vpop.xlane.xlu0 %421
        %423 = vadd.xlane.f32.xlu0 %v336
        %v424 = vpop.xlane.xlu0 %423
        %425 = vadd.xlane.f32.xlu0 %v337
        %v426 = vpop.xlane.xlu0 %425
        %427 = vadd.xlane.f32.xlu0 %v338
        %v428 = vpop.xlane.xlu0 %427
        %429 = vadd.xlane.f32.xlu0 %v339
        %v430 = vpop.xlane.xlu0 %429
        %431 = vadd.xlane.f32.xlu0 %v340
        %v432 = vpop.xlane.xlu0 %431
        %433 = vadd.xlane.f32.xlu0 %v341
        %v434 = vpop.xlane.xlu0 %433
        %435 = vadd.xlane.f32.xlu0 %v342
        %v436 = vpop.xlane.xlu0 %435
        %437 = vadd.xlane.f32.xlu0 %v343
        %v438 = vpop.xlane.xlu0 %437
        %439 = vadd.xlane.f32.xlu0 %v344
        %v440 = vpop.xlane.xlu0 %439
        %441 = vadd.xlane.f32.xlu0 %v345
        %v442 = vpop.xlane.xlu0 %441
        %443 = vadd.xlane.f32.xlu0 %v346
        %v444 = vpop.xlane.xlu0 %443
        %445 = vadd.xlane.f32.xlu0 %v347
        %v446 = vpop.xlane.xlu0 %445
        %447 = vadd.xlane.f32.xlu0 %v348
        %v448 = vpop.xlane.xlu0 %447
        %449 = vadd.xlane.f32.xlu0 %v349
        %v450 = vpop.xlane.xlu0 %449
        %451 = vadd.xlane.f32.xlu0 %v350
        %v452 = vpop.xlane.xlu0 %451
        %453 = vadd.xlane.f32.xlu0 %v351
        %v454 = vpop.xlane.xlu0 %453
        %455 = vadd.xlane.f32.xlu0 %v352
        %v456 = vpop.xlane.xlu0 %455
        %457 = vadd.xlane.f32.xlu0 %v353
        %v458 = vpop.xlane.xlu0 %457
        %459 = vadd.xlane.f32.xlu0 %v354
        %v460 = vpop.xlane.xlu0 %459
        %461 = vadd.xlane.f32.xlu0 %v355
        %v462 = vpop.xlane.xlu0 %461
        %463 = vadd.xlane.f32.xlu0 %v356
        %v464 = vpop.xlane.xlu0 %463
        %465 = vadd.xlane.f32.xlu0 %v357
        %v466 = vpop.xlane.xlu0 %465
        %467 = vadd.xlane.f32.xlu0 %v358
        %v468 = vpop.xlane.xlu0 %467
        %469 = vadd.xlane.f32.xlu0 %v359
        %v470 = vpop.xlane.xlu0 %469
        %471 = vadd.xlane.f32.xlu0 %v360
        %v472 = vpop.xlane.xlu0 %471
        %473 = vadd.xlane.f32.xlu0 %v361
        %v474 = vpop.xlane.xlu0 %473
        %475 = vadd.xlane.f32.xlu0 %v362
        %v476 = vpop.xlane.xlu0 %475
        %477 = vadd.xlane.f32.xlu0 %v363
        %v478 = vpop.xlane.xlu0 %477
        %479 = vadd.xlane.f32.xlu0 %v364
        %v480 = vpop.xlane.xlu0 %479
        %481 = vadd.xlane.f32.xlu0 %v365
        %v482 = vpop.xlane.xlu0 %481
        %483 = vadd.xlane.f32.xlu0 %v366
        %v484 = vpop.xlane.xlu0 %483
        %485 = vadd.xlane.f32.xlu0 %v367
        %v486 = vpop.xlane.xlu0 %485
        %487 = vadd.xlane.f32.xlu0 %v368
        %v488 = vpop.xlane.xlu0 %487
        %489 = vadd.xlane.f32.xlu0 %v369
        %v490 = vpop.xlane.xlu0 %489
        %491 = vadd.xlane.f32.xlu0 %v370
        %v492 = vpop.xlane.xlu0 %491
        %493 = vadd.xlane.f32.xlu0 %v371
        %v494 = vpop.xlane.xlu0 %493
        %495 = vadd.xlane.f32.xlu0 %v372
        %v496 = vpop.xlane.xlu0 %495
        %497 = vadd.xlane.f32.xlu0 %v373
        %v498 = vpop.xlane.xlu0 %497
        %499 = vadd.xlane.f32.xlu0 %v374
        %v500 = vpop.xlane.xlu0 %499
        %501 = vadd.xlane.f32.xlu0 %v375
        %v502 = vpop.xlane.xlu0 %501
        %503 = vadd.xlane.f32.xlu0 %v376
        %v504 = vpop.xlane.xlu0 %503
        %v570 = vunpack.c.l.s4 269488144
        %v571 = vunpack.c.0.s8 %v570
        %v572 = vlaneseq
        %v573 = vshrl.u32 %v572, 7
        %v574 = vsub.s32 %v571, %v573
        %v575 = vrot.slane %v378, %v574
        %v577 = vunpack.c.l.s4 842150450
        %v578 = vunpack.c.0.s8 %v577
        %v579 = vlaneseq
        %v580 = vshrl.u32 %v579, 7
        %v581 = vsub.s32 %v578, %v580
        %v582 = vrot.slane %v378, %v581
        %v584 = vunpack.c.l.s4 1414812756
        %v585 = vunpack.c.0.s8 %v584
        %v586 = vlaneseq
        %v587 = vshrl.u32 %v586, 7
        %v588 = vsub.s32 %v585, %v587
        %v589 = vrot.slane %v378, %v588
        %v591 = vunpack.c.l.s4 1987475062
        %v592 = vunpack.c.0.s8 %v591
        %v593 = vlaneseq
        %v594 = vshrl.u32 %v593, 7
        %v595 = vsub.s32 %v592, %v594
        %v596 = vrot.slane %v378, %v595
        %v598 = vunpack.c.l.s4 269488144
        %v599 = vunpack.c.0.s8 %v598
        %v600 = vlaneseq
        %v601 = vshrl.u32 %v600, 7
        %v602 = vsub.s32 %v599, %v601
        %v603 = vrot.slane %v380, %v602
        %v605 = vunpack.c.l.s4 842150450
        %v606 = vunpack.c.0.s8 %v605
        %v607 = vlaneseq
        %v608 = vshrl.u32 %v607, 7
        %v609 = vsub.s32 %v606, %v608
        %v610 = vrot.slane %v380, %v609
        %v612 = vunpack.c.l.s4 1414812756
        %v613 = vunpack.c.0.s8 %v612
        %v614 = vlaneseq
        %v615 = vshrl.u32 %v614, 7
        %v616 = vsub.s32 %v613, %v615
        %v617 = vrot.slane %v380, %v616
        %v619 = vunpack.c.l.s4 1987475062
        %v620 = vunpack.c.0.s8 %v619
        %v621 = vlaneseq
        %v622 = vshrl.u32 %v621, 7
        %v623 = vsub.s32 %v620, %v622
        %v624 = vrot.slane %v380, %v623
        %v626 = vunpack.c.l.s4 269488144
        %v627 = vunpack.c.0.s8 %v626
        %v628 = vlaneseq
        %v629 = vshrl.u32 %v628, 7
        %v630 = vsub.s32 %v627, %v629
        %v631 = vrot.slane %v382, %v630
        %v633 = vunpack.c.l.s4 842150450
        %v634 = vunpack.c.0.s8 %v633
        %v635 = vlaneseq
        %v636 = vshrl.u32 %v635, 7
        %v637 = vsub.s32 %v634, %v636
        %v638 = vrot.slane %v382, %v637
        %v640 = vunpack.c.l.s4 1414812756
        %v641 = vunpack.c.0.s8 %v640
        %v642 = vlaneseq
        %v643 = vshrl.u32 %v642, 7
        %v644 = vsub.s32 %v641, %v643
        %v645 = vrot.slane %v382, %v644
        %v647 = vunpack.c.l.s4 1987475062
        %v648 = vunpack.c.0.s8 %v647
        %v649 = vlaneseq
        %v650 = vshrl.u32 %v649, 7
        %v651 = vsub.s32 %v648, %v650
        %v652 = vrot.slane %v382, %v651
        %v654 = vunpack.c.l.s4 269488144
        %v655 = vunpack.c.0.s8 %v654
        %v656 = vlaneseq
        %v657 = vshrl.u32 %v656, 7
        %v658 = vsub.s32 %v655, %v657
        %v659 = vrot.slane %v384, %v658
        %v661 = vunpack.c.l.s4 842150450
        %v662 = vunpack.c.0.s8 %v661
        %v663 = vlaneseq
        %v664 = vshrl.u32 %v663, 7
        %v665 = vsub.s32 %v662, %v664
        %v666 = vrot.slane %v384, %v665
        %v668 = vunpack.c.l.s4 1414812756
        %v669 = vunpack.c.0.s8 %v668
        %v670 = vlaneseq
        %v671 = vshrl.u32 %v670, 7
        %v672 = vsub.s32 %v669, %v671
        %v673 = vrot.slane %v384, %v672
        %v675 = vunpack.c.l.s4 1987475062
        %v676 = vunpack.c.0.s8 %v675
        %v677 = vlaneseq
        %v678 = vshrl.u32 %v677, 7
        %v679 = vsub.s32 %v676, %v678
        %v680 = vrot.slane %v384, %v679
        %v682 = vunpack.c.l.s4 269488144
        %v683 = vunpack.c.0.s8 %v682
        %v684 = vlaneseq
        %v685 = vshrl.u32 %v684, 7
        %v686 = vsub.s32 %v683, %v685
        %v687 = vrot.slane %v386, %v686
        %v689 = vunpack.c.l.s4 842150450
        %v690 = vunpack.c.0.s8 %v689
        %v691 = vlaneseq
        %v692 = vshrl.u32 %v691, 7
        %v693 = vsub.s32 %v690, %v692
        %v694 = vrot.slane %v386, %v693
        %v696 = vunpack.c.l.s4 1414812756
        %v697 = vunpack.c.0.s8 %v696
        %v698 = vlaneseq
        %v699 = vshrl.u32 %v698, 7
        %v700 = vsub.s32 %v697, %v699
        %v701 = vrot.slane %v386, %v700
        %v703 = vunpack.c.l.s4 1987475062
        %v704 = vunpack.c.0.s8 %v703
        %v705 = vlaneseq
        %v706 = vshrl.u32 %v705, 7
        %v707 = vsub.s32 %v704, %v706
        %v708 = vrot.slane %v386, %v707
        %v710 = vunpack.c.l.s4 269488144
        %v711 = vunpack.c.0.s8 %v710
        %v712 = vlaneseq
        %v713 = vshrl.u32 %v712, 7
        %v714 = vsub.s32 %v711, %v713
        %v715 = vrot.slane %v388, %v714
        %v717 = vunpack.c.l.s4 842150450
        %v718 = vunpack.c.0.s8 %v717
        %v719 = vlaneseq
        %v720 = vshrl.u32 %v719, 7
        %v721 = vsub.s32 %v718, %v720
        %v722 = vrot.slane %v388, %v721
        %v724 = vunpack.c.l.s4 1414812756
        %v725 = vunpack.c.0.s8 %v724
        %v726 = vlaneseq
        %v727 = vshrl.u32 %v726, 7
        %v728 = vsub.s32 %v725, %v727
        %v729 = vrot.slane %v388, %v728
        %v731 = vunpack.c.l.s4 1987475062
        %v732 = vunpack.c.0.s8 %v731
        %v733 = vlaneseq
        %v734 = vshrl.u32 %v733, 7
        %v735 = vsub.s32 %v732, %v734
        %v736 = vrot.slane %v388, %v735
        %v738 = vunpack.c.l.s4 269488144
        %v739 = vunpack.c.0.s8 %v738
        %v740 = vlaneseq
        %v741 = vshrl.u32 %v740, 7
        %v742 = vsub.s32 %v739, %v741
        %v743 = vrot.slane %v390, %v742
        %v745 = vunpack.c.l.s4 842150450
        %v746 = vunpack.c.0.s8 %v745
        %v747 = vlaneseq
        %v748 = vshrl.u32 %v747, 7
        %v749 = vsub.s32 %v746, %v748
        %v750 = vrot.slane %v390, %v749
        %v752 = vunpack.c.l.s4 1414812756
        %v753 = vunpack.c.0.s8 %v752
        %v754 = vlaneseq
        %v755 = vshrl.u32 %v754, 7
        %v756 = vsub.s32 %v753, %v755
        %v757 = vrot.slane %v390, %v756
        %v759 = vunpack.c.l.s4 1987475062
        %v760 = vunpack.c.0.s8 %v759
        %v761 = vlaneseq
        %v762 = vshrl.u32 %v761, 7
        %v763 = vsub.s32 %v760, %v762
        %v764 = vrot.slane %v390, %v763
        %v766 = vunpack.c.l.s4 269488144
        %v767 = vunpack.c.0.s8 %v766
        %v768 = vlaneseq
        %v769 = vshrl.u32 %v768, 7
        %v770 = vsub.s32 %v767, %v769
        %v771 = vrot.slane %v392, %v770
        %v773 = vunpack.c.l.s4 842150450
        %v774 = vunpack.c.0.s8 %v773
        %v775 = vlaneseq
        %v776 = vshrl.u32 %v775, 7
        %v777 = vsub.s32 %v774, %v776
        %v778 = vrot.slane %v392, %v777
        %v780 = vunpack.c.l.s4 1414812756
        %v781 = vunpack.c.0.s8 %v780
        %v782 = vlaneseq
        %v783 = vshrl.u32 %v782, 7
        %v784 = vsub.s32 %v781, %v783
        %v785 = vrot.slane %v392, %v784
        %v787 = vunpack.c.l.s4 1987475062
        %v788 = vunpack.c.0.s8 %v787
        %v789 = vlaneseq
        %v790 = vshrl.u32 %v789, 7
        %v791 = vsub.s32 %v788, %v790
        %v792 = vrot.slane %v392, %v791
        %v794 = vunpack.c.l.s4 269488144
        %v795 = vunpack.c.0.s8 %v794
        %v796 = vlaneseq
        %v797 = vshrl.u32 %v796, 7
        %v798 = vsub.s32 %v795, %v797
        %v799 = vrot.slane %v394, %v798
        %v801 = vunpack.c.l.s4 842150450
        %v802 = vunpack.c.0.s8 %v801
        %v803 = vlaneseq
        %v804 = vshrl.u32 %v803, 7
        %v805 = vsub.s32 %v802, %v804
        %v806 = vrot.slane %v394, %v805
        %v808 = vunpack.c.l.s4 1414812756
        %v809 = vunpack.c.0.s8 %v808
        %v810 = vlaneseq
        %v811 = vshrl.u32 %v810, 7
        %v812 = vsub.s32 %v809, %v811
        %v813 = vrot.slane %v394, %v812
        %v815 = vunpack.c.l.s4 1987475062
        %v816 = vunpack.c.0.s8 %v815
        %v817 = vlaneseq
        %v818 = vshrl.u32 %v817, 7
        %v819 = vsub.s32 %v816, %v818
        %v820 = vrot.slane %v394, %v819
        %v822 = vunpack.c.l.s4 269488144
        %v823 = vunpack.c.0.s8 %v822
        %v824 = vlaneseq
        %v825 = vshrl.u32 %v824, 7
        %v826 = vsub.s32 %v823, %v825
        %v827 = vrot.slane %v396, %v826
        %v829 = vunpack.c.l.s4 842150450
        %v830 = vunpack.c.0.s8 %v829
        %v831 = vlaneseq
        %v832 = vshrl.u32 %v831, 7
        %v833 = vsub.s32 %v830, %v832
        %v834 = vrot.slane %v396, %v833
        %v836 = vunpack.c.l.s4 1414812756
        %v837 = vunpack.c.0.s8 %v836
        %v838 = vlaneseq
        %v839 = vshrl.u32 %v838, 7
        %v840 = vsub.s32 %v837, %v839
        %v841 = vrot.slane %v396, %v840
        %v843 = vunpack.c.l.s4 1987475062
        %v844 = vunpack.c.0.s8 %v843
        %v845 = vlaneseq
        %v846 = vshrl.u32 %v845, 7
        %v847 = vsub.s32 %v844, %v846
        %v848 = vrot.slane %v396, %v847
        %v850 = vunpack.c.l.s4 269488144
        %v851 = vunpack.c.0.s8 %v850
        %v852 = vlaneseq
        %v853 = vshrl.u32 %v852, 7
        %v854 = vsub.s32 %v851, %v853
        %v855 = vrot.slane %v398, %v854
        %v857 = vunpack.c.l.s4 842150450
        %v858 = vunpack.c.0.s8 %v857
        %v859 = vlaneseq
        %v860 = vshrl.u32 %v859, 7
        %v861 = vsub.s32 %v858, %v860
        %v862 = vrot.slane %v398, %v861
        %v864 = vunpack.c.l.s4 1414812756
        %v865 = vunpack.c.0.s8 %v864
        %v866 = vlaneseq
        %v867 = vshrl.u32 %v866, 7
        %v868 = vsub.s32 %v865, %v867
        %v869 = vrot.slane %v398, %v868
        %v871 = vunpack.c.l.s4 1987475062
        %v872 = vunpack.c.0.s8 %v871
        %v873 = vlaneseq
        %v874 = vshrl.u32 %v873, 7
        %v875 = vsub.s32 %v872, %v874
        %v876 = vrot.slane %v398, %v875
        %v878 = vunpack.c.l.s4 269488144
        %v879 = vunpack.c.0.s8 %v878
        %v880 = vlaneseq
        %v881 = vshrl.u32 %v880, 7
        %v882 = vsub.s32 %v879, %v881
        %v883 = vrot.slane %v400, %v882
        %v885 = vunpack.c.l.s4 842150450
        %v886 = vunpack.c.0.s8 %v885
        %v887 = vlaneseq
        %v888 = vshrl.u32 %v887, 7
        %v889 = vsub.s32 %v886, %v888
        %v890 = vrot.slane %v400, %v889
        %v892 = vunpack.c.l.s4 1414812756
        %v893 = vunpack.c.0.s8 %v892
        %v894 = vlaneseq
        %v895 = vshrl.u32 %v894, 7
        %v896 = vsub.s32 %v893, %v895
        %v897 = vrot.slane %v400, %v896
        %v899 = vunpack.c.l.s4 1987475062
        %v900 = vunpack.c.0.s8 %v899
        %v901 = vlaneseq
        %v902 = vshrl.u32 %v901, 7
        %v903 = vsub.s32 %v900, %v902
        %v904 = vrot.slane %v400, %v903
        %v906 = vunpack.c.l.s4 269488144
        %v907 = vunpack.c.0.s8 %v906
        %v908 = vlaneseq
        %v909 = vshrl.u32 %v908, 7
        %v910 = vsub.s32 %v907, %v909
        %v911 = vrot.slane %v402, %v910
        %v913 = vunpack.c.l.s4 842150450
        %v914 = vunpack.c.0.s8 %v913
        %v915 = vlaneseq
        %v916 = vshrl.u32 %v915, 7
        %v917 = vsub.s32 %v914, %v916
        %v918 = vrot.slane %v402, %v917
        %v920 = vunpack.c.l.s4 1414812756
        %v921 = vunpack.c.0.s8 %v920
        %v922 = vlaneseq
        %v923 = vshrl.u32 %v922, 7
        %v924 = vsub.s32 %v921, %v923
        %v925 = vrot.slane %v402, %v924
        %v927 = vunpack.c.l.s4 1987475062
        %v928 = vunpack.c.0.s8 %v927
        %v929 = vlaneseq
        %v930 = vshrl.u32 %v929, 7
        %v931 = vsub.s32 %v928, %v930
        %v932 = vrot.slane %v402, %v931
        %v934 = vunpack.c.l.s4 269488144
        %v935 = vunpack.c.0.s8 %v934
        %v936 = vlaneseq
        %v937 = vshrl.u32 %v936, 7
        %v938 = vsub.s32 %v935, %v937
        %v939 = vrot.slane %v404, %v938
        %v941 = vunpack.c.l.s4 842150450
        %v942 = vunpack.c.0.s8 %v941
        %v943 = vlaneseq
        %v944 = vshrl.u32 %v943, 7
        %v945 = vsub.s32 %v942, %v944
        %v946 = vrot.slane %v404, %v945
        %v948 = vunpack.c.l.s4 1414812756
        %v949 = vunpack.c.0.s8 %v948
        %v950 = vlaneseq
        %v951 = vshrl.u32 %v950, 7
        %v952 = vsub.s32 %v949, %v951
        %v953 = vrot.slane %v404, %v952
        %v955 = vunpack.c.l.s4 1987475062
        %v956 = vunpack.c.0.s8 %v955
        %v957 = vlaneseq
        %v958 = vshrl.u32 %v957, 7
        %v959 = vsub.s32 %v956, %v958
        %v960 = vrot.slane %v404, %v959
        %v962 = vunpack.c.l.s4 269488144
        %v963 = vunpack.c.0.s8 %v962
        %v964 = vlaneseq
        %v965 = vshrl.u32 %v964, 7
        %v966 = vsub.s32 %v963, %v965
        %v967 = vrot.slane %v406, %v966
        %v969 = vunpack.c.l.s4 842150450
        %v970 = vunpack.c.0.s8 %v969
        %v971 = vlaneseq
        %v972 = vshrl.u32 %v971, 7
        %v973 = vsub.s32 %v970, %v972
        %v974 = vrot.slane %v406, %v973
        %v976 = vunpack.c.l.s4 1414812756
        %v977 = vunpack.c.0.s8 %v976
        %v978 = vlaneseq
        %v979 = vshrl.u32 %v978, 7
        %v980 = vsub.s32 %v977, %v979
        %v981 = vrot.slane %v406, %v980
        %v983 = vunpack.c.l.s4 1987475062
        %v984 = vunpack.c.0.s8 %v983
        %v985 = vlaneseq
        %v986 = vshrl.u32 %v985, 7
        %v987 = vsub.s32 %v984, %v986
        %v988 = vrot.slane %v406, %v987
        %v990 = vunpack.c.l.s4 269488144
        %v991 = vunpack.c.0.s8 %v990
        %v992 = vlaneseq
        %v993 = vshrl.u32 %v992, 7
        %v994 = vsub.s32 %v991, %v993
        %v995 = vrot.slane %v408, %v994
        %v997 = vunpack.c.l.s4 842150450
        %v998 = vunpack.c.0.s8 %v997
        %v999 = vlaneseq
        %v1000 = vshrl.u32 %v999, 7
        %v1001 = vsub.s32 %v998, %v1000
        %v1002 = vrot.slane %v408, %v1001
        %v1004 = vunpack.c.l.s4 1414812756
        %v1005 = vunpack.c.0.s8 %v1004
        %v1006 = vlaneseq
        %v1007 = vshrl.u32 %v1006, 7
        %v1008 = vsub.s32 %v1005, %v1007
        %v1009 = vrot.slane %v408, %v1008
        %v1011 = vunpack.c.l.s4 1987475062
        %v1012 = vunpack.c.0.s8 %v1011
        %v1013 = vlaneseq
        %v1014 = vshrl.u32 %v1013, 7
        %v1015 = vsub.s32 %v1012, %v1014
        %v1016 = vrot.slane %v408, %v1015
        %v1018 = vunpack.c.l.s4 269488144
        %v1019 = vunpack.c.0.s8 %v1018
        %v1020 = vlaneseq
        %v1021 = vshrl.u32 %v1020, 7
        %v1022 = vsub.s32 %v1019, %v1021
        %v1023 = vrot.slane %v410, %v1022
        %v1025 = vunpack.c.l.s4 842150450
        %v1026 = vunpack.c.0.s8 %v1025
        %v1027 = vlaneseq
        %v1028 = vshrl.u32 %v1027, 7
        %v1029 = vsub.s32 %v1026, %v1028
        %v1030 = vrot.slane %v410, %v1029
        %v1032 = vunpack.c.l.s4 1414812756
        %v1033 = vunpack.c.0.s8 %v1032
        %v1034 = vlaneseq
        %v1035 = vshrl.u32 %v1034, 7
        %v1036 = vsub.s32 %v1033, %v1035
        %v1037 = vrot.slane %v410, %v1036
        %v1039 = vunpack.c.l.s4 1987475062
        %v1040 = vunpack.c.0.s8 %v1039
        %v1041 = vlaneseq
        %v1042 = vshrl.u32 %v1041, 7
        %v1043 = vsub.s32 %v1040, %v1042
        %v1044 = vrot.slane %v410, %v1043
        %v1046 = vunpack.c.l.s4 269488144
        %v1047 = vunpack.c.0.s8 %v1046
        %v1048 = vlaneseq
        %v1049 = vshrl.u32 %v1048, 7
        %v1050 = vsub.s32 %v1047, %v1049
        %v1051 = vrot.slane %v412, %v1050
        %v1053 = vunpack.c.l.s4 842150450
        %v1054 = vunpack.c.0.s8 %v1053
        %v1055 = vlaneseq
        %v1056 = vshrl.u32 %v1055, 7
        %v1057 = vsub.s32 %v1054, %v1056
        %v1058 = vrot.slane %v412, %v1057
        %v1060 = vunpack.c.l.s4 1414812756
        %v1061 = vunpack.c.0.s8 %v1060
        %v1062 = vlaneseq
        %v1063 = vshrl.u32 %v1062, 7
        %v1064 = vsub.s32 %v1061, %v1063
        %v1065 = vrot.slane %v412, %v1064
        %v1067 = vunpack.c.l.s4 1987475062
        %v1068 = vunpack.c.0.s8 %v1067
        %v1069 = vlaneseq
        %v1070 = vshrl.u32 %v1069, 7
        %v1071 = vsub.s32 %v1068, %v1070
        %v1072 = vrot.slane %v412, %v1071
        %v1074 = vunpack.c.l.s4 269488144
        %v1075 = vunpack.c.0.s8 %v1074
        %v1076 = vlaneseq
        %v1077 = vshrl.u32 %v1076, 7
        %v1078 = vsub.s32 %v1075, %v1077
        %v1079 = vrot.slane %v414, %v1078
        %v1081 = vunpack.c.l.s4 842150450
        %v1082 = vunpack.c.0.s8 %v1081
        %v1083 = vlaneseq
        %v1084 = vshrl.u32 %v1083, 7
        %v1085 = vsub.s32 %v1082, %v1084
        %v1086 = vrot.slane %v414, %v1085
        %v1088 = vunpack.c.l.s4 1414812756
        %v1089 = vunpack.c.0.s8 %v1088
        %v1090 = vlaneseq
        %v1091 = vshrl.u32 %v1090, 7
        %v1092 = vsub.s32 %v1089, %v1091
        %v1093 = vrot.slane %v414, %v1092
        %v1095 = vunpack.c.l.s4 1987475062
        %v1096 = vunpack.c.0.s8 %v1095
        %v1097 = vlaneseq
        %v1098 = vshrl.u32 %v1097, 7
        %v1099 = vsub.s32 %v1096, %v1098
        %v1100 = vrot.slane %v414, %v1099
        %v1102 = vunpack.c.l.s4 269488144
        %v1103 = vunpack.c.0.s8 %v1102
        %v1104 = vlaneseq
        %v1105 = vshrl.u32 %v1104, 7
        %v1106 = vsub.s32 %v1103, %v1105
        %v1107 = vrot.slane %v416, %v1106
        %v1109 = vunpack.c.l.s4 842150450
        %v1110 = vunpack.c.0.s8 %v1109
        %v1111 = vlaneseq
        %v1112 = vshrl.u32 %v1111, 7
        %v1113 = vsub.s32 %v1110, %v1112
        %v1114 = vrot.slane %v416, %v1113
        %v1116 = vunpack.c.l.s4 1414812756
        %v1117 = vunpack.c.0.s8 %v1116
        %v1118 = vlaneseq
        %v1119 = vshrl.u32 %v1118, 7
        %v1120 = vsub.s32 %v1117, %v1119
        %v1121 = vrot.slane %v416, %v1120
        %v1123 = vunpack.c.l.s4 1987475062
        %v1124 = vunpack.c.0.s8 %v1123
        %v1125 = vlaneseq
        %v1126 = vshrl.u32 %v1125, 7
        %v1127 = vsub.s32 %v1124, %v1126
        %v1128 = vrot.slane %v416, %v1127
        %v1130 = vunpack.c.l.s4 269488144
        %v1131 = vunpack.c.0.s8 %v1130
        %v1132 = vlaneseq
        %v1133 = vshrl.u32 %v1132, 7
        %v1134 = vsub.s32 %v1131, %v1133
        %v1135 = vrot.slane %v418, %v1134
        %v1137 = vunpack.c.l.s4 842150450
        %v1138 = vunpack.c.0.s8 %v1137
        %v1139 = vlaneseq
        %v1140 = vshrl.u32 %v1139, 7
        %v1141 = vsub.s32 %v1138, %v1140
        %v1142 = vrot.slane %v418, %v1141
        %v1144 = vunpack.c.l.s4 1414812756
        %v1145 = vunpack.c.0.s8 %v1144
        %v1146 = vlaneseq
        %v1147 = vshrl.u32 %v1146, 7
        %v1148 = vsub.s32 %v1145, %v1147
        %v1149 = vrot.slane %v418, %v1148
        %v1151 = vunpack.c.l.s4 1987475062
        %v1152 = vunpack.c.0.s8 %v1151
        %v1153 = vlaneseq
        %v1154 = vshrl.u32 %v1153, 7
        %v1155 = vsub.s32 %v1152, %v1154
        %v1156 = vrot.slane %v418, %v1155
        %v1158 = vunpack.c.l.s4 269488144
        %v1159 = vunpack.c.0.s8 %v1158
        %v1160 = vlaneseq
        %v1161 = vshrl.u32 %v1160, 7
        %v1162 = vsub.s32 %v1159, %v1161
        %v1163 = vrot.slane %v420, %v1162
        %v1165 = vunpack.c.l.s4 842150450
        %v1166 = vunpack.c.0.s8 %v1165
        %v1167 = vlaneseq
        %v1168 = vshrl.u32 %v1167, 7
        %v1169 = vsub.s32 %v1166, %v1168
        %v1170 = vrot.slane %v420, %v1169
        %v1172 = vunpack.c.l.s4 1414812756
        %v1173 = vunpack.c.0.s8 %v1172
        %v1174 = vlaneseq
        %v1175 = vshrl.u32 %v1174, 7
        %v1176 = vsub.s32 %v1173, %v1175
        %v1177 = vrot.slane %v420, %v1176
        %v1179 = vunpack.c.l.s4 1987475062
        %v1180 = vunpack.c.0.s8 %v1179
        %v1181 = vlaneseq
        %v1182 = vshrl.u32 %v1181, 7
        %v1183 = vsub.s32 %v1180, %v1182
        %v1184 = vrot.slane %v420, %v1183
        %v1186 = vunpack.c.l.s4 269488144
        %v1187 = vunpack.c.0.s8 %v1186
        %v1188 = vlaneseq
        %v1189 = vshrl.u32 %v1188, 7
        %v1190 = vsub.s32 %v1187, %v1189
        %v1191 = vrot.slane %v422, %v1190
        %v1193 = vunpack.c.l.s4 842150450
        %v1194 = vunpack.c.0.s8 %v1193
        %v1195 = vlaneseq
        %v1196 = vshrl.u32 %v1195, 7
        %v1197 = vsub.s32 %v1194, %v1196
        %v1198 = vrot.slane %v422, %v1197
        %v1200 = vunpack.c.l.s4 1414812756
        %v1201 = vunpack.c.0.s8 %v1200
        %v1202 = vlaneseq
        %v1203 = vshrl.u32 %v1202, 7
        %v1204 = vsub.s32 %v1201, %v1203
        %v1205 = vrot.slane %v422, %v1204
        %v1207 = vunpack.c.l.s4 1987475062
        %v1208 = vunpack.c.0.s8 %v1207
        %v1209 = vlaneseq
        %v1210 = vshrl.u32 %v1209, 7
        %v1211 = vsub.s32 %v1208, %v1210
        %v1212 = vrot.slane %v422, %v1211
        %v1214 = vunpack.c.l.s4 269488144
        %v1215 = vunpack.c.0.s8 %v1214
        %v1216 = vlaneseq
        %v1217 = vshrl.u32 %v1216, 7
        %v1218 = vsub.s32 %v1215, %v1217
        %v1219 = vrot.slane %v424, %v1218
        %v1221 = vunpack.c.l.s4 842150450
        %v1222 = vunpack.c.0.s8 %v1221
        %v1223 = vlaneseq
        %v1224 = vshrl.u32 %v1223, 7
        %v1225 = vsub.s32 %v1222, %v1224
        %v1226 = vrot.slane %v424, %v1225
        %v1228 = vunpack.c.l.s4 1414812756
        %v1229 = vunpack.c.0.s8 %v1228
        %v1230 = vlaneseq
        %v1231 = vshrl.u32 %v1230, 7
        %v1232 = vsub.s32 %v1229, %v1231
        %v1233 = vrot.slane %v424, %v1232
        %v1235 = vunpack.c.l.s4 1987475062
        %v1236 = vunpack.c.0.s8 %v1235
        %v1237 = vlaneseq
        %v1238 = vshrl.u32 %v1237, 7
        %v1239 = vsub.s32 %v1236, %v1238
        %v1240 = vrot.slane %v424, %v1239
        %v1242 = vunpack.c.l.s4 269488144
        %v1243 = vunpack.c.0.s8 %v1242
        %v1244 = vlaneseq
        %v1245 = vshrl.u32 %v1244, 7
        %v1246 = vsub.s32 %v1243, %v1245
        %v1247 = vrot.slane %v426, %v1246
        %v1249 = vunpack.c.l.s4 842150450
        %v1250 = vunpack.c.0.s8 %v1249
        %v1251 = vlaneseq
        %v1252 = vshrl.u32 %v1251, 7
        %v1253 = vsub.s32 %v1250, %v1252
        %v1254 = vrot.slane %v426, %v1253
        %v1256 = vunpack.c.l.s4 1414812756
        %v1257 = vunpack.c.0.s8 %v1256
        %v1258 = vlaneseq
        %v1259 = vshrl.u32 %v1258, 7
        %v1260 = vsub.s32 %v1257, %v1259
        %v1261 = vrot.slane %v426, %v1260
        %v1263 = vunpack.c.l.s4 1987475062
        %v1264 = vunpack.c.0.s8 %v1263
        %v1265 = vlaneseq
        %v1266 = vshrl.u32 %v1265, 7
        %v1267 = vsub.s32 %v1264, %v1266
        %v1268 = vrot.slane %v426, %v1267
        %v1270 = vunpack.c.l.s4 269488144
        %v1271 = vunpack.c.0.s8 %v1270
        %v1272 = vlaneseq
        %v1273 = vshrl.u32 %v1272, 7
        %v1274 = vsub.s32 %v1271, %v1273
        %v1275 = vrot.slane %v428, %v1274
        %v1277 = vunpack.c.l.s4 842150450
        %v1278 = vunpack.c.0.s8 %v1277
        %v1279 = vlaneseq
        %v1280 = vshrl.u32 %v1279, 7
        %v1281 = vsub.s32 %v1278, %v1280
        %v1282 = vrot.slane %v428, %v1281
        %v1284 = vunpack.c.l.s4 1414812756
        %v1285 = vunpack.c.0.s8 %v1284
        %v1286 = vlaneseq
        %v1287 = vshrl.u32 %v1286, 7
        %v1288 = vsub.s32 %v1285, %v1287
        %v1289 = vrot.slane %v428, %v1288
        %v1291 = vunpack.c.l.s4 1987475062
        %v1292 = vunpack.c.0.s8 %v1291
        %v1293 = vlaneseq
        %v1294 = vshrl.u32 %v1293, 7
        %v1295 = vsub.s32 %v1292, %v1294
        %v1296 = vrot.slane %v428, %v1295
        %v1298 = vunpack.c.l.s4 269488144
        %v1299 = vunpack.c.0.s8 %v1298
        %v1300 = vlaneseq
        %v1301 = vshrl.u32 %v1300, 7
        %v1302 = vsub.s32 %v1299, %v1301
        %v1303 = vrot.slane %v430, %v1302
        %v1305 = vunpack.c.l.s4 842150450
        %v1306 = vunpack.c.0.s8 %v1305
        %v1307 = vlaneseq
        %v1308 = vshrl.u32 %v1307, 7
        %v1309 = vsub.s32 %v1306, %v1308
        %v1310 = vrot.slane %v430, %v1309
        %v1312 = vunpack.c.l.s4 1414812756
        %v1313 = vunpack.c.0.s8 %v1312
        %v1314 = vlaneseq
        %v1315 = vshrl.u32 %v1314, 7
        %v1316 = vsub.s32 %v1313, %v1315
        %v1317 = vrot.slane %v430, %v1316
        %v1319 = vunpack.c.l.s4 1987475062
        %v1320 = vunpack.c.0.s8 %v1319
        %v1321 = vlaneseq
        %v1322 = vshrl.u32 %v1321, 7
        %v1323 = vsub.s32 %v1320, %v1322
        %v1324 = vrot.slane %v430, %v1323
        %v1326 = vunpack.c.l.s4 269488144
        %v1327 = vunpack.c.0.s8 %v1326
        %v1328 = vlaneseq
        %v1329 = vshrl.u32 %v1328, 7
        %v1330 = vsub.s32 %v1327, %v1329
        %v1331 = vrot.slane %v432, %v1330
        %v1333 = vunpack.c.l.s4 842150450
        %v1334 = vunpack.c.0.s8 %v1333
        %v1335 = vlaneseq
        %v1336 = vshrl.u32 %v1335, 7
        %v1337 = vsub.s32 %v1334, %v1336
        %v1338 = vrot.slane %v432, %v1337
        %v1340 = vunpack.c.l.s4 1414812756
        %v1341 = vunpack.c.0.s8 %v1340
        %v1342 = vlaneseq
        %v1343 = vshrl.u32 %v1342, 7
        %v1344 = vsub.s32 %v1341, %v1343
        %v1345 = vrot.slane %v432, %v1344
        %v1347 = vunpack.c.l.s4 1987475062
        %v1348 = vunpack.c.0.s8 %v1347
        %v1349 = vlaneseq
        %v1350 = vshrl.u32 %v1349, 7
        %v1351 = vsub.s32 %v1348, %v1350
        %v1352 = vrot.slane %v432, %v1351
        %v1354 = vunpack.c.l.s4 269488144
        %v1355 = vunpack.c.0.s8 %v1354
        %v1356 = vlaneseq
        %v1357 = vshrl.u32 %v1356, 7
        %v1358 = vsub.s32 %v1355, %v1357
        %v1359 = vrot.slane %v434, %v1358
        %v1361 = vunpack.c.l.s4 842150450
        %v1362 = vunpack.c.0.s8 %v1361
        %v1363 = vlaneseq
        %v1364 = vshrl.u32 %v1363, 7
        %v1365 = vsub.s32 %v1362, %v1364
        %v1366 = vrot.slane %v434, %v1365
        %v1368 = vunpack.c.l.s4 1414812756
        %v1369 = vunpack.c.0.s8 %v1368
        %v1370 = vlaneseq
        %v1371 = vshrl.u32 %v1370, 7
        %v1372 = vsub.s32 %v1369, %v1371
        %v1373 = vrot.slane %v434, %v1372
        %v1375 = vunpack.c.l.s4 1987475062
        %v1376 = vunpack.c.0.s8 %v1375
        %v1377 = vlaneseq
        %v1378 = vshrl.u32 %v1377, 7
        %v1379 = vsub.s32 %v1376, %v1378
        %v1380 = vrot.slane %v434, %v1379
        %v1382 = vunpack.c.l.s4 269488144
        %v1383 = vunpack.c.0.s8 %v1382
        %v1384 = vlaneseq
        %v1385 = vshrl.u32 %v1384, 7
        %v1386 = vsub.s32 %v1383, %v1385
        %v1387 = vrot.slane %v436, %v1386
        %v1389 = vunpack.c.l.s4 842150450
        %v1390 = vunpack.c.0.s8 %v1389
        %v1391 = vlaneseq
        %v1392 = vshrl.u32 %v1391, 7
        %v1393 = vsub.s32 %v1390, %v1392
        %v1394 = vrot.slane %v436, %v1393
        %v1396 = vunpack.c.l.s4 1414812756
        %v1397 = vunpack.c.0.s8 %v1396
        %v1398 = vlaneseq
        %v1399 = vshrl.u32 %v1398, 7
        %v1400 = vsub.s32 %v1397, %v1399
        %v1401 = vrot.slane %v436, %v1400
        %v1403 = vunpack.c.l.s4 1987475062
        %v1404 = vunpack.c.0.s8 %v1403
        %v1405 = vlaneseq
        %v1406 = vshrl.u32 %v1405, 7
        %v1407 = vsub.s32 %v1404, %v1406
        %v1408 = vrot.slane %v436, %v1407
        %v1410 = vunpack.c.l.s4 269488144
        %v1411 = vunpack.c.0.s8 %v1410
        %v1412 = vlaneseq
        %v1413 = vshrl.u32 %v1412, 7
        %v1414 = vsub.s32 %v1411, %v1413
        %v1415 = vrot.slane %v438, %v1414
        %v1417 = vunpack.c.l.s4 842150450
        %v1418 = vunpack.c.0.s8 %v1417
        %v1419 = vlaneseq
        %v1420 = vshrl.u32 %v1419, 7
        %v1421 = vsub.s32 %v1418, %v1420
        %v1422 = vrot.slane %v438, %v1421
        %v1424 = vunpack.c.l.s4 1414812756
        %v1425 = vunpack.c.0.s8 %v1424
        %v1426 = vlaneseq
        %v1427 = vshrl.u32 %v1426, 7
        %v1428 = vsub.s32 %v1425, %v1427
        %v1429 = vrot.slane %v438, %v1428
        %v1431 = vunpack.c.l.s4 1987475062
        %v1432 = vunpack.c.0.s8 %v1431
        %v1433 = vlaneseq
        %v1434 = vshrl.u32 %v1433, 7
        %v1435 = vsub.s32 %v1432, %v1434
        %v1436 = vrot.slane %v438, %v1435
        %v1438 = vunpack.c.l.s4 269488144
        %v1439 = vunpack.c.0.s8 %v1438
        %v1440 = vlaneseq
        %v1441 = vshrl.u32 %v1440, 7
        %v1442 = vsub.s32 %v1439, %v1441
        %v1443 = vrot.slane %v440, %v1442
        %v1445 = vunpack.c.l.s4 842150450
        %v1446 = vunpack.c.0.s8 %v1445
        %v1447 = vlaneseq
        %v1448 = vshrl.u32 %v1447, 7
        %v1449 = vsub.s32 %v1446, %v1448
        %v1450 = vrot.slane %v440, %v1449
        %v1452 = vunpack.c.l.s4 1414812756
        %v1453 = vunpack.c.0.s8 %v1452
        %v1454 = vlaneseq
        %v1455 = vshrl.u32 %v1454, 7
        %v1456 = vsub.s32 %v1453, %v1455
        %v1457 = vrot.slane %v440, %v1456
        %v1459 = vunpack.c.l.s4 1987475062
        %v1460 = vunpack.c.0.s8 %v1459
        %v1461 = vlaneseq
        %v1462 = vshrl.u32 %v1461, 7
        %v1463 = vsub.s32 %v1460, %v1462
        %v1464 = vrot.slane %v440, %v1463
        %v1466 = vunpack.c.l.s4 269488144
        %v1467 = vunpack.c.0.s8 %v1466
        %v1468 = vlaneseq
        %v1469 = vshrl.u32 %v1468, 7
        %v1470 = vsub.s32 %v1467, %v1469
        %v1471 = vrot.slane %v442, %v1470
        %v1473 = vunpack.c.l.s4 842150450
        %v1474 = vunpack.c.0.s8 %v1473
        %v1475 = vlaneseq
        %v1476 = vshrl.u32 %v1475, 7
        %v1477 = vsub.s32 %v1474, %v1476
        %v1478 = vrot.slane %v442, %v1477
        %v1480 = vunpack.c.l.s4 1414812756
        %v1481 = vunpack.c.0.s8 %v1480
        %v1482 = vlaneseq
        %v1483 = vshrl.u32 %v1482, 7
        %v1484 = vsub.s32 %v1481, %v1483
        %v1485 = vrot.slane %v442, %v1484
        %v1487 = vunpack.c.l.s4 1987475062
        %v1488 = vunpack.c.0.s8 %v1487
        %v1489 = vlaneseq
        %v1490 = vshrl.u32 %v1489, 7
        %v1491 = vsub.s32 %v1488, %v1490
        %v1492 = vrot.slane %v442, %v1491
        %v1494 = vunpack.c.l.s4 269488144
        %v1495 = vunpack.c.0.s8 %v1494
        %v1496 = vlaneseq
        %v1497 = vshrl.u32 %v1496, 7
        %v1498 = vsub.s32 %v1495, %v1497
        %v1499 = vrot.slane %v444, %v1498
        %v1501 = vunpack.c.l.s4 842150450
        %v1502 = vunpack.c.0.s8 %v1501
        %v1503 = vlaneseq
        %v1504 = vshrl.u32 %v1503, 7
        %v1505 = vsub.s32 %v1502, %v1504
        %v1506 = vrot.slane %v444, %v1505
        %v1508 = vunpack.c.l.s4 1414812756
        %v1509 = vunpack.c.0.s8 %v1508
        %v1510 = vlaneseq
        %v1511 = vshrl.u32 %v1510, 7
        %v1512 = vsub.s32 %v1509, %v1511
        %v1513 = vrot.slane %v444, %v1512
        %v1515 = vunpack.c.l.s4 1987475062
        %v1516 = vunpack.c.0.s8 %v1515
        %v1517 = vlaneseq
        %v1518 = vshrl.u32 %v1517, 7
        %v1519 = vsub.s32 %v1516, %v1518
        %v1520 = vrot.slane %v444, %v1519
        %v1522 = vunpack.c.l.s4 269488144
        %v1523 = vunpack.c.0.s8 %v1522
        %v1524 = vlaneseq
        %v1525 = vshrl.u32 %v1524, 7
        %v1526 = vsub.s32 %v1523, %v1525
        %v1527 = vrot.slane %v446, %v1526
        %v1529 = vunpack.c.l.s4 842150450
        %v1530 = vunpack.c.0.s8 %v1529
        %v1531 = vlaneseq
        %v1532 = vshrl.u32 %v1531, 7
        %v1533 = vsub.s32 %v1530, %v1532
        %v1534 = vrot.slane %v446, %v1533
        %v1536 = vunpack.c.l.s4 1414812756
        %v1537 = vunpack.c.0.s8 %v1536
        %v1538 = vlaneseq
        %v1539 = vshrl.u32 %v1538, 7
        %v1540 = vsub.s32 %v1537, %v1539
        %v1541 = vrot.slane %v446, %v1540
        %v1543 = vunpack.c.l.s4 1987475062
        %v1544 = vunpack.c.0.s8 %v1543
        %v1545 = vlaneseq
        %v1546 = vshrl.u32 %v1545, 7
        %v1547 = vsub.s32 %v1544, %v1546
        %v1548 = vrot.slane %v446, %v1547
        %v1550 = vunpack.c.l.s4 269488144
        %v1551 = vunpack.c.0.s8 %v1550
        %v1552 = vlaneseq
        %v1553 = vshrl.u32 %v1552, 7
        %v1554 = vsub.s32 %v1551, %v1553
        %v1555 = vrot.slane %v448, %v1554
        %v1557 = vunpack.c.l.s4 842150450
        %v1558 = vunpack.c.0.s8 %v1557
        %v1559 = vlaneseq
        %v1560 = vshrl.u32 %v1559, 7
        %v1561 = vsub.s32 %v1558, %v1560
        %v1562 = vrot.slane %v448, %v1561
        %v1564 = vunpack.c.l.s4 1414812756
        %v1565 = vunpack.c.0.s8 %v1564
        %v1566 = vlaneseq
        %v1567 = vshrl.u32 %v1566, 7
        %v1568 = vsub.s32 %v1565, %v1567
        %v1569 = vrot.slane %v448, %v1568
        %v1571 = vunpack.c.l.s4 1987475062
        %v1572 = vunpack.c.0.s8 %v1571
        %v1573 = vlaneseq
        %v1574 = vshrl.u32 %v1573, 7
        %v1575 = vsub.s32 %v1572, %v1574
        %v1576 = vrot.slane %v448, %v1575
        %v1578 = vunpack.c.l.s4 269488144
        %v1579 = vunpack.c.0.s8 %v1578
        %v1580 = vlaneseq
        %v1581 = vshrl.u32 %v1580, 7
        %v1582 = vsub.s32 %v1579, %v1581
        %v1583 = vrot.slane %v450, %v1582
        %v1585 = vunpack.c.l.s4 842150450
        %v1586 = vunpack.c.0.s8 %v1585
        %v1587 = vlaneseq
        %v1588 = vshrl.u32 %v1587, 7
        %v1589 = vsub.s32 %v1586, %v1588
        %v1590 = vrot.slane %v450, %v1589
        %v1592 = vunpack.c.l.s4 1414812756
        %v1593 = vunpack.c.0.s8 %v1592
        %v1594 = vlaneseq
        %v1595 = vshrl.u32 %v1594, 7
        %v1596 = vsub.s32 %v1593, %v1595
        %v1597 = vrot.slane %v450, %v1596
        %v1599 = vunpack.c.l.s4 1987475062
        %v1600 = vunpack.c.0.s8 %v1599
        %v1601 = vlaneseq
        %v1602 = vshrl.u32 %v1601, 7
        %v1603 = vsub.s32 %v1600, %v1602
        %v1604 = vrot.slane %v450, %v1603
        %v1606 = vunpack.c.l.s4 269488144
        %v1607 = vunpack.c.0.s8 %v1606
        %v1608 = vlaneseq
        %v1609 = vshrl.u32 %v1608, 7
        %v1610 = vsub.s32 %v1607, %v1609
        %v1611 = vrot.slane %v452, %v1610
        %v1613 = vunpack.c.l.s4 842150450
        %v1614 = vunpack.c.0.s8 %v1613
        %v1615 = vlaneseq
        %v1616 = vshrl.u32 %v1615, 7
        %v1617 = vsub.s32 %v1614, %v1616
        %v1618 = vrot.slane %v452, %v1617
        %v1620 = vunpack.c.l.s4 1414812756
        %v1621 = vunpack.c.0.s8 %v1620
        %v1622 = vlaneseq
        %v1623 = vshrl.u32 %v1622, 7
        %v1624 = vsub.s32 %v1621, %v1623
        %v1625 = vrot.slane %v452, %v1624
        %v1627 = vunpack.c.l.s4 1987475062
        %v1628 = vunpack.c.0.s8 %v1627
        %v1629 = vlaneseq
        %v1630 = vshrl.u32 %v1629, 7
        %v1631 = vsub.s32 %v1628, %v1630
        %v1632 = vrot.slane %v452, %v1631
        %v1634 = vunpack.c.l.s4 269488144
        %v1635 = vunpack.c.0.s8 %v1634
        %v1636 = vlaneseq
        %v1637 = vshrl.u32 %v1636, 7
        %v1638 = vsub.s32 %v1635, %v1637
        %v1639 = vrot.slane %v454, %v1638
        %v1641 = vunpack.c.l.s4 842150450
        %v1642 = vunpack.c.0.s8 %v1641
        %v1643 = vlaneseq
        %v1644 = vshrl.u32 %v1643, 7
        %v1645 = vsub.s32 %v1642, %v1644
        %v1646 = vrot.slane %v454, %v1645
        %v1648 = vunpack.c.l.s4 1414812756
        %v1649 = vunpack.c.0.s8 %v1648
        %v1650 = vlaneseq
        %v1651 = vshrl.u32 %v1650, 7
        %v1652 = vsub.s32 %v1649, %v1651
        %v1653 = vrot.slane %v454, %v1652
        %v1655 = vunpack.c.l.s4 1987475062
        %v1656 = vunpack.c.0.s8 %v1655
        %v1657 = vlaneseq
        %v1658 = vshrl.u32 %v1657, 7
        %v1659 = vsub.s32 %v1656, %v1658
        %v1660 = vrot.slane %v454, %v1659
        %v1662 = vunpack.c.l.s4 269488144
        %v1663 = vunpack.c.0.s8 %v1662
        %v1664 = vlaneseq
        %v1665 = vshrl.u32 %v1664, 7
        %v1666 = vsub.s32 %v1663, %v1665
        %v1667 = vrot.slane %v456, %v1666
        %v1669 = vunpack.c.l.s4 842150450
        %v1670 = vunpack.c.0.s8 %v1669
        %v1671 = vlaneseq
        %v1672 = vshrl.u32 %v1671, 7
        %v1673 = vsub.s32 %v1670, %v1672
        %v1674 = vrot.slane %v456, %v1673
        %v1676 = vunpack.c.l.s4 1414812756
        %v1677 = vunpack.c.0.s8 %v1676
        %v1678 = vlaneseq
        %v1679 = vshrl.u32 %v1678, 7
        %v1680 = vsub.s32 %v1677, %v1679
        %v1681 = vrot.slane %v456, %v1680
        %v1683 = vunpack.c.l.s4 1987475062
        %v1684 = vunpack.c.0.s8 %v1683
        %v1685 = vlaneseq
        %v1686 = vshrl.u32 %v1685, 7
        %v1687 = vsub.s32 %v1684, %v1686
        %v1688 = vrot.slane %v456, %v1687
        %v1690 = vunpack.c.l.s4 269488144
        %v1691 = vunpack.c.0.s8 %v1690
        %v1692 = vlaneseq
        %v1693 = vshrl.u32 %v1692, 7
        %v1694 = vsub.s32 %v1691, %v1693
        %v1695 = vrot.slane %v458, %v1694
        %v1697 = vunpack.c.l.s4 842150450
        %v1698 = vunpack.c.0.s8 %v1697
        %v1699 = vlaneseq
        %v1700 = vshrl.u32 %v1699, 7
        %v1701 = vsub.s32 %v1698, %v1700
        %v1702 = vrot.slane %v458, %v1701
        %v1704 = vunpack.c.l.s4 1414812756
        %v1705 = vunpack.c.0.s8 %v1704
        %v1706 = vlaneseq
        %v1707 = vshrl.u32 %v1706, 7
        %v1708 = vsub.s32 %v1705, %v1707
        %v1709 = vrot.slane %v458, %v1708
        %v1711 = vunpack.c.l.s4 1987475062
        %v1712 = vunpack.c.0.s8 %v1711
        %v1713 = vlaneseq
        %v1714 = vshrl.u32 %v1713, 7
        %v1715 = vsub.s32 %v1712, %v1714
        %v1716 = vrot.slane %v458, %v1715
        %v1718 = vunpack.c.l.s4 269488144
        %v1719 = vunpack.c.0.s8 %v1718
        %v1720 = vlaneseq
        %v1721 = vshrl.u32 %v1720, 7
        %v1722 = vsub.s32 %v1719, %v1721
        %v1723 = vrot.slane %v460, %v1722
        %v1725 = vunpack.c.l.s4 842150450
        %v1726 = vunpack.c.0.s8 %v1725
        %v1727 = vlaneseq
        %v1728 = vshrl.u32 %v1727, 7
        %v1729 = vsub.s32 %v1726, %v1728
        %v1730 = vrot.slane %v460, %v1729
        %v1732 = vunpack.c.l.s4 1414812756
        %v1733 = vunpack.c.0.s8 %v1732
        %v1734 = vlaneseq
        %v1735 = vshrl.u32 %v1734, 7
        %v1736 = vsub.s32 %v1733, %v1735
        %v1737 = vrot.slane %v460, %v1736
        %v1739 = vunpack.c.l.s4 1987475062
        %v1740 = vunpack.c.0.s8 %v1739
        %v1741 = vlaneseq
        %v1742 = vshrl.u32 %v1741, 7
        %v1743 = vsub.s32 %v1740, %v1742
        %v1744 = vrot.slane %v460, %v1743
        %v1746 = vunpack.c.l.s4 269488144
        %v1747 = vunpack.c.0.s8 %v1746
        %v1748 = vlaneseq
        %v1749 = vshrl.u32 %v1748, 7
        %v1750 = vsub.s32 %v1747, %v1749
        %v1751 = vrot.slane %v462, %v1750
        %v1753 = vunpack.c.l.s4 842150450
        %v1754 = vunpack.c.0.s8 %v1753
        %v1755 = vlaneseq
        %v1756 = vshrl.u32 %v1755, 7
        %v1757 = vsub.s32 %v1754, %v1756
        %v1758 = vrot.slane %v462, %v1757
        %v1760 = vunpack.c.l.s4 1414812756
        %v1761 = vunpack.c.0.s8 %v1760
        %v1762 = vlaneseq
        %v1763 = vshrl.u32 %v1762, 7
        %v1764 = vsub.s32 %v1761, %v1763
        %v1765 = vrot.slane %v462, %v1764
        %v1767 = vunpack.c.l.s4 1987475062
        %v1768 = vunpack.c.0.s8 %v1767
        %v1769 = vlaneseq
        %v1770 = vshrl.u32 %v1769, 7
        %v1771 = vsub.s32 %v1768, %v1770
        %v1772 = vrot.slane %v462, %v1771
        %v1774 = vunpack.c.l.s4 269488144
        %v1775 = vunpack.c.0.s8 %v1774
        %v1776 = vlaneseq
        %v1777 = vshrl.u32 %v1776, 7
        %v1778 = vsub.s32 %v1775, %v1777
        %v1779 = vrot.slane %v464, %v1778
        %v1781 = vunpack.c.l.s4 842150450
        %v1782 = vunpack.c.0.s8 %v1781
        %v1783 = vlaneseq
        %v1784 = vshrl.u32 %v1783, 7
        %v1785 = vsub.s32 %v1782, %v1784
        %v1786 = vrot.slane %v464, %v1785
        %v1788 = vunpack.c.l.s4 1414812756
        %v1789 = vunpack.c.0.s8 %v1788
        %v1790 = vlaneseq
        %v1791 = vshrl.u32 %v1790, 7
        %v1792 = vsub.s32 %v1789, %v1791
        %v1793 = vrot.slane %v464, %v1792
        %v1795 = vunpack.c.l.s4 1987475062
        %v1796 = vunpack.c.0.s8 %v1795
        %v1797 = vlaneseq
        %v1798 = vshrl.u32 %v1797, 7
        %v1799 = vsub.s32 %v1796, %v1798
        %v1800 = vrot.slane %v464, %v1799
        %v1802 = vunpack.c.l.s4 269488144
        %v1803 = vunpack.c.0.s8 %v1802
        %v1804 = vlaneseq
        %v1805 = vshrl.u32 %v1804, 7
        %v1806 = vsub.s32 %v1803, %v1805
        %v1807 = vrot.slane %v466, %v1806
        %v1809 = vunpack.c.l.s4 842150450
        %v1810 = vunpack.c.0.s8 %v1809
        %v1811 = vlaneseq
        %v1812 = vshrl.u32 %v1811, 7
        %v1813 = vsub.s32 %v1810, %v1812
        %v1814 = vrot.slane %v466, %v1813
        %v1816 = vunpack.c.l.s4 1414812756
        %v1817 = vunpack.c.0.s8 %v1816
        %v1818 = vlaneseq
        %v1819 = vshrl.u32 %v1818, 7
        %v1820 = vsub.s32 %v1817, %v1819
        %v1821 = vrot.slane %v466, %v1820
        %v1823 = vunpack.c.l.s4 1987475062
        %v1824 = vunpack.c.0.s8 %v1823
        %v1825 = vlaneseq
        %v1826 = vshrl.u32 %v1825, 7
        %v1827 = vsub.s32 %v1824, %v1826
        %v1828 = vrot.slane %v466, %v1827
        %v1830 = vunpack.c.l.s4 269488144
        %v1831 = vunpack.c.0.s8 %v1830
        %v1832 = vlaneseq
        %v1833 = vshrl.u32 %v1832, 7
        %v1834 = vsub.s32 %v1831, %v1833
        %v1835 = vrot.slane %v468, %v1834
        %v1837 = vunpack.c.l.s4 842150450
        %v1838 = vunpack.c.0.s8 %v1837
        %v1839 = vlaneseq
        %v1840 = vshrl.u32 %v1839, 7
        %v1841 = vsub.s32 %v1838, %v1840
        %v1842 = vrot.slane %v468, %v1841
        %v1844 = vunpack.c.l.s4 1414812756
        %v1845 = vunpack.c.0.s8 %v1844
        %v1846 = vlaneseq
        %v1847 = vshrl.u32 %v1846, 7
        %v1848 = vsub.s32 %v1845, %v1847
        %v1849 = vrot.slane %v468, %v1848
        %v1851 = vunpack.c.l.s4 1987475062
        %v1852 = vunpack.c.0.s8 %v1851
        %v1853 = vlaneseq
        %v1854 = vshrl.u32 %v1853, 7
        %v1855 = vsub.s32 %v1852, %v1854
        %v1856 = vrot.slane %v468, %v1855
        %v1858 = vunpack.c.l.s4 269488144
        %v1859 = vunpack.c.0.s8 %v1858
        %v1860 = vlaneseq
        %v1861 = vshrl.u32 %v1860, 7
        %v1862 = vsub.s32 %v1859, %v1861
        %v1863 = vrot.slane %v470, %v1862
        %v1865 = vunpack.c.l.s4 842150450
        %v1866 = vunpack.c.0.s8 %v1865
        %v1867 = vlaneseq
        %v1868 = vshrl.u32 %v1867, 7
        %v1869 = vsub.s32 %v1866, %v1868
        %v1870 = vrot.slane %v470, %v1869
        %v1872 = vunpack.c.l.s4 1414812756
        %v1873 = vunpack.c.0.s8 %v1872
        %v1874 = vlaneseq
        %v1875 = vshrl.u32 %v1874, 7
        %v1876 = vsub.s32 %v1873, %v1875
        %v1877 = vrot.slane %v470, %v1876
        %v1879 = vunpack.c.l.s4 1987475062
        %v1880 = vunpack.c.0.s8 %v1879
        %v1881 = vlaneseq
        %v1882 = vshrl.u32 %v1881, 7
        %v1883 = vsub.s32 %v1880, %v1882
        %v1884 = vrot.slane %v470, %v1883
        %v1886 = vunpack.c.l.s4 269488144
        %v1887 = vunpack.c.0.s8 %v1886
        %v1888 = vlaneseq
        %v1889 = vshrl.u32 %v1888, 7
        %v1890 = vsub.s32 %v1887, %v1889
        %v1891 = vrot.slane %v472, %v1890
        %v1893 = vunpack.c.l.s4 842150450
        %v1894 = vunpack.c.0.s8 %v1893
        %v1895 = vlaneseq
        %v1896 = vshrl.u32 %v1895, 7
        %v1897 = vsub.s32 %v1894, %v1896
        %v1898 = vrot.slane %v472, %v1897
        %v1900 = vunpack.c.l.s4 1414812756
        %v1901 = vunpack.c.0.s8 %v1900
        %v1902 = vlaneseq
        %v1903 = vshrl.u32 %v1902, 7
        %v1904 = vsub.s32 %v1901, %v1903
        %v1905 = vrot.slane %v472, %v1904
        %v1907 = vunpack.c.l.s4 1987475062
        %v1908 = vunpack.c.0.s8 %v1907
        %v1909 = vlaneseq
        %v1910 = vshrl.u32 %v1909, 7
        %v1911 = vsub.s32 %v1908, %v1910
        %v1912 = vrot.slane %v472, %v1911
        %v1914 = vunpack.c.l.s4 269488144
        %v1915 = vunpack.c.0.s8 %v1914
        %v1916 = vlaneseq
        %v1917 = vshrl.u32 %v1916, 7
        %v1918 = vsub.s32 %v1915, %v1917
        %v1919 = vrot.slane %v474, %v1918
        %v1921 = vunpack.c.l.s4 842150450
        %v1922 = vunpack.c.0.s8 %v1921
        %v1923 = vlaneseq
        %v1924 = vshrl.u32 %v1923, 7
        %v1925 = vsub.s32 %v1922, %v1924
        %v1926 = vrot.slane %v474, %v1925
        %v1928 = vunpack.c.l.s4 1414812756
        %v1929 = vunpack.c.0.s8 %v1928
        %v1930 = vlaneseq
        %v1931 = vshrl.u32 %v1930, 7
        %v1932 = vsub.s32 %v1929, %v1931
        %v1933 = vrot.slane %v474, %v1932
        %v1935 = vunpack.c.l.s4 1987475062
        %v1936 = vunpack.c.0.s8 %v1935
        %v1937 = vlaneseq
        %v1938 = vshrl.u32 %v1937, 7
        %v1939 = vsub.s32 %v1936, %v1938
        %v1940 = vrot.slane %v474, %v1939
        %v1942 = vunpack.c.l.s4 269488144
        %v1943 = vunpack.c.0.s8 %v1942
        %v1944 = vlaneseq
        %v1945 = vshrl.u32 %v1944, 7
        %v1946 = vsub.s32 %v1943, %v1945
        %v1947 = vrot.slane %v476, %v1946
        %v1949 = vunpack.c.l.s4 842150450
        %v1950 = vunpack.c.0.s8 %v1949
        %v1951 = vlaneseq
        %v1952 = vshrl.u32 %v1951, 7
        %v1953 = vsub.s32 %v1950, %v1952
        %v1954 = vrot.slane %v476, %v1953
        %v1956 = vunpack.c.l.s4 1414812756
        %v1957 = vunpack.c.0.s8 %v1956
        %v1958 = vlaneseq
        %v1959 = vshrl.u32 %v1958, 7
        %v1960 = vsub.s32 %v1957, %v1959
        %v1961 = vrot.slane %v476, %v1960
        %v1963 = vunpack.c.l.s4 1987475062
        %v1964 = vunpack.c.0.s8 %v1963
        %v1965 = vlaneseq
        %v1966 = vshrl.u32 %v1965, 7
        %v1967 = vsub.s32 %v1964, %v1966
        %v1968 = vrot.slane %v476, %v1967
        %v1970 = vunpack.c.l.s4 269488144
        %v1971 = vunpack.c.0.s8 %v1970
        %v1972 = vlaneseq
        %v1973 = vshrl.u32 %v1972, 7
        %v1974 = vsub.s32 %v1971, %v1973
        %v1975 = vrot.slane %v478, %v1974
        %v1977 = vunpack.c.l.s4 842150450
        %v1978 = vunpack.c.0.s8 %v1977
        %v1979 = vlaneseq
        %v1980 = vshrl.u32 %v1979, 7
        %v1981 = vsub.s32 %v1978, %v1980
        %v1982 = vrot.slane %v478, %v1981
        %v1984 = vunpack.c.l.s4 1414812756
        %v1985 = vunpack.c.0.s8 %v1984
        %v1986 = vlaneseq
        %v1987 = vshrl.u32 %v1986, 7
        %v1988 = vsub.s32 %v1985, %v1987
        %v1989 = vrot.slane %v478, %v1988
        %v1991 = vunpack.c.l.s4 1987475062
        %v1992 = vunpack.c.0.s8 %v1991
        %v1993 = vlaneseq
        %v1994 = vshrl.u32 %v1993, 7
        %v1995 = vsub.s32 %v1992, %v1994
        %v1996 = vrot.slane %v478, %v1995
        %v1998 = vunpack.c.l.s4 269488144
        %v1999 = vunpack.c.0.s8 %v1998
        %v2000 = vlaneseq
        %v2001 = vshrl.u32 %v2000, 7
        %v2002 = vsub.s32 %v1999, %v2001
        %v2003 = vrot.slane %v480, %v2002
        %v2005 = vunpack.c.l.s4 842150450
        %v2006 = vunpack.c.0.s8 %v2005
        %v2007 = vlaneseq
        %v2008 = vshrl.u32 %v2007, 7
        %v2009 = vsub.s32 %v2006, %v2008
        %v2010 = vrot.slane %v480, %v2009
        %v2012 = vunpack.c.l.s4 1414812756
        %v2013 = vunpack.c.0.s8 %v2012
        %v2014 = vlaneseq
        %v2015 = vshrl.u32 %v2014, 7
        %v2016 = vsub.s32 %v2013, %v2015
        %v2017 = vrot.slane %v480, %v2016
        %v2019 = vunpack.c.l.s4 1987475062
        %v2020 = vunpack.c.0.s8 %v2019
        %v2021 = vlaneseq
        %v2022 = vshrl.u32 %v2021, 7
        %v2023 = vsub.s32 %v2020, %v2022
        %v2024 = vrot.slane %v480, %v2023
        %v2026 = vunpack.c.l.s4 269488144
        %v2027 = vunpack.c.0.s8 %v2026
        %v2028 = vlaneseq
        %v2029 = vshrl.u32 %v2028, 7
        %v2030 = vsub.s32 %v2027, %v2029
        %v2031 = vrot.slane %v482, %v2030
        %v2033 = vunpack.c.l.s4 842150450
        %v2034 = vunpack.c.0.s8 %v2033
        %v2035 = vlaneseq
        %v2036 = vshrl.u32 %v2035, 7
        %v2037 = vsub.s32 %v2034, %v2036
        %v2038 = vrot.slane %v482, %v2037
        %v2040 = vunpack.c.l.s4 1414812756
        %v2041 = vunpack.c.0.s8 %v2040
        %v2042 = vlaneseq
        %v2043 = vshrl.u32 %v2042, 7
        %v2044 = vsub.s32 %v2041, %v2043
        %v2045 = vrot.slane %v482, %v2044
        %v2047 = vunpack.c.l.s4 1987475062
        %v2048 = vunpack.c.0.s8 %v2047
        %v2049 = vlaneseq
        %v2050 = vshrl.u32 %v2049, 7
        %v2051 = vsub.s32 %v2048, %v2050
        %v2052 = vrot.slane %v482, %v2051
        %v2054 = vunpack.c.l.s4 269488144
        %v2055 = vunpack.c.0.s8 %v2054
        %v2056 = vlaneseq
        %v2057 = vshrl.u32 %v2056, 7
        %v2058 = vsub.s32 %v2055, %v2057
        %v2059 = vrot.slane %v484, %v2058
        %v2061 = vunpack.c.l.s4 842150450
        %v2062 = vunpack.c.0.s8 %v2061
        %v2063 = vlaneseq
        %v2064 = vshrl.u32 %v2063, 7
        %v2065 = vsub.s32 %v2062, %v2064
        %v2066 = vrot.slane %v484, %v2065
        %v2068 = vunpack.c.l.s4 1414812756
        %v2069 = vunpack.c.0.s8 %v2068
        %v2070 = vlaneseq
        %v2071 = vshrl.u32 %v2070, 7
        %v2072 = vsub.s32 %v2069, %v2071
        %v2073 = vrot.slane %v484, %v2072
        %v2075 = vunpack.c.l.s4 1987475062
        %v2076 = vunpack.c.0.s8 %v2075
        %v2077 = vlaneseq
        %v2078 = vshrl.u32 %v2077, 7
        %v2079 = vsub.s32 %v2076, %v2078
        %v2080 = vrot.slane %v484, %v2079
        %v2082 = vunpack.c.l.s4 269488144
        %v2083 = vunpack.c.0.s8 %v2082
        %v2084 = vlaneseq
        %v2085 = vshrl.u32 %v2084, 7
        %v2086 = vsub.s32 %v2083, %v2085
        %v2087 = vrot.slane %v486, %v2086
        %v2089 = vunpack.c.l.s4 842150450
        %v2090 = vunpack.c.0.s8 %v2089
        %v2091 = vlaneseq
        %v2092 = vshrl.u32 %v2091, 7
        %v2093 = vsub.s32 %v2090, %v2092
        %v2094 = vrot.slane %v486, %v2093
        %v2096 = vunpack.c.l.s4 1414812756
        %v2097 = vunpack.c.0.s8 %v2096
        %v2098 = vlaneseq
        %v2099 = vshrl.u32 %v2098, 7
        %v2100 = vsub.s32 %v2097, %v2099
        %v2101 = vrot.slane %v486, %v2100
        %v2103 = vunpack.c.l.s4 1987475062
        %v2104 = vunpack.c.0.s8 %v2103
        %v2105 = vlaneseq
        %v2106 = vshrl.u32 %v2105, 7
        %v2107 = vsub.s32 %v2104, %v2106
        %v2108 = vrot.slane %v486, %v2107
        %v2110 = vunpack.c.l.s4 269488144
        %v2111 = vunpack.c.0.s8 %v2110
        %v2112 = vlaneseq
        %v2113 = vshrl.u32 %v2112, 7
        %v2114 = vsub.s32 %v2111, %v2113
        %v2115 = vrot.slane %v488, %v2114
        %v2117 = vunpack.c.l.s4 842150450
        %v2118 = vunpack.c.0.s8 %v2117
        %v2119 = vlaneseq
        %v2120 = vshrl.u32 %v2119, 7
        %v2121 = vsub.s32 %v2118, %v2120
        %v2122 = vrot.slane %v488, %v2121
        %v2124 = vunpack.c.l.s4 1414812756
        %v2125 = vunpack.c.0.s8 %v2124
        %v2126 = vlaneseq
        %v2127 = vshrl.u32 %v2126, 7
        %v2128 = vsub.s32 %v2125, %v2127
        %v2129 = vrot.slane %v488, %v2128
        %v2131 = vunpack.c.l.s4 1987475062
        %v2132 = vunpack.c.0.s8 %v2131
        %v2133 = vlaneseq
        %v2134 = vshrl.u32 %v2133, 7
        %v2135 = vsub.s32 %v2132, %v2134
        %v2136 = vrot.slane %v488, %v2135
        %v2138 = vunpack.c.l.s4 269488144
        %v2139 = vunpack.c.0.s8 %v2138
        %v2140 = vlaneseq
        %v2141 = vshrl.u32 %v2140, 7
        %v2142 = vsub.s32 %v2139, %v2141
        %v2143 = vrot.slane %v490, %v2142
        %v2145 = vunpack.c.l.s4 842150450
        %v2146 = vunpack.c.0.s8 %v2145
        %v2147 = vlaneseq
        %v2148 = vshrl.u32 %v2147, 7
        %v2149 = vsub.s32 %v2146, %v2148
        %v2150 = vrot.slane %v490, %v2149
        %v2152 = vunpack.c.l.s4 1414812756
        %v2153 = vunpack.c.0.s8 %v2152
        %v2154 = vlaneseq
        %v2155 = vshrl.u32 %v2154, 7
        %v2156 = vsub.s32 %v2153, %v2155
        %v2157 = vrot.slane %v490, %v2156
        %v2159 = vunpack.c.l.s4 1987475062
        %v2160 = vunpack.c.0.s8 %v2159
        %v2161 = vlaneseq
        %v2162 = vshrl.u32 %v2161, 7
        %v2163 = vsub.s32 %v2160, %v2162
        %v2164 = vrot.slane %v490, %v2163
        %v2166 = vunpack.c.l.s4 269488144
        %v2167 = vunpack.c.0.s8 %v2166
        %v2168 = vlaneseq
        %v2169 = vshrl.u32 %v2168, 7
        %v2170 = vsub.s32 %v2167, %v2169
        %v2171 = vrot.slane %v492, %v2170
        %v2173 = vunpack.c.l.s4 842150450
        %v2174 = vunpack.c.0.s8 %v2173
        %v2175 = vlaneseq
        %v2176 = vshrl.u32 %v2175, 7
        %v2177 = vsub.s32 %v2174, %v2176
        %v2178 = vrot.slane %v492, %v2177
        %v2180 = vunpack.c.l.s4 1414812756
        %v2181 = vunpack.c.0.s8 %v2180
        %v2182 = vlaneseq
        %v2183 = vshrl.u32 %v2182, 7
        %v2184 = vsub.s32 %v2181, %v2183
        %v2185 = vrot.slane %v492, %v2184
        %v2187 = vunpack.c.l.s4 1987475062
        %v2188 = vunpack.c.0.s8 %v2187
        %v2189 = vlaneseq
        %v2190 = vshrl.u32 %v2189, 7
        %v2191 = vsub.s32 %v2188, %v2190
        %v2192 = vrot.slane %v492, %v2191
        %v2194 = vunpack.c.l.s4 269488144
        %v2195 = vunpack.c.0.s8 %v2194
        %v2196 = vlaneseq
        %v2197 = vshrl.u32 %v2196, 7
        %v2198 = vsub.s32 %v2195, %v2197
        %v2199 = vrot.slane %v494, %v2198
        %v2201 = vunpack.c.l.s4 842150450
        %v2202 = vunpack.c.0.s8 %v2201
        %v2203 = vlaneseq
        %v2204 = vshrl.u32 %v2203, 7
        %v2205 = vsub.s32 %v2202, %v2204
        %v2206 = vrot.slane %v494, %v2205
        %v2208 = vunpack.c.l.s4 1414812756
        %v2209 = vunpack.c.0.s8 %v2208
        %v2210 = vlaneseq
        %v2211 = vshrl.u32 %v2210, 7
        %v2212 = vsub.s32 %v2209, %v2211
        %v2213 = vrot.slane %v494, %v2212
        %v2215 = vunpack.c.l.s4 1987475062
        %v2216 = vunpack.c.0.s8 %v2215
        %v2217 = vlaneseq
        %v2218 = vshrl.u32 %v2217, 7
        %v2219 = vsub.s32 %v2216, %v2218
        %v2220 = vrot.slane %v494, %v2219
        %v2222 = vunpack.c.l.s4 269488144
        %v2223 = vunpack.c.0.s8 %v2222
        %v2224 = vlaneseq
        %v2225 = vshrl.u32 %v2224, 7
        %v2226 = vsub.s32 %v2223, %v2225
        %v2227 = vrot.slane %v496, %v2226
        %v2229 = vunpack.c.l.s4 842150450
        %v2230 = vunpack.c.0.s8 %v2229
        %v2231 = vlaneseq
        %v2232 = vshrl.u32 %v2231, 7
        %v2233 = vsub.s32 %v2230, %v2232
        %v2234 = vrot.slane %v496, %v2233
        %v2236 = vunpack.c.l.s4 1414812756
        %v2237 = vunpack.c.0.s8 %v2236
        %v2238 = vlaneseq
        %v2239 = vshrl.u32 %v2238, 7
        %v2240 = vsub.s32 %v2237, %v2239
        %v2241 = vrot.slane %v496, %v2240
        %v2243 = vunpack.c.l.s4 1987475062
        %v2244 = vunpack.c.0.s8 %v2243
        %v2245 = vlaneseq
        %v2246 = vshrl.u32 %v2245, 7
        %v2247 = vsub.s32 %v2244, %v2246
        %v2248 = vrot.slane %v496, %v2247
        %v2250 = vunpack.c.l.s4 269488144
        %v2251 = vunpack.c.0.s8 %v2250
        %v2252 = vlaneseq
        %v2253 = vshrl.u32 %v2252, 7
        %v2254 = vsub.s32 %v2251, %v2253
        %v2255 = vrot.slane %v498, %v2254
        %v2257 = vunpack.c.l.s4 842150450
        %v2258 = vunpack.c.0.s8 %v2257
        %v2259 = vlaneseq
        %v2260 = vshrl.u32 %v2259, 7
        %v2261 = vsub.s32 %v2258, %v2260
        %v2262 = vrot.slane %v498, %v2261
        %v2264 = vunpack.c.l.s4 1414812756
        %v2265 = vunpack.c.0.s8 %v2264
        %v2266 = vlaneseq
        %v2267 = vshrl.u32 %v2266, 7
        %v2268 = vsub.s32 %v2265, %v2267
        %v2269 = vrot.slane %v498, %v2268
        %v2271 = vunpack.c.l.s4 1987475062
        %v2272 = vunpack.c.0.s8 %v2271
        %v2273 = vlaneseq
        %v2274 = vshrl.u32 %v2273, 7
        %v2275 = vsub.s32 %v2272, %v2274
        %v2276 = vrot.slane %v498, %v2275
        %v2278 = vunpack.c.l.s4 269488144
        %v2279 = vunpack.c.0.s8 %v2278
        %v2280 = vlaneseq
        %v2281 = vshrl.u32 %v2280, 7
        %v2282 = vsub.s32 %v2279, %v2281
        %v2283 = vrot.slane %v500, %v2282
        %v2285 = vunpack.c.l.s4 842150450
        %v2286 = vunpack.c.0.s8 %v2285
        %v2287 = vlaneseq
        %v2288 = vshrl.u32 %v2287, 7
        %v2289 = vsub.s32 %v2286, %v2288
        %v2290 = vrot.slane %v500, %v2289
        %v2292 = vunpack.c.l.s4 1414812756
        %v2293 = vunpack.c.0.s8 %v2292
        %v2294 = vlaneseq
        %v2295 = vshrl.u32 %v2294, 7
        %v2296 = vsub.s32 %v2293, %v2295
        %v2297 = vrot.slane %v500, %v2296
        %v2299 = vunpack.c.l.s4 1987475062
        %v2300 = vunpack.c.0.s8 %v2299
        %v2301 = vlaneseq
        %v2302 = vshrl.u32 %v2301, 7
        %v2303 = vsub.s32 %v2300, %v2302
        %v2304 = vrot.slane %v500, %v2303
        %v2306 = vunpack.c.l.s4 269488144
        %v2307 = vunpack.c.0.s8 %v2306
        %v2308 = vlaneseq
        %v2309 = vshrl.u32 %v2308, 7
        %v2310 = vsub.s32 %v2307, %v2309
        %v2311 = vrot.slane %v502, %v2310
        %v2313 = vunpack.c.l.s4 842150450
        %v2314 = vunpack.c.0.s8 %v2313
        %v2315 = vlaneseq
        %v2316 = vshrl.u32 %v2315, 7
        %v2317 = vsub.s32 %v2314, %v2316
        %v2318 = vrot.slane %v502, %v2317
        %v2320 = vunpack.c.l.s4 1414812756
        %v2321 = vunpack.c.0.s8 %v2320
        %v2322 = vlaneseq
        %v2323 = vshrl.u32 %v2322, 7
        %v2324 = vsub.s32 %v2321, %v2323
        %v2325 = vrot.slane %v502, %v2324
        %v2327 = vunpack.c.l.s4 1987475062
        %v2328 = vunpack.c.0.s8 %v2327
        %v2329 = vlaneseq
        %v2330 = vshrl.u32 %v2329, 7
        %v2331 = vsub.s32 %v2328, %v2330
        %v2332 = vrot.slane %v502, %v2331
        %v2334 = vunpack.c.l.s4 269488144
        %v2335 = vunpack.c.0.s8 %v2334
        %v2336 = vlaneseq
        %v2337 = vshrl.u32 %v2336, 7
        %v2338 = vsub.s32 %v2335, %v2337
        %v2339 = vrot.slane %v504, %v2338
        %v2341 = vunpack.c.l.s4 842150450
        %v2342 = vunpack.c.0.s8 %v2341
        %v2343 = vlaneseq
        %v2344 = vshrl.u32 %v2343, 7
        %v2345 = vsub.s32 %v2342, %v2344
        %v2346 = vrot.slane %v504, %v2345
        %v2348 = vunpack.c.l.s4 1414812756
        %v2349 = vunpack.c.0.s8 %v2348
        %v2350 = vlaneseq
        %v2351 = vshrl.u32 %v2350, 7
        %v2352 = vsub.s32 %v2349, %v2351
        %v2353 = vrot.slane %v504, %v2352
        %v2355 = vunpack.c.l.s4 1987475062
        %v2356 = vunpack.c.0.s8 %v2355
        %v2357 = vlaneseq
        %v2358 = vshrl.u32 %v2357, 7
        %v2359 = vsub.s32 %v2356, %v2358
        %v2360 = vrot.slane %v504, %v2359
        %v2361 = vcombine.low %v575, %v582
        %v2362 = vcombine.low %v589, %v596
        %v2364 = vunpack.c.l.s4 1983009808
        %v2365 = vunpack.c.0.s8 %v2364
        %v2366 = vlaneseq
        %v2367 = vshrl.u32 %v2366, 7
        %v2368 = vsub.s32 %v2365, %v2367
        %v2369 = vrot.slane %v2361, %v2368
        %v2371 = vunpack.c.l.s4 1983009808
        %v2372 = vunpack.c.0.s8 %v2371
        %v2373 = vlaneseq
        %v2374 = vshrl.u32 %v2373, 7
        %v2375 = vsub.s32 %v2372, %v2374
        %v2376 = vrot.slane %v2362, %v2375
        %v2377 = vcombine.low %v2369, %v2376
        %v2378 = vcombine.low %v603, %v610
        %v2379 = vcombine.low %v617, %v624
        %v2381 = vunpack.c.l.s4 1983009808
        %v2382 = vunpack.c.0.s8 %v2381
        %v2383 = vlaneseq
        %v2384 = vshrl.u32 %v2383, 7
        %v2385 = vsub.s32 %v2382, %v2384
        %v2386 = vrot.slane %v2378, %v2385
        %v2388 = vunpack.c.l.s4 1983009808
        %v2389 = vunpack.c.0.s8 %v2388
        %v2390 = vlaneseq
        %v2391 = vshrl.u32 %v2390, 7
        %v2392 = vsub.s32 %v2389, %v2391
        %v2393 = vrot.slane %v2379, %v2392
        %v2394 = vcombine.low %v2386, %v2393
        %v2395 = vcombine.low %v631, %v638
        %v2396 = vcombine.low %v645, %v652
        %v2398 = vunpack.c.l.s4 1983009808
        %v2399 = vunpack.c.0.s8 %v2398
        %v2400 = vlaneseq
        %v2401 = vshrl.u32 %v2400, 7
        %v2402 = vsub.s32 %v2399, %v2401
        %v2403 = vrot.slane %v2395, %v2402
        %v2405 = vunpack.c.l.s4 1983009808
        %v2406 = vunpack.c.0.s8 %v2405
        %v2407 = vlaneseq
        %v2408 = vshrl.u32 %v2407, 7
        %v2409 = vsub.s32 %v2406, %v2408
        %v2410 = vrot.slane %v2396, %v2409
        %v2411 = vcombine.low %v2403, %v2410
        %v2412 = vcombine.low %v659, %v666
        %v2413 = vcombine.low %v673, %v680
        %v2415 = vunpack.c.l.s4 1983009808
        %v2416 = vunpack.c.0.s8 %v2415
        %v2417 = vlaneseq
        %v2418 = vshrl.u32 %v2417, 7
        %v2419 = vsub.s32 %v2416, %v2418
        %v2420 = vrot.slane %v2412, %v2419
        %v2422 = vunpack.c.l.s4 1983009808
        %v2423 = vunpack.c.0.s8 %v2422
        %v2424 = vlaneseq
        %v2425 = vshrl.u32 %v2424, 7
        %v2426 = vsub.s32 %v2423, %v2425
        %v2427 = vrot.slane %v2413, %v2426
        %v2428 = vcombine.low %v2420, %v2427
        %v2429 = vcombine.low %v687, %v694
        %v2430 = vcombine.low %v701, %v708
        %v2432 = vunpack.c.l.s4 1983009808
        %v2433 = vunpack.c.0.s8 %v2432
        %v2434 = vlaneseq
        %v2435 = vshrl.u32 %v2434, 7
        %v2436 = vsub.s32 %v2433, %v2435
        %v2437 = vrot.slane %v2429, %v2436
        %v2439 = vunpack.c.l.s4 1983009808
        %v2440 = vunpack.c.0.s8 %v2439
        %v2441 = vlaneseq
        %v2442 = vshrl.u32 %v2441, 7
        %v2443 = vsub.s32 %v2440, %v2442
        %v2444 = vrot.slane %v2430, %v2443
        %v2445 = vcombine.low %v2437, %v2444
        %v2446 = vcombine.low %v715, %v722
        %v2447 = vcombine.low %v729, %v736
        %v2449 = vunpack.c.l.s4 1983009808
        %v2450 = vunpack.c.0.s8 %v2449
        %v2451 = vlaneseq
        %v2452 = vshrl.u32 %v2451, 7
        %v2453 = vsub.s32 %v2450, %v2452
        %v2454 = vrot.slane %v2446, %v2453
        %v2456 = vunpack.c.l.s4 1983009808
        %v2457 = vunpack.c.0.s8 %v2456
        %v2458 = vlaneseq
        %v2459 = vshrl.u32 %v2458, 7
        %v2460 = vsub.s32 %v2457, %v2459
        %v2461 = vrot.slane %v2447, %v2460
        %v2462 = vcombine.low %v2454, %v2461
        %v2463 = vcombine.low %v743, %v750
        %v2464 = vcombine.low %v757, %v764
        %v2466 = vunpack.c.l.s4 1983009808
        %v2467 = vunpack.c.0.s8 %v2466
        %v2468 = vlaneseq
        %v2469 = vshrl.u32 %v2468, 7
        %v2470 = vsub.s32 %v2467, %v2469
        %v2471 = vrot.slane %v2463, %v2470
        %v2473 = vunpack.c.l.s4 1983009808
        %v2474 = vunpack.c.0.s8 %v2473
        %v2475 = vlaneseq
        %v2476 = vshrl.u32 %v2475, 7
        %v2477 = vsub.s32 %v2474, %v2476
        %v2478 = vrot.slane %v2464, %v2477
        %v2479 = vcombine.low %v2471, %v2478
        %v2480 = vcombine.low %v771, %v778
        %v2481 = vcombine.low %v785, %v792
        %v2483 = vunpack.c.l.s4 1983009808
        %v2484 = vunpack.c.0.s8 %v2483
        %v2485 = vlaneseq
        %v2486 = vshrl.u32 %v2485, 7
        %v2487 = vsub.s32 %v2484, %v2486
        %v2488 = vrot.slane %v2480, %v2487
        %v2490 = vunpack.c.l.s4 1983009808
        %v2491 = vunpack.c.0.s8 %v2490
        %v2492 = vlaneseq
        %v2493 = vshrl.u32 %v2492, 7
        %v2494 = vsub.s32 %v2491, %v2493
        %v2495 = vrot.slane %v2481, %v2494
        %v2496 = vcombine.low %v2488, %v2495
        %v2497 = vcombine.low %v799, %v806
        %v2498 = vcombine.low %v813, %v820
        %v2500 = vunpack.c.l.s4 1983009808
        %v2501 = vunpack.c.0.s8 %v2500
        %v2502 = vlaneseq
        %v2503 = vshrl.u32 %v2502, 7
        %v2504 = vsub.s32 %v2501, %v2503
        %v2505 = vrot.slane %v2497, %v2504
        %v2507 = vunpack.c.l.s4 1983009808
        %v2508 = vunpack.c.0.s8 %v2507
        %v2509 = vlaneseq
        %v2510 = vshrl.u32 %v2509, 7
        %v2511 = vsub.s32 %v2508, %v2510
        %v2512 = vrot.slane %v2498, %v2511
        %v2513 = vcombine.low %v2505, %v2512
        %v2514 = vcombine.low %v827, %v834
        %v2515 = vcombine.low %v841, %v848
        %v2517 = vunpack.c.l.s4 1983009808
        %v2518 = vunpack.c.0.s8 %v2517
        %v2519 = vlaneseq
        %v2520 = vshrl.u32 %v2519, 7
        %v2521 = vsub.s32 %v2518, %v2520
        %v2522 = vrot.slane %v2514, %v2521
        %v2524 = vunpack.c.l.s4 1983009808
        %v2525 = vunpack.c.0.s8 %v2524
        %v2526 = vlaneseq
        %v2527 = vshrl.u32 %v2526, 7
        %v2528 = vsub.s32 %v2525, %v2527
        %v2529 = vrot.slane %v2515, %v2528
        %v2530 = vcombine.low %v2522, %v2529
        %v2531 = vcombine.low %v855, %v862
        %v2532 = vcombine.low %v869, %v876
        %v2534 = vunpack.c.l.s4 1983009808
        %v2535 = vunpack.c.0.s8 %v2534
        %v2536 = vlaneseq
        %v2537 = vshrl.u32 %v2536, 7
        %v2538 = vsub.s32 %v2535, %v2537
        %v2539 = vrot.slane %v2531, %v2538
        %v2541 = vunpack.c.l.s4 1983009808
        %v2542 = vunpack.c.0.s8 %v2541
        %v2543 = vlaneseq
        %v2544 = vshrl.u32 %v2543, 7
        %v2545 = vsub.s32 %v2542, %v2544
        %v2546 = vrot.slane %v2532, %v2545
        %v2547 = vcombine.low %v2539, %v2546
        %v2548 = vcombine.low %v883, %v890
        %v2549 = vcombine.low %v897, %v904
        %v2551 = vunpack.c.l.s4 1983009808
        %v2552 = vunpack.c.0.s8 %v2551
        %v2553 = vlaneseq
        %v2554 = vshrl.u32 %v2553, 7
        %v2555 = vsub.s32 %v2552, %v2554
        %v2556 = vrot.slane %v2548, %v2555
        %v2558 = vunpack.c.l.s4 1983009808
        %v2559 = vunpack.c.0.s8 %v2558
        %v2560 = vlaneseq
        %v2561 = vshrl.u32 %v2560, 7
        %v2562 = vsub.s32 %v2559, %v2561
        %v2563 = vrot.slane %v2549, %v2562
        %v2564 = vcombine.low %v2556, %v2563
        %v2565 = vcombine.low %v911, %v918
        %v2566 = vcombine.low %v925, %v932
        %v2568 = vunpack.c.l.s4 1983009808
        %v2569 = vunpack.c.0.s8 %v2568
        %v2570 = vlaneseq
        %v2571 = vshrl.u32 %v2570, 7
        %v2572 = vsub.s32 %v2569, %v2571
        %v2573 = vrot.slane %v2565, %v2572
        %v2575 = vunpack.c.l.s4 1983009808
        %v2576 = vunpack.c.0.s8 %v2575
        %v2577 = vlaneseq
        %v2578 = vshrl.u32 %v2577, 7
        %v2579 = vsub.s32 %v2576, %v2578
        %v2580 = vrot.slane %v2566, %v2579
        %v2581 = vcombine.low %v2573, %v2580
        %v2582 = vcombine.low %v939, %v946
        %v2583 = vcombine.low %v953, %v960
        %v2585 = vunpack.c.l.s4 1983009808
        %v2586 = vunpack.c.0.s8 %v2585
        %v2587 = vlaneseq
        %v2588 = vshrl.u32 %v2587, 7
        %v2589 = vsub.s32 %v2586, %v2588
        %v2590 = vrot.slane %v2582, %v2589
        %v2592 = vunpack.c.l.s4 1983009808
        %v2593 = vunpack.c.0.s8 %v2592
        %v2594 = vlaneseq
        %v2595 = vshrl.u32 %v2594, 7
        %v2596 = vsub.s32 %v2593, %v2595
        %v2597 = vrot.slane %v2583, %v2596
        %v2598 = vcombine.low %v2590, %v2597
        %v2599 = vcombine.low %v967, %v974
        %v2600 = vcombine.low %v981, %v988
        %v2602 = vunpack.c.l.s4 1983009808
        %v2603 = vunpack.c.0.s8 %v2602
        %v2604 = vlaneseq
        %v2605 = vshrl.u32 %v2604, 7
        %v2606 = vsub.s32 %v2603, %v2605
        %v2607 = vrot.slane %v2599, %v2606
        %v2609 = vunpack.c.l.s4 1983009808
        %v2610 = vunpack.c.0.s8 %v2609
        %v2611 = vlaneseq
        %v2612 = vshrl.u32 %v2611, 7
        %v2613 = vsub.s32 %v2610, %v2612
        %v2614 = vrot.slane %v2600, %v2613
        %v2615 = vcombine.low %v2607, %v2614
        %v2616 = vcombine.low %v995, %v1002
        %v2617 = vcombine.low %v1009, %v1016
        %v2619 = vunpack.c.l.s4 1983009808
        %v2620 = vunpack.c.0.s8 %v2619
        %v2621 = vlaneseq
        %v2622 = vshrl.u32 %v2621, 7
        %v2623 = vsub.s32 %v2620, %v2622
        %v2624 = vrot.slane %v2616, %v2623
        %v2626 = vunpack.c.l.s4 1983009808
        %v2627 = vunpack.c.0.s8 %v2626
        %v2628 = vlaneseq
        %v2629 = vshrl.u32 %v2628, 7
        %v2630 = vsub.s32 %v2627, %v2629
        %v2631 = vrot.slane %v2617, %v2630
        %v2632 = vcombine.low %v2624, %v2631
        %v2633 = vcombine.low %v1023, %v1030
        %v2634 = vcombine.low %v1037, %v1044
        %v2636 = vunpack.c.l.s4 1983009808
        %v2637 = vunpack.c.0.s8 %v2636
        %v2638 = vlaneseq
        %v2639 = vshrl.u32 %v2638, 7
        %v2640 = vsub.s32 %v2637, %v2639
        %v2641 = vrot.slane %v2633, %v2640
        %v2643 = vunpack.c.l.s4 1983009808
        %v2644 = vunpack.c.0.s8 %v2643
        %v2645 = vlaneseq
        %v2646 = vshrl.u32 %v2645, 7
        %v2647 = vsub.s32 %v2644, %v2646
        %v2648 = vrot.slane %v2634, %v2647
        %v2649 = vcombine.low %v2641, %v2648
        %v2650 = vcombine.low %v1051, %v1058
        %v2651 = vcombine.low %v1065, %v1072
        %v2653 = vunpack.c.l.s4 1983009808
        %v2654 = vunpack.c.0.s8 %v2653
        %v2655 = vlaneseq
        %v2656 = vshrl.u32 %v2655, 7
        %v2657 = vsub.s32 %v2654, %v2656
        %v2658 = vrot.slane %v2650, %v2657
        %v2660 = vunpack.c.l.s4 1983009808
        %v2661 = vunpack.c.0.s8 %v2660
        %v2662 = vlaneseq
        %v2663 = vshrl.u32 %v2662, 7
        %v2664 = vsub.s32 %v2661, %v2663
        %v2665 = vrot.slane %v2651, %v2664
        %v2666 = vcombine.low %v2658, %v2665
        %v2667 = vcombine.low %v1079, %v1086
        %v2668 = vcombine.low %v1093, %v1100
        %v2670 = vunpack.c.l.s4 1983009808
        %v2671 = vunpack.c.0.s8 %v2670
        %v2672 = vlaneseq
        %v2673 = vshrl.u32 %v2672, 7
        %v2674 = vsub.s32 %v2671, %v2673
        %v2675 = vrot.slane %v2667, %v2674
        %v2677 = vunpack.c.l.s4 1983009808
        %v2678 = vunpack.c.0.s8 %v2677
        %v2679 = vlaneseq
        %v2680 = vshrl.u32 %v2679, 7
        %v2681 = vsub.s32 %v2678, %v2680
        %v2682 = vrot.slane %v2668, %v2681
        %v2683 = vcombine.low %v2675, %v2682
        %v2684 = vcombine.low %v1107, %v1114
        %v2685 = vcombine.low %v1121, %v1128
        %v2687 = vunpack.c.l.s4 1983009808
        %v2688 = vunpack.c.0.s8 %v2687
        %v2689 = vlaneseq
        %v2690 = vshrl.u32 %v2689, 7
        %v2691 = vsub.s32 %v2688, %v2690
        %v2692 = vrot.slane %v2684, %v2691
        %v2694 = vunpack.c.l.s4 1983009808
        %v2695 = vunpack.c.0.s8 %v2694
        %v2696 = vlaneseq
        %v2697 = vshrl.u32 %v2696, 7
        %v2698 = vsub.s32 %v2695, %v2697
        %v2699 = vrot.slane %v2685, %v2698
        %v2700 = vcombine.low %v2692, %v2699
        %v2701 = vcombine.low %v1135, %v1142
        %v2702 = vcombine.low %v1149, %v1156
        %v2704 = vunpack.c.l.s4 1983009808
        %v2705 = vunpack.c.0.s8 %v2704
        %v2706 = vlaneseq
        %v2707 = vshrl.u32 %v2706, 7
        %v2708 = vsub.s32 %v2705, %v2707
        %v2709 = vrot.slane %v2701, %v2708
        %v2711 = vunpack.c.l.s4 1983009808
        %v2712 = vunpack.c.0.s8 %v2711
        %v2713 = vlaneseq
        %v2714 = vshrl.u32 %v2713, 7
        %v2715 = vsub.s32 %v2712, %v2714
        %v2716 = vrot.slane %v2702, %v2715
        %v2717 = vcombine.low %v2709, %v2716
        %v2718 = vcombine.low %v1163, %v1170
        %v2719 = vcombine.low %v1177, %v1184
        %v2721 = vunpack.c.l.s4 1983009808
        %v2722 = vunpack.c.0.s8 %v2721
        %v2723 = vlaneseq
        %v2724 = vshrl.u32 %v2723, 7
        %v2725 = vsub.s32 %v2722, %v2724
        %v2726 = vrot.slane %v2718, %v2725
        %v2728 = vunpack.c.l.s4 1983009808
        %v2729 = vunpack.c.0.s8 %v2728
        %v2730 = vlaneseq
        %v2731 = vshrl.u32 %v2730, 7
        %v2732 = vsub.s32 %v2729, %v2731
        %v2733 = vrot.slane %v2719, %v2732
        %v2734 = vcombine.low %v2726, %v2733
        %v2735 = vcombine.low %v1191, %v1198
        %v2736 = vcombine.low %v1205, %v1212
        %v2738 = vunpack.c.l.s4 1983009808
        %v2739 = vunpack.c.0.s8 %v2738
        %v2740 = vlaneseq
        %v2741 = vshrl.u32 %v2740, 7
        %v2742 = vsub.s32 %v2739, %v2741
        %v2743 = vrot.slane %v2735, %v2742
        %v2745 = vunpack.c.l.s4 1983009808
        %v2746 = vunpack.c.0.s8 %v2745
        %v2747 = vlaneseq
        %v2748 = vshrl.u32 %v2747, 7
        %v2749 = vsub.s32 %v2746, %v2748
        %v2750 = vrot.slane %v2736, %v2749
        %v2751 = vcombine.low %v2743, %v2750
        %v2752 = vcombine.low %v1219, %v1226
        %v2753 = vcombine.low %v1233, %v1240
        %v2755 = vunpack.c.l.s4 1983009808
        %v2756 = vunpack.c.0.s8 %v2755
        %v2757 = vlaneseq
        %v2758 = vshrl.u32 %v2757, 7
        %v2759 = vsub.s32 %v2756, %v2758
        %v2760 = vrot.slane %v2752, %v2759
        %v2762 = vunpack.c.l.s4 1983009808
        %v2763 = vunpack.c.0.s8 %v2762
        %v2764 = vlaneseq
        %v2765 = vshrl.u32 %v2764, 7
        %v2766 = vsub.s32 %v2763, %v2765
        %v2767 = vrot.slane %v2753, %v2766
        %v2768 = vcombine.low %v2760, %v2767
        %v2769 = vcombine.low %v1247, %v1254
        %v2770 = vcombine.low %v1261, %v1268
        %v2772 = vunpack.c.l.s4 1983009808
        %v2773 = vunpack.c.0.s8 %v2772
        %v2774 = vlaneseq
        %v2775 = vshrl.u32 %v2774, 7
        %v2776 = vsub.s32 %v2773, %v2775
        %v2777 = vrot.slane %v2769, %v2776
        %v2779 = vunpack.c.l.s4 1983009808
        %v2780 = vunpack.c.0.s8 %v2779
        %v2781 = vlaneseq
        %v2782 = vshrl.u32 %v2781, 7
        %v2783 = vsub.s32 %v2780, %v2782
        %v2784 = vrot.slane %v2770, %v2783
        %v2785 = vcombine.low %v2777, %v2784
        %v2786 = vcombine.low %v1275, %v1282
        %v2787 = vcombine.low %v1289, %v1296
        %v2789 = vunpack.c.l.s4 1983009808
        %v2790 = vunpack.c.0.s8 %v2789
        %v2791 = vlaneseq
        %v2792 = vshrl.u32 %v2791, 7
        %v2793 = vsub.s32 %v2790, %v2792
        %v2794 = vrot.slane %v2786, %v2793
        %v2796 = vunpack.c.l.s4 1983009808
        %v2797 = vunpack.c.0.s8 %v2796
        %v2798 = vlaneseq
        %v2799 = vshrl.u32 %v2798, 7
        %v2800 = vsub.s32 %v2797, %v2799
        %v2801 = vrot.slane %v2787, %v2800
        %v2802 = vcombine.low %v2794, %v2801
        %v2803 = vcombine.low %v1303, %v1310
        %v2804 = vcombine.low %v1317, %v1324
        %v2806 = vunpack.c.l.s4 1983009808
        %v2807 = vunpack.c.0.s8 %v2806
        %v2808 = vlaneseq
        %v2809 = vshrl.u32 %v2808, 7
        %v2810 = vsub.s32 %v2807, %v2809
        %v2811 = vrot.slane %v2803, %v2810
        %v2813 = vunpack.c.l.s4 1983009808
        %v2814 = vunpack.c.0.s8 %v2813
        %v2815 = vlaneseq
        %v2816 = vshrl.u32 %v2815, 7
        %v2817 = vsub.s32 %v2814, %v2816
        %v2818 = vrot.slane %v2804, %v2817
        %v2819 = vcombine.low %v2811, %v2818
        %v2820 = vcombine.low %v1331, %v1338
        %v2821 = vcombine.low %v1345, %v1352
        %v2823 = vunpack.c.l.s4 1983009808
        %v2824 = vunpack.c.0.s8 %v2823
        %v2825 = vlaneseq
        %v2826 = vshrl.u32 %v2825, 7
        %v2827 = vsub.s32 %v2824, %v2826
        %v2828 = vrot.slane %v2820, %v2827
        %v2830 = vunpack.c.l.s4 1983009808
        %v2831 = vunpack.c.0.s8 %v2830
        %v2832 = vlaneseq
        %v2833 = vshrl.u32 %v2832, 7
        %v2834 = vsub.s32 %v2831, %v2833
        %v2835 = vrot.slane %v2821, %v2834
        %v2836 = vcombine.low %v2828, %v2835
        %v2837 = vcombine.low %v1359, %v1366
        %v2838 = vcombine.low %v1373, %v1380
        %v2840 = vunpack.c.l.s4 1983009808
        %v2841 = vunpack.c.0.s8 %v2840
        %v2842 = vlaneseq
        %v2843 = vshrl.u32 %v2842, 7
        %v2844 = vsub.s32 %v2841, %v2843
        %v2845 = vrot.slane %v2837, %v2844
        %v2847 = vunpack.c.l.s4 1983009808
        %v2848 = vunpack.c.0.s8 %v2847
        %v2849 = vlaneseq
        %v2850 = vshrl.u32 %v2849, 7
        %v2851 = vsub.s32 %v2848, %v2850
        %v2852 = vrot.slane %v2838, %v2851
        %v2853 = vcombine.low %v2845, %v2852
        %v2854 = vcombine.low %v1387, %v1394
        %v2855 = vcombine.low %v1401, %v1408
        %v2857 = vunpack.c.l.s4 1983009808
        %v2858 = vunpack.c.0.s8 %v2857
        %v2859 = vlaneseq
        %v2860 = vshrl.u32 %v2859, 7
        %v2861 = vsub.s32 %v2858, %v2860
        %v2862 = vrot.slane %v2854, %v2861
        %v2864 = vunpack.c.l.s4 1983009808
        %v2865 = vunpack.c.0.s8 %v2864
        %v2866 = vlaneseq
        %v2867 = vshrl.u32 %v2866, 7
        %v2868 = vsub.s32 %v2865, %v2867
        %v2869 = vrot.slane %v2855, %v2868
        %v2870 = vcombine.low %v2862, %v2869
        %v2871 = vcombine.low %v1415, %v1422
        %v2872 = vcombine.low %v1429, %v1436
        %v2874 = vunpack.c.l.s4 1983009808
        %v2875 = vunpack.c.0.s8 %v2874
        %v2876 = vlaneseq
        %v2877 = vshrl.u32 %v2876, 7
        %v2878 = vsub.s32 %v2875, %v2877
        %v2879 = vrot.slane %v2871, %v2878
        %v2881 = vunpack.c.l.s4 1983009808
        %v2882 = vunpack.c.0.s8 %v2881
        %v2883 = vlaneseq
        %v2884 = vshrl.u32 %v2883, 7
        %v2885 = vsub.s32 %v2882, %v2884
        %v2886 = vrot.slane %v2872, %v2885
        %v2887 = vcombine.low %v2879, %v2886
        %v2888 = vcombine.low %v1443, %v1450
        %v2889 = vcombine.low %v1457, %v1464
        %v2891 = vunpack.c.l.s4 1983009808
        %v2892 = vunpack.c.0.s8 %v2891
        %v2893 = vlaneseq
        %v2894 = vshrl.u32 %v2893, 7
        %v2895 = vsub.s32 %v2892, %v2894
        %v2896 = vrot.slane %v2888, %v2895
        %v2898 = vunpack.c.l.s4 1983009808
        %v2899 = vunpack.c.0.s8 %v2898
        %v2900 = vlaneseq
        %v2901 = vshrl.u32 %v2900, 7
        %v2902 = vsub.s32 %v2899, %v2901
        %v2903 = vrot.slane %v2889, %v2902
        %v2904 = vcombine.low %v2896, %v2903
        %v2905 = vcombine.low %v1471, %v1478
        %v2906 = vcombine.low %v1485, %v1492
        %v2908 = vunpack.c.l.s4 1983009808
        %v2909 = vunpack.c.0.s8 %v2908
        %v2910 = vlaneseq
        %v2911 = vshrl.u32 %v2910, 7
        %v2912 = vsub.s32 %v2909, %v2911
        %v2913 = vrot.slane %v2905, %v2912
        %v2915 = vunpack.c.l.s4 1983009808
        %v2916 = vunpack.c.0.s8 %v2915
        %v2917 = vlaneseq
        %v2918 = vshrl.u32 %v2917, 7
        %v2919 = vsub.s32 %v2916, %v2918
        %v2920 = vrot.slane %v2906, %v2919
        %v2921 = vcombine.low %v2913, %v2920
        %v2922 = vcombine.low %v1499, %v1506
        %v2923 = vcombine.low %v1513, %v1520
        %v2925 = vunpack.c.l.s4 1983009808
        %v2926 = vunpack.c.0.s8 %v2925
        %v2927 = vlaneseq
        %v2928 = vshrl.u32 %v2927, 7
        %v2929 = vsub.s32 %v2926, %v2928
        %v2930 = vrot.slane %v2922, %v2929
        %v2932 = vunpack.c.l.s4 1983009808
        %v2933 = vunpack.c.0.s8 %v2932
        %v2934 = vlaneseq
        %v2935 = vshrl.u32 %v2934, 7
        %v2936 = vsub.s32 %v2933, %v2935
        %v2937 = vrot.slane %v2923, %v2936
        %v2938 = vcombine.low %v2930, %v2937
        %v2939 = vcombine.low %v1527, %v1534
        %v2940 = vcombine.low %v1541, %v1548
        %v2942 = vunpack.c.l.s4 1983009808
        %v2943 = vunpack.c.0.s8 %v2942
        %v2944 = vlaneseq
        %v2945 = vshrl.u32 %v2944, 7
        %v2946 = vsub.s32 %v2943, %v2945
        %v2947 = vrot.slane %v2939, %v2946
        %v2949 = vunpack.c.l.s4 1983009808
        %v2950 = vunpack.c.0.s8 %v2949
        %v2951 = vlaneseq
        %v2952 = vshrl.u32 %v2951, 7
        %v2953 = vsub.s32 %v2950, %v2952
        %v2954 = vrot.slane %v2940, %v2953
        %v2955 = vcombine.low %v2947, %v2954
        %v2956 = vcombine.low %v1555, %v1562
        %v2957 = vcombine.low %v1569, %v1576
        %v2959 = vunpack.c.l.s4 1983009808
        %v2960 = vunpack.c.0.s8 %v2959
        %v2961 = vlaneseq
        %v2962 = vshrl.u32 %v2961, 7
        %v2963 = vsub.s32 %v2960, %v2962
        %v2964 = vrot.slane %v2956, %v2963
        %v2966 = vunpack.c.l.s4 1983009808
        %v2967 = vunpack.c.0.s8 %v2966
        %v2968 = vlaneseq
        %v2969 = vshrl.u32 %v2968, 7
        %v2970 = vsub.s32 %v2967, %v2969
        %v2971 = vrot.slane %v2957, %v2970
        %v2972 = vcombine.low %v2964, %v2971
        %v2973 = vcombine.low %v1583, %v1590
        %v2974 = vcombine.low %v1597, %v1604
        %v2976 = vunpack.c.l.s4 1983009808
        %v2977 = vunpack.c.0.s8 %v2976
        %v2978 = vlaneseq
        %v2979 = vshrl.u32 %v2978, 7
        %v2980 = vsub.s32 %v2977, %v2979
        %v2981 = vrot.slane %v2973, %v2980
        %v2983 = vunpack.c.l.s4 1983009808
        %v2984 = vunpack.c.0.s8 %v2983
        %v2985 = vlaneseq
        %v2986 = vshrl.u32 %v2985, 7
        %v2987 = vsub.s32 %v2984, %v2986
        %v2988 = vrot.slane %v2974, %v2987
        %v2989 = vcombine.low %v2981, %v2988
        %v2990 = vcombine.low %v1611, %v1618
        %v2991 = vcombine.low %v1625, %v1632
        %v2993 = vunpack.c.l.s4 1983009808
        %v2994 = vunpack.c.0.s8 %v2993
        %v2995 = vlaneseq
        %v2996 = vshrl.u32 %v2995, 7
        %v2997 = vsub.s32 %v2994, %v2996
        %v2998 = vrot.slane %v2990, %v2997
        %v3000 = vunpack.c.l.s4 1983009808
        %v3001 = vunpack.c.0.s8 %v3000
        %v3002 = vlaneseq
        %v3003 = vshrl.u32 %v3002, 7
        %v3004 = vsub.s32 %v3001, %v3003
        %v3005 = vrot.slane %v2991, %v3004
        %v3006 = vcombine.low %v2998, %v3005
        %v3007 = vcombine.low %v1639, %v1646
        %v3008 = vcombine.low %v1653, %v1660
        %v3010 = vunpack.c.l.s4 1983009808
        %v3011 = vunpack.c.0.s8 %v3010
        %v3012 = vlaneseq
        %v3013 = vshrl.u32 %v3012, 7
        %v3014 = vsub.s32 %v3011, %v3013
        %v3015 = vrot.slane %v3007, %v3014
        %v3017 = vunpack.c.l.s4 1983009808
        %v3018 = vunpack.c.0.s8 %v3017
        %v3019 = vlaneseq
        %v3020 = vshrl.u32 %v3019, 7
        %v3021 = vsub.s32 %v3018, %v3020
        %v3022 = vrot.slane %v3008, %v3021
        %v3023 = vcombine.low %v3015, %v3022
        %v3024 = vcombine.low %v1667, %v1674
        %v3025 = vcombine.low %v1681, %v1688
        %v3027 = vunpack.c.l.s4 1983009808
        %v3028 = vunpack.c.0.s8 %v3027
        %v3029 = vlaneseq
        %v3030 = vshrl.u32 %v3029, 7
        %v3031 = vsub.s32 %v3028, %v3030
        %v3032 = vrot.slane %v3024, %v3031
        %v3034 = vunpack.c.l.s4 1983009808
        %v3035 = vunpack.c.0.s8 %v3034
        %v3036 = vlaneseq
        %v3037 = vshrl.u32 %v3036, 7
        %v3038 = vsub.s32 %v3035, %v3037
        %v3039 = vrot.slane %v3025, %v3038
        %v3040 = vcombine.low %v3032, %v3039
        %v3041 = vcombine.low %v1695, %v1702
        %v3042 = vcombine.low %v1709, %v1716
        %v3044 = vunpack.c.l.s4 1983009808
        %v3045 = vunpack.c.0.s8 %v3044
        %v3046 = vlaneseq
        %v3047 = vshrl.u32 %v3046, 7
        %v3048 = vsub.s32 %v3045, %v3047
        %v3049 = vrot.slane %v3041, %v3048
        %v3051 = vunpack.c.l.s4 1983009808
        %v3052 = vunpack.c.0.s8 %v3051
        %v3053 = vlaneseq
        %v3054 = vshrl.u32 %v3053, 7
        %v3055 = vsub.s32 %v3052, %v3054
        %v3056 = vrot.slane %v3042, %v3055
        %v3057 = vcombine.low %v3049, %v3056
        %v3058 = vcombine.low %v1723, %v1730
        %v3059 = vcombine.low %v1737, %v1744
        %v3061 = vunpack.c.l.s4 1983009808
        %v3062 = vunpack.c.0.s8 %v3061
        %v3063 = vlaneseq
        %v3064 = vshrl.u32 %v3063, 7
        %v3065 = vsub.s32 %v3062, %v3064
        %v3066 = vrot.slane %v3058, %v3065
        %v3068 = vunpack.c.l.s4 1983009808
        %v3069 = vunpack.c.0.s8 %v3068
        %v3070 = vlaneseq
        %v3071 = vshrl.u32 %v3070, 7
        %v3072 = vsub.s32 %v3069, %v3071
        %v3073 = vrot.slane %v3059, %v3072
        %v3074 = vcombine.low %v3066, %v3073
        %v3075 = vcombine.low %v1751, %v1758
        %v3076 = vcombine.low %v1765, %v1772
        %v3078 = vunpack.c.l.s4 1983009808
        %v3079 = vunpack.c.0.s8 %v3078
        %v3080 = vlaneseq
        %v3081 = vshrl.u32 %v3080, 7
        %v3082 = vsub.s32 %v3079, %v3081
        %v3083 = vrot.slane %v3075, %v3082
        %v3085 = vunpack.c.l.s4 1983009808
        %v3086 = vunpack.c.0.s8 %v3085
        %v3087 = vlaneseq
        %v3088 = vshrl.u32 %v3087, 7
        %v3089 = vsub.s32 %v3086, %v3088
        %v3090 = vrot.slane %v3076, %v3089
        %v3091 = vcombine.low %v3083, %v3090
        %v3092 = vcombine.low %v1779, %v1786
        %v3093 = vcombine.low %v1793, %v1800
        %v3095 = vunpack.c.l.s4 1983009808
        %v3096 = vunpack.c.0.s8 %v3095
        %v3097 = vlaneseq
        %v3098 = vshrl.u32 %v3097, 7
        %v3099 = vsub.s32 %v3096, %v3098
        %v3100 = vrot.slane %v3092, %v3099
        %v3102 = vunpack.c.l.s4 1983009808
        %v3103 = vunpack.c.0.s8 %v3102
        %v3104 = vlaneseq
        %v3105 = vshrl.u32 %v3104, 7
        %v3106 = vsub.s32 %v3103, %v3105
        %v3107 = vrot.slane %v3093, %v3106
        %v3108 = vcombine.low %v3100, %v3107
        %v3109 = vcombine.low %v1807, %v1814
        %v3110 = vcombine.low %v1821, %v1828
        %v3112 = vunpack.c.l.s4 1983009808
        %v3113 = vunpack.c.0.s8 %v3112
        %v3114 = vlaneseq
        %v3115 = vshrl.u32 %v3114, 7
        %v3116 = vsub.s32 %v3113, %v3115
        %v3117 = vrot.slane %v3109, %v3116
        %v3119 = vunpack.c.l.s4 1983009808
        %v3120 = vunpack.c.0.s8 %v3119
        %v3121 = vlaneseq
        %v3122 = vshrl.u32 %v3121, 7
        %v3123 = vsub.s32 %v3120, %v3122
        %v3124 = vrot.slane %v3110, %v3123
        %v3125 = vcombine.low %v3117, %v3124
        %v3126 = vcombine.low %v1835, %v1842
        %v3127 = vcombine.low %v1849, %v1856
        %v3129 = vunpack.c.l.s4 1983009808
        %v3130 = vunpack.c.0.s8 %v3129
        %v3131 = vlaneseq
        %v3132 = vshrl.u32 %v3131, 7
        %v3133 = vsub.s32 %v3130, %v3132
        %v3134 = vrot.slane %v3126, %v3133
        %v3136 = vunpack.c.l.s4 1983009808
        %v3137 = vunpack.c.0.s8 %v3136
        %v3138 = vlaneseq
        %v3139 = vshrl.u32 %v3138, 7
        %v3140 = vsub.s32 %v3137, %v3139
        %v3141 = vrot.slane %v3127, %v3140
        %v3142 = vcombine.low %v3134, %v3141
        %v3143 = vcombine.low %v1863, %v1870
        %v3144 = vcombine.low %v1877, %v1884
        %v3146 = vunpack.c.l.s4 1983009808
        %v3147 = vunpack.c.0.s8 %v3146
        %v3148 = vlaneseq
        %v3149 = vshrl.u32 %v3148, 7
        %v3150 = vsub.s32 %v3147, %v3149
        %v3151 = vrot.slane %v3143, %v3150
        %v3153 = vunpack.c.l.s4 1983009808
        %v3154 = vunpack.c.0.s8 %v3153
        %v3155 = vlaneseq
        %v3156 = vshrl.u32 %v3155, 7
        %v3157 = vsub.s32 %v3154, %v3156
        %v3158 = vrot.slane %v3144, %v3157
        %v3159 = vcombine.low %v3151, %v3158
        %v3160 = vcombine.low %v1891, %v1898
        %v3161 = vcombine.low %v1905, %v1912
        %v3163 = vunpack.c.l.s4 1983009808
        %v3164 = vunpack.c.0.s8 %v3163
        %v3165 = vlaneseq
        %v3166 = vshrl.u32 %v3165, 7
        %v3167 = vsub.s32 %v3164, %v3166
        %v3168 = vrot.slane %v3160, %v3167
        %v3170 = vunpack.c.l.s4 1983009808
        %v3171 = vunpack.c.0.s8 %v3170
        %v3172 = vlaneseq
        %v3173 = vshrl.u32 %v3172, 7
        %v3174 = vsub.s32 %v3171, %v3173
        %v3175 = vrot.slane %v3161, %v3174
        %v3176 = vcombine.low %v3168, %v3175
        %v3177 = vcombine.low %v1919, %v1926
        %v3178 = vcombine.low %v1933, %v1940
        %v3180 = vunpack.c.l.s4 1983009808
        %v3181 = vunpack.c.0.s8 %v3180
        %v3182 = vlaneseq
        %v3183 = vshrl.u32 %v3182, 7
        %v3184 = vsub.s32 %v3181, %v3183
        %v3185 = vrot.slane %v3177, %v3184
        %v3187 = vunpack.c.l.s4 1983009808
        %v3188 = vunpack.c.0.s8 %v3187
        %v3189 = vlaneseq
        %v3190 = vshrl.u32 %v3189, 7
        %v3191 = vsub.s32 %v3188, %v3190
        %v3192 = vrot.slane %v3178, %v3191
        %v3193 = vcombine.low %v3185, %v3192
        %v3194 = vcombine.low %v1947, %v1954
        %v3195 = vcombine.low %v1961, %v1968
        %v3197 = vunpack.c.l.s4 1983009808
        %v3198 = vunpack.c.0.s8 %v3197
        %v3199 = vlaneseq
        %v3200 = vshrl.u32 %v3199, 7
        %v3201 = vsub.s32 %v3198, %v3200
        %v3202 = vrot.slane %v3194, %v3201
        %v3204 = vunpack.c.l.s4 1983009808
        %v3205 = vunpack.c.0.s8 %v3204
        %v3206 = vlaneseq
        %v3207 = vshrl.u32 %v3206, 7
        %v3208 = vsub.s32 %v3205, %v3207
        %v3209 = vrot.slane %v3195, %v3208
        %v3210 = vcombine.low %v3202, %v3209
        %v3211 = vcombine.low %v1975, %v1982
        %v3212 = vcombine.low %v1989, %v1996
        %v3214 = vunpack.c.l.s4 1983009808
        %v3215 = vunpack.c.0.s8 %v3214
        %v3216 = vlaneseq
        %v3217 = vshrl.u32 %v3216, 7
        %v3218 = vsub.s32 %v3215, %v3217
        %v3219 = vrot.slane %v3211, %v3218
        %v3221 = vunpack.c.l.s4 1983009808
        %v3222 = vunpack.c.0.s8 %v3221
        %v3223 = vlaneseq
        %v3224 = vshrl.u32 %v3223, 7
        %v3225 = vsub.s32 %v3222, %v3224
        %v3226 = vrot.slane %v3212, %v3225
        %v3227 = vcombine.low %v3219, %v3226
        %v3228 = vcombine.low %v2003, %v2010
        %v3229 = vcombine.low %v2017, %v2024
        %v3231 = vunpack.c.l.s4 1983009808
        %v3232 = vunpack.c.0.s8 %v3231
        %v3233 = vlaneseq
        %v3234 = vshrl.u32 %v3233, 7
        %v3235 = vsub.s32 %v3232, %v3234
        %v3236 = vrot.slane %v3228, %v3235
        %v3238 = vunpack.c.l.s4 1983009808
        %v3239 = vunpack.c.0.s8 %v3238
        %v3240 = vlaneseq
        %v3241 = vshrl.u32 %v3240, 7
        %v3242 = vsub.s32 %v3239, %v3241
        %v3243 = vrot.slane %v3229, %v3242
        %v3244 = vcombine.low %v3236, %v3243
        %v3245 = vcombine.low %v2031, %v2038
        %v3246 = vcombine.low %v2045, %v2052
        %v3248 = vunpack.c.l.s4 1983009808
        %v3249 = vunpack.c.0.s8 %v3248
        %v3250 = vlaneseq
        %v3251 = vshrl.u32 %v3250, 7
        %v3252 = vsub.s32 %v3249, %v3251
        %v3253 = vrot.slane %v3245, %v3252
        %v3255 = vunpack.c.l.s4 1983009808
        %v3256 = vunpack.c.0.s8 %v3255
        %v3257 = vlaneseq
        %v3258 = vshrl.u32 %v3257, 7
        %v3259 = vsub.s32 %v3256, %v3258
        %v3260 = vrot.slane %v3246, %v3259
        %v3261 = vcombine.low %v3253, %v3260
        %v3262 = vcombine.low %v2059, %v2066
        %v3263 = vcombine.low %v2073, %v2080
        %v3265 = vunpack.c.l.s4 1983009808
        %v3266 = vunpack.c.0.s8 %v3265
        %v3267 = vlaneseq
        %v3268 = vshrl.u32 %v3267, 7
        %v3269 = vsub.s32 %v3266, %v3268
        %v3270 = vrot.slane %v3262, %v3269
        %v3272 = vunpack.c.l.s4 1983009808
        %v3273 = vunpack.c.0.s8 %v3272
        %v3274 = vlaneseq
        %v3275 = vshrl.u32 %v3274, 7
        %v3276 = vsub.s32 %v3273, %v3275
        %v3277 = vrot.slane %v3263, %v3276
        %v3278 = vcombine.low %v3270, %v3277
        %v3279 = vcombine.low %v2087, %v2094
        %v3280 = vcombine.low %v2101, %v2108
        %v3282 = vunpack.c.l.s4 1983009808
        %v3283 = vunpack.c.0.s8 %v3282
        %v3284 = vlaneseq
        %v3285 = vshrl.u32 %v3284, 7
        %v3286 = vsub.s32 %v3283, %v3285
        %v3287 = vrot.slane %v3279, %v3286
        %v3289 = vunpack.c.l.s4 1983009808
        %v3290 = vunpack.c.0.s8 %v3289
        %v3291 = vlaneseq
        %v3292 = vshrl.u32 %v3291, 7
        %v3293 = vsub.s32 %v3290, %v3292
        %v3294 = vrot.slane %v3280, %v3293
        %v3295 = vcombine.low %v3287, %v3294
        %v3296 = vcombine.low %v2115, %v2122
        %v3297 = vcombine.low %v2129, %v2136
        %v3299 = vunpack.c.l.s4 1983009808
        %v3300 = vunpack.c.0.s8 %v3299
        %v3301 = vlaneseq
        %v3302 = vshrl.u32 %v3301, 7
        %v3303 = vsub.s32 %v3300, %v3302
        %v3304 = vrot.slane %v3296, %v3303
        %v3306 = vunpack.c.l.s4 1983009808
        %v3307 = vunpack.c.0.s8 %v3306
        %v3308 = vlaneseq
        %v3309 = vshrl.u32 %v3308, 7
        %v3310 = vsub.s32 %v3307, %v3309
        %v3311 = vrot.slane %v3297, %v3310
        %v3312 = vcombine.low %v3304, %v3311
        %v3313 = vcombine.low %v2143, %v2150
        %v3314 = vcombine.low %v2157, %v2164
        %v3316 = vunpack.c.l.s4 1983009808
        %v3317 = vunpack.c.0.s8 %v3316
        %v3318 = vlaneseq
        %v3319 = vshrl.u32 %v3318, 7
        %v3320 = vsub.s32 %v3317, %v3319
        %v3321 = vrot.slane %v3313, %v3320
        %v3323 = vunpack.c.l.s4 1983009808
        %v3324 = vunpack.c.0.s8 %v3323
        %v3325 = vlaneseq
        %v3326 = vshrl.u32 %v3325, 7
        %v3327 = vsub.s32 %v3324, %v3326
        %v3328 = vrot.slane %v3314, %v3327
        %v3329 = vcombine.low %v3321, %v3328
        %v3330 = vcombine.low %v2171, %v2178
        %v3331 = vcombine.low %v2185, %v2192
        %v3333 = vunpack.c.l.s4 1983009808
        %v3334 = vunpack.c.0.s8 %v3333
        %v3335 = vlaneseq
        %v3336 = vshrl.u32 %v3335, 7
        %v3337 = vsub.s32 %v3334, %v3336
        %v3338 = vrot.slane %v3330, %v3337
        %v3340 = vunpack.c.l.s4 1983009808
        %v3341 = vunpack.c.0.s8 %v3340
        %v3342 = vlaneseq
        %v3343 = vshrl.u32 %v3342, 7
        %v3344 = vsub.s32 %v3341, %v3343
        %v3345 = vrot.slane %v3331, %v3344
        %v3346 = vcombine.low %v3338, %v3345
        %v3347 = vcombine.low %v2199, %v2206
        %v3348 = vcombine.low %v2213, %v2220
        %v3350 = vunpack.c.l.s4 1983009808
        %v3351 = vunpack.c.0.s8 %v3350
        %v3352 = vlaneseq
        %v3353 = vshrl.u32 %v3352, 7
        %v3354 = vsub.s32 %v3351, %v3353
        %v3355 = vrot.slane %v3347, %v3354
        %v3357 = vunpack.c.l.s4 1983009808
        %v3358 = vunpack.c.0.s8 %v3357
        %v3359 = vlaneseq
        %v3360 = vshrl.u32 %v3359, 7
        %v3361 = vsub.s32 %v3358, %v3360
        %v3362 = vrot.slane %v3348, %v3361
        %v3363 = vcombine.low %v3355, %v3362
        %v3364 = vcombine.low %v2227, %v2234
        %v3365 = vcombine.low %v2241, %v2248
        %v3367 = vunpack.c.l.s4 1983009808
        %v3368 = vunpack.c.0.s8 %v3367
        %v3369 = vlaneseq
        %v3370 = vshrl.u32 %v3369, 7
        %v3371 = vsub.s32 %v3368, %v3370
        %v3372 = vrot.slane %v3364, %v3371
        %v3374 = vunpack.c.l.s4 1983009808
        %v3375 = vunpack.c.0.s8 %v3374
        %v3376 = vlaneseq
        %v3377 = vshrl.u32 %v3376, 7
        %v3378 = vsub.s32 %v3375, %v3377
        %v3379 = vrot.slane %v3365, %v3378
        %v3380 = vcombine.low %v3372, %v3379
        %v3381 = vcombine.low %v2255, %v2262
        %v3382 = vcombine.low %v2269, %v2276
        %v3384 = vunpack.c.l.s4 1983009808
        %v3385 = vunpack.c.0.s8 %v3384
        %v3386 = vlaneseq
        %v3387 = vshrl.u32 %v3386, 7
        %v3388 = vsub.s32 %v3385, %v3387
        %v3389 = vrot.slane %v3381, %v3388
        %v3391 = vunpack.c.l.s4 1983009808
        %v3392 = vunpack.c.0.s8 %v3391
        %v3393 = vlaneseq
        %v3394 = vshrl.u32 %v3393, 7
        %v3395 = vsub.s32 %v3392, %v3394
        %v3396 = vrot.slane %v3382, %v3395
        %v3397 = vcombine.low %v3389, %v3396
        %v3398 = vcombine.low %v2283, %v2290
        %v3399 = vcombine.low %v2297, %v2304
        %v3401 = vunpack.c.l.s4 1983009808
        %v3402 = vunpack.c.0.s8 %v3401
        %v3403 = vlaneseq
        %v3404 = vshrl.u32 %v3403, 7
        %v3405 = vsub.s32 %v3402, %v3404
        %v3406 = vrot.slane %v3398, %v3405
        %v3408 = vunpack.c.l.s4 1983009808
        %v3409 = vunpack.c.0.s8 %v3408
        %v3410 = vlaneseq
        %v3411 = vshrl.u32 %v3410, 7
        %v3412 = vsub.s32 %v3409, %v3411
        %v3413 = vrot.slane %v3399, %v3412
        %v3414 = vcombine.low %v3406, %v3413
        %v3415 = vcombine.low %v2311, %v2318
        %v3416 = vcombine.low %v2325, %v2332
        %v3418 = vunpack.c.l.s4 1983009808
        %v3419 = vunpack.c.0.s8 %v3418
        %v3420 = vlaneseq
        %v3421 = vshrl.u32 %v3420, 7
        %v3422 = vsub.s32 %v3419, %v3421
        %v3423 = vrot.slane %v3415, %v3422
        %v3425 = vunpack.c.l.s4 1983009808
        %v3426 = vunpack.c.0.s8 %v3425
        %v3427 = vlaneseq
        %v3428 = vshrl.u32 %v3427, 7
        %v3429 = vsub.s32 %v3426, %v3428
        %v3430 = vrot.slane %v3416, %v3429
        %v3431 = vcombine.low %v3423, %v3430
        %v3432 = vcombine.low %v2339, %v2346
        %v3433 = vcombine.low %v2353, %v2360
        %v3435 = vunpack.c.l.s4 1983009808
        %v3436 = vunpack.c.0.s8 %v3435
        %v3437 = vlaneseq
        %v3438 = vshrl.u32 %v3437, 7
        %v3439 = vsub.s32 %v3436, %v3438
        %v3440 = vrot.slane %v3432, %v3439
        %v3442 = vunpack.c.l.s4 1983009808
        %v3443 = vunpack.c.0.s8 %v3442
        %v3444 = vlaneseq
        %v3445 = vshrl.u32 %v3444, 7
        %v3446 = vsub.s32 %v3443, %v3445
        %v3447 = vrot.slane %v3433, %v3446
        %v3448 = vcombine.low %v3440, %v3447
        %3449 = vset.pattern.permute.xlu0 0
        %3450 = vperm.xlu0 %3449, %v2377
        %v3451 = vpop.permute.xlu0 %3450
        %3452 = vset.pattern.permute.xlu0 0
        %3453 = vperm.xlu0 %3452, %v2394
        %v3454 = vpop.permute.xlu0 %3453
        %3455 = vset.pattern.permute.xlu0 0
        %3456 = vperm.xlu0 %3455, %v2411
        %v3457 = vpop.permute.xlu0 %3456
        %3458 = vset.pattern.permute.xlu0 0
        %3459 = vperm.xlu0 %3458, %v2428
        %v3460 = vpop.permute.xlu0 %3459
        %3461 = vset.pattern.permute.xlu0 0
        %3462 = vperm.xlu0 %3461, %v2445
        %v3463 = vpop.permute.xlu0 %3462
        %3464 = vset.pattern.permute.xlu0 0
        %3465 = vperm.xlu0 %3464, %v2462
        %v3466 = vpop.permute.xlu0 %3465
        %3467 = vset.pattern.permute.xlu0 0
        %3468 = vperm.xlu0 %3467, %v2479
        %v3469 = vpop.permute.xlu0 %3468
        %3470 = vset.pattern.permute.xlu0 0
        %3471 = vperm.xlu0 %3470, %v2496
        %v3472 = vpop.permute.xlu0 %3471
        %3473 = vset.pattern.permute.xlu0 0
        %3474 = vperm.xlu0 %3473, %v2513
        %v3475 = vpop.permute.xlu0 %3474
        %3476 = vset.pattern.permute.xlu0 0
        %3477 = vperm.xlu0 %3476, %v2530
        %v3478 = vpop.permute.xlu0 %3477
        %3479 = vset.pattern.permute.xlu0 0
        %3480 = vperm.xlu0 %3479, %v2547
        %v3481 = vpop.permute.xlu0 %3480
        %3482 = vset.pattern.permute.xlu0 0
        %3483 = vperm.xlu0 %3482, %v2564
        %v3484 = vpop.permute.xlu0 %3483
        %3485 = vset.pattern.permute.xlu0 0
        %3486 = vperm.xlu0 %3485, %v2581
        %v3487 = vpop.permute.xlu0 %3486
        %3488 = vset.pattern.permute.xlu0 0
        %3489 = vperm.xlu0 %3488, %v2598
        %v3490 = vpop.permute.xlu0 %3489
        %3491 = vset.pattern.permute.xlu0 0
        %3492 = vperm.xlu0 %3491, %v2615
        %v3493 = vpop.permute.xlu0 %3492
        %3494 = vset.pattern.permute.xlu0 0
        %3495 = vperm.xlu0 %3494, %v2632
        %v3496 = vpop.permute.xlu0 %3495
        %3497 = vset.pattern.permute.xlu0 0
        %3498 = vperm.xlu0 %3497, %v2649
        %v3499 = vpop.permute.xlu0 %3498
        %3500 = vset.pattern.permute.xlu0 0
        %3501 = vperm.xlu0 %3500, %v2666
        %v3502 = vpop.permute.xlu0 %3501
        %3503 = vset.pattern.permute.xlu0 0
        %3504 = vperm.xlu0 %3503, %v2683
        %v3505 = vpop.permute.xlu0 %3504
        %3506 = vset.pattern.permute.xlu0 0
        %3507 = vperm.xlu0 %3506, %v2700
        %v3508 = vpop.permute.xlu0 %3507
        %3509 = vset.pattern.permute.xlu0 0
        %3510 = vperm.xlu0 %3509, %v2717
        %v3511 = vpop.permute.xlu0 %3510
        %3512 = vset.pattern.permute.xlu0 0
        %3513 = vperm.xlu0 %3512, %v2734
        %v3514 = vpop.permute.xlu0 %3513
        %3515 = vset.pattern.permute.xlu0 0
        %3516 = vperm.xlu0 %3515, %v2751
        %v3517 = vpop.permute.xlu0 %3516
        %3518 = vset.pattern.permute.xlu0 0
        %3519 = vperm.xlu0 %3518, %v2768
        %v3520 = vpop.permute.xlu0 %3519
        %3521 = vset.pattern.permute.xlu0 0
        %3522 = vperm.xlu0 %3521, %v2785
        %v3523 = vpop.permute.xlu0 %3522
        %3524 = vset.pattern.permute.xlu0 0
        %3525 = vperm.xlu0 %3524, %v2802
        %v3526 = vpop.permute.xlu0 %3525
        %3527 = vset.pattern.permute.xlu0 0
        %3528 = vperm.xlu0 %3527, %v2819
        %v3529 = vpop.permute.xlu0 %3528
        %3530 = vset.pattern.permute.xlu0 0
        %3531 = vperm.xlu0 %3530, %v2836
        %v3532 = vpop.permute.xlu0 %3531
        %3533 = vset.pattern.permute.xlu0 0
        %3534 = vperm.xlu0 %3533, %v2853
        %v3535 = vpop.permute.xlu0 %3534
        %3536 = vset.pattern.permute.xlu0 0
        %3537 = vperm.xlu0 %3536, %v2870
        %v3538 = vpop.permute.xlu0 %3537
        %3539 = vset.pattern.permute.xlu0 0
        %3540 = vperm.xlu0 %3539, %v2887
        %v3541 = vpop.permute.xlu0 %3540
        %3542 = vset.pattern.permute.xlu0 0
        %3543 = vperm.xlu0 %3542, %v2904
        %v3544 = vpop.permute.xlu0 %3543
        %3545 = vset.pattern.permute.xlu0 0
        %3546 = vperm.xlu0 %3545, %v2921
        %v3547 = vpop.permute.xlu0 %3546
        %3548 = vset.pattern.permute.xlu0 0
        %3549 = vperm.xlu0 %3548, %v2938
        %v3550 = vpop.permute.xlu0 %3549
        %3551 = vset.pattern.permute.xlu0 0
        %3552 = vperm.xlu0 %3551, %v2955
        %v3553 = vpop.permute.xlu0 %3552
        %3554 = vset.pattern.permute.xlu0 0
        %3555 = vperm.xlu0 %3554, %v2972
        %v3556 = vpop.permute.xlu0 %3555
        %3557 = vset.pattern.permute.xlu0 0
        %3558 = vperm.xlu0 %3557, %v2989
        %v3559 = vpop.permute.xlu0 %3558
        %3560 = vset.pattern.permute.xlu0 0
        %3561 = vperm.xlu0 %3560, %v3006
        %v3562 = vpop.permute.xlu0 %3561
        %3563 = vset.pattern.permute.xlu0 0
        %3564 = vperm.xlu0 %3563, %v3023
        %v3565 = vpop.permute.xlu0 %3564
        %3566 = vset.pattern.permute.xlu0 0
        %3567 = vperm.xlu0 %3566, %v3040
        %v3568 = vpop.permute.xlu0 %3567
        %3569 = vset.pattern.permute.xlu0 0
        %3570 = vperm.xlu0 %3569, %v3057
        %v3571 = vpop.permute.xlu0 %3570
        %3572 = vset.pattern.permute.xlu0 0
        %3573 = vperm.xlu0 %3572, %v3074
        %v3574 = vpop.permute.xlu0 %3573
        %3575 = vset.pattern.permute.xlu0 0
        %3576 = vperm.xlu0 %3575, %v3091
        %v3577 = vpop.permute.xlu0 %3576
        %3578 = vset.pattern.permute.xlu0 0
        %3579 = vperm.xlu0 %3578, %v3108
        %v3580 = vpop.permute.xlu0 %3579
        %3581 = vset.pattern.permute.xlu0 0
        %3582 = vperm.xlu0 %3581, %v3125
        %v3583 = vpop.permute.xlu0 %3582
        %3584 = vset.pattern.permute.xlu0 0
        %3585 = vperm.xlu0 %3584, %v3142
        %v3586 = vpop.permute.xlu0 %3585
        %3587 = vset.pattern.permute.xlu0 0
        %3588 = vperm.xlu0 %3587, %v3159
        %v3589 = vpop.permute.xlu0 %3588
        %3590 = vset.pattern.permute.xlu0 0
        %3591 = vperm.xlu0 %3590, %v3176
        %v3592 = vpop.permute.xlu0 %3591
        %3593 = vset.pattern.permute.xlu0 0
        %3594 = vperm.xlu0 %3593, %v3193
        %v3595 = vpop.permute.xlu0 %3594
        %3596 = vset.pattern.permute.xlu0 0
        %3597 = vperm.xlu0 %3596, %v3210
        %v3598 = vpop.permute.xlu0 %3597
        %3599 = vset.pattern.permute.xlu0 0
        %3600 = vperm.xlu0 %3599, %v3227
        %v3601 = vpop.permute.xlu0 %3600
        %3602 = vset.pattern.permute.xlu0 0
        %3603 = vperm.xlu0 %3602, %v3244
        %v3604 = vpop.permute.xlu0 %3603
        %3605 = vset.pattern.permute.xlu0 0
        %3606 = vperm.xlu0 %3605, %v3261
        %v3607 = vpop.permute.xlu0 %3606
        %3608 = vset.pattern.permute.xlu0 0
        %3609 = vperm.xlu0 %3608, %v3278
        %v3610 = vpop.permute.xlu0 %3609
        %3611 = vset.pattern.permute.xlu0 0
        %3612 = vperm.xlu0 %3611, %v3295
        %v3613 = vpop.permute.xlu0 %3612
        %3614 = vset.pattern.permute.xlu0 0
        %3615 = vperm.xlu0 %3614, %v3312
        %v3616 = vpop.permute.xlu0 %3615
        %3617 = vset.pattern.permute.xlu0 0
        %3618 = vperm.xlu0 %3617, %v3329
        %v3619 = vpop.permute.xlu0 %3618
        %3620 = vset.pattern.permute.xlu0 0
        %3621 = vperm.xlu0 %3620, %v3346
        %v3622 = vpop.permute.xlu0 %3621
        %3623 = vset.pattern.permute.xlu0 0
        %3624 = vperm.xlu0 %3623, %v3363
        %v3625 = vpop.permute.xlu0 %3624
        %3626 = vset.pattern.permute.xlu0 0
        %3627 = vperm.xlu0 %3626, %v3380
        %v3628 = vpop.permute.xlu0 %3627
        %3629 = vset.pattern.permute.xlu0 0
        %3630 = vperm.xlu0 %3629, %v3397
        %v3631 = vpop.permute.xlu0 %3630
        %3632 = vset.pattern.permute.xlu0 0
        %3633 = vperm.xlu0 %3632, %v3414
        %v3634 = vpop.permute.xlu0 %3633
        %3635 = vset.pattern.permute.xlu0 0
        %3636 = vperm.xlu0 %3635, %v3431
        %v3637 = vpop.permute.xlu0 %3636
        %3638 = vset.pattern.permute.xlu0 0
        %3639 = vperm.xlu0 %3638, %v3448
        %v3640 = vpop.permute.xlu0 %3639
        %v3641 = vlaneseq
        %v3642 = vand.u32 %v3641, 127
        %v3643 = vlaneseq
        %v3644 = vshrl.u32 %v3643, 7
        %v3645 = vsub.s32 %v3642, %v3644
        %v3646 = vrot.slane %v3451, %v3645
        %v3647 = vadd.s32 %v3642, 4294967288
        %v3648 = vlaneseq
        %v3649 = vshrl.u32 %v3648, 7
        %v3650 = vsub.s32 %v3647, %v3649
        %v3651 = vrot.slane %v3454, %v3650
        %vm3652 = vcmask 130112
        %v3653 = vsel %vm3652, %v3651, %v3646
        %v3654 = vadd.s32 %v3642, 4294967280
        %v3655 = vlaneseq
        %v3656 = vshrl.u32 %v3655, 7
        %v3657 = vsub.s32 %v3654, %v3656
        %v3658 = vrot.slane %v3457, %v3657
        %vm3659 = vcmask 195712
        %v3660 = vsel %vm3659, %v3658, %v3653
        %v3661 = vadd.s32 %v3642, 4294967272
        %v3662 = vlaneseq
        %v3663 = vshrl.u32 %v3662, 7
        %v3664 = vsub.s32 %v3661, %v3663
        %v3665 = vrot.slane %v3460, %v3664
        %vm3666 = vcmask 261312
        %v3667 = vsel %vm3666, %v3665, %v3660
        %v3668 = vadd.s32 %v3642, 4294967264
        %v3669 = vlaneseq
        %v3670 = vshrl.u32 %v3669, 7
        %v3671 = vsub.s32 %v3668, %v3670
        %v3672 = vrot.slane %v3463, %v3671
        %vm3673 = vcmask 326912
        %v3674 = vsel %vm3673, %v3672, %v3667
        %v3675 = vadd.s32 %v3642, 4294967256
        %v3676 = vlaneseq
        %v3677 = vshrl.u32 %v3676, 7
        %v3678 = vsub.s32 %v3675, %v3677
        %v3679 = vrot.slane %v3466, %v3678
        %vm3680 = vcmask 392512
        %v3681 = vsel %vm3680, %v3679, %v3674
        %v3682 = vadd.s32 %v3642, 4294967248
        %v3683 = vlaneseq
        %v3684 = vshrl.u32 %v3683, 7
        %v3685 = vsub.s32 %v3682, %v3684
        %v3686 = vrot.slane %v3469, %v3685
        %vm3687 = vcmask 458112
        %v3688 = vsel %vm3687, %v3686, %v3681
        %v3689 = vadd.s32 %v3642, 4294967240
        %v3690 = vlaneseq
        %v3691 = vshrl.u32 %v3690, 7
        %v3692 = vsub.s32 %v3689, %v3691
        %v3693 = vrot.slane %v3472, %v3692
        %vm3694 = vcmask 523712
        %v3695 = vsel %vm3694, %v3693, %v3688
        %v3696 = vadd.s32 %v3642, 4294967232
        %v3697 = vlaneseq
        %v3698 = vshrl.u32 %v3697, 7
        %v3699 = vsub.s32 %v3696, %v3698
        %v3700 = vrot.slane %v3475, %v3699
        %vm3701 = vcmask 589312
        %v3702 = vsel %vm3701, %v3700, %v3695
        %v3703 = vadd.s32 %v3642, 4294967224
        %v3704 = vlaneseq
        %v3705 = vshrl.u32 %v3704, 7
        %v3706 = vsub.s32 %v3703, %v3705
        %v3707 = vrot.slane %v3478, %v3706
        %vm3708 = vcmask 654912
        %v3709 = vsel %vm3708, %v3707, %v3702
        %v3710 = vadd.s32 %v3642, 4294967216
        %v3711 = vlaneseq
        %v3712 = vshrl.u32 %v3711, 7
        %v3713 = vsub.s32 %v3710, %v3712
        %v3714 = vrot.slane %v3481, %v3713
        %vm3715 = vcmask 720512
        %v3716 = vsel %vm3715, %v3714, %v3709
        %v3717 = vadd.s32 %v3642, 4294967208
        %v3718 = vlaneseq
        %v3719 = vshrl.u32 %v3718, 7
        %v3720 = vsub.s32 %v3717, %v3719
        %v3721 = vrot.slane %v3484, %v3720
        %vm3722 = vcmask 786112
        %v3723 = vsel %vm3722, %v3721, %v3716
        %v3724 = vadd.s32 %v3642, 4294967200
        %v3725 = vlaneseq
        %v3726 = vshrl.u32 %v3725, 7
        %v3727 = vsub.s32 %v3724, %v3726
        %v3728 = vrot.slane %v3487, %v3727
        %vm3729 = vcmask 851712
        %v3730 = vsel %vm3729, %v3728, %v3723
        %v3731 = vadd.s32 %v3642, 4294967192
        %v3732 = vlaneseq
        %v3733 = vshrl.u32 %v3732, 7
        %v3734 = vsub.s32 %v3731, %v3733
        %v3735 = vrot.slane %v3490, %v3734
        %vm3736 = vcmask 917312
        %v3737 = vsel %vm3736, %v3735, %v3730
        %v3738 = vadd.s32 %v3642, 4294967184
        %v3739 = vlaneseq
        %v3740 = vshrl.u32 %v3739, 7
        %v3741 = vsub.s32 %v3738, %v3740
        %v3742 = vrot.slane %v3493, %v3741
        %vm3743 = vcmask 982912
        %v3744 = vsel %vm3743, %v3742, %v3737
        %v3745 = vadd.s32 %v3642, 4294967176
        %v3746 = vlaneseq
        %v3747 = vshrl.u32 %v3746, 7
        %v3748 = vsub.s32 %v3745, %v3747
        %v3749 = vrot.slane %v3496, %v3748
        %vm3750 = vcmask 1048512
        %v3751 = vsel %vm3750, %v3749, %v3744
        %v3752 = vlaneseq
        %v3753 = vshrl.u32 %v3752, 7
        %v3754 = vsub.s32 %v3642, %v3753
        %v3755 = vrot.slane %v3499, %v3754
        %v3756 = vlaneseq
        %v3757 = vshrl.u32 %v3756, 7
        %v3758 = vsub.s32 %v3647, %v3757
        %v3759 = vrot.slane %v3502, %v3758
        %v3760 = vsel %vm3652, %v3759, %v3755
        %v3761 = vlaneseq
        %v3762 = vshrl.u32 %v3761, 7
        %v3763 = vsub.s32 %v3654, %v3762
        %v3764 = vrot.slane %v3505, %v3763
        %v3765 = vsel %vm3659, %v3764, %v3760
        %v3766 = vlaneseq
        %v3767 = vshrl.u32 %v3766, 7
        %v3768 = vsub.s32 %v3661, %v3767
        %v3769 = vrot.slane %v3508, %v3768
        %v3770 = vsel %vm3666, %v3769, %v3765
        %v3771 = vlaneseq
        %v3772 = vshrl.u32 %v3771, 7
        %v3773 = vsub.s32 %v3668, %v3772
        %v3774 = vrot.slane %v3511, %v3773
        %v3775 = vsel %vm3673, %v3774, %v3770
        %v3776 = vlaneseq
        %v3777 = vshrl.u32 %v3776, 7
        %v3778 = vsub.s32 %v3675, %v3777
        %v3779 = vrot.slane %v3514, %v3778
        %v3780 = vsel %vm3680, %v3779, %v3775
        %v3781 = vlaneseq
        %v3782 = vshrl.u32 %v3781, 7
        %v3783 = vsub.s32 %v3682, %v3782
        %v3784 = vrot.slane %v3517, %v3783
        %v3785 = vsel %vm3687, %v3784, %v3780
        %v3786 = vlaneseq
        %v3787 = vshrl.u32 %v3786, 7
        %v3788 = vsub.s32 %v3689, %v3787
        %v3789 = vrot.slane %v3520, %v3788
        %v3790 = vsel %vm3694, %v3789, %v3785
        %v3791 = vlaneseq
        %v3792 = vshrl.u32 %v3791, 7
        %v3793 = vsub.s32 %v3696, %v3792
        %v3794 = vrot.slane %v3523, %v3793
        %v3795 = vsel %vm3701, %v3794, %v3790
        %v3796 = vlaneseq
        %v3797 = vshrl.u32 %v3796, 7
        %v3798 = vsub.s32 %v3703, %v3797
        %v3799 = vrot.slane %v3526, %v3798
        %v3800 = vsel %vm3708, %v3799, %v3795
        %v3801 = vlaneseq
        %v3802 = vshrl.u32 %v3801, 7
        %v3803 = vsub.s32 %v3710, %v3802
        %v3804 = vrot.slane %v3529, %v3803
        %v3805 = vsel %vm3715, %v3804, %v3800
        %v3806 = vlaneseq
        %v3807 = vshrl.u32 %v3806, 7
        %v3808 = vsub.s32 %v3717, %v3807
        %v3809 = vrot.slane %v3532, %v3808
        %v3810 = vsel %vm3722, %v3809, %v3805
        %v3811 = vlaneseq
        %v3812 = vshrl.u32 %v3811, 7
        %v3813 = vsub.s32 %v3724, %v3812
        %v3814 = vrot.slane %v3535, %v3813
        %v3815 = vsel %vm3729, %v3814, %v3810
        %v3816 = vlaneseq
        %v3817 = vshrl.u32 %v3816, 7
        %v3818 = vsub.s32 %v3731, %v3817
        %v3819 = vrot.slane %v3538, %v3818
        %v3820 = vsel %vm3736, %v3819, %v3815
        %v3821 = vlaneseq
        %v3822 = vshrl.u32 %v3821, 7
        %v3823 = vsub.s32 %v3738, %v3822
        %v3824 = vrot.slane %v3541, %v3823
        %v3825 = vsel %vm3743, %v3824, %v3820
        %v3826 = vlaneseq
        %v3827 = vshrl.u32 %v3826, 7
        %v3828 = vsub.s32 %v3745, %v3827
        %v3829 = vrot.slane %v3544, %v3828
        %v3830 = vsel %vm3750, %v3829, %v3825
        %v3831 = vlaneseq
        %v3832 = vshrl.u32 %v3831, 7
        %v3833 = vsub.s32 %v3642, %v3832
        %v3834 = vrot.slane %v3547, %v3833
        %v3835 = vlaneseq
        %v3836 = vshrl.u32 %v3835, 7
        %v3837 = vsub.s32 %v3647, %v3836
        %v3838 = vrot.slane %v3550, %v3837
        %v3839 = vsel %vm3652, %v3838, %v3834
        %v3840 = vlaneseq
        %v3841 = vshrl.u32 %v3840, 7
        %v3842 = vsub.s32 %v3654, %v3841
        %v3843 = vrot.slane %v3553, %v3842
        %v3844 = vsel %vm3659, %v3843, %v3839
        %v3845 = vlaneseq
        %v3846 = vshrl.u32 %v3845, 7
        %v3847 = vsub.s32 %v3661, %v3846
        %v3848 = vrot.slane %v3556, %v3847
        %v3849 = vsel %vm3666, %v3848, %v3844
        %v3850 = vlaneseq
        %v3851 = vshrl.u32 %v3850, 7
        %v3852 = vsub.s32 %v3668, %v3851
        %v3853 = vrot.slane %v3559, %v3852
        %v3854 = vsel %vm3673, %v3853, %v3849
        %v3855 = vlaneseq
        %v3856 = vshrl.u32 %v3855, 7
        %v3857 = vsub.s32 %v3675, %v3856
        %v3858 = vrot.slane %v3562, %v3857
        %v3859 = vsel %vm3680, %v3858, %v3854
        %v3860 = vlaneseq
        %v3861 = vshrl.u32 %v3860, 7
        %v3862 = vsub.s32 %v3682, %v3861
        %v3863 = vrot.slane %v3565, %v3862
        %v3864 = vsel %vm3687, %v3863, %v3859
        %v3865 = vlaneseq
        %v3866 = vshrl.u32 %v3865, 7
        %v3867 = vsub.s32 %v3689, %v3866
        %v3868 = vrot.slane %v3568, %v3867
        %v3869 = vsel %vm3694, %v3868, %v3864
        %v3870 = vlaneseq
        %v3871 = vshrl.u32 %v3870, 7
        %v3872 = vsub.s32 %v3696, %v3871
        %v3873 = vrot.slane %v3571, %v3872
        %v3874 = vsel %vm3701, %v3873, %v3869
        %v3875 = vlaneseq
        %v3876 = vshrl.u32 %v3875, 7
        %v3877 = vsub.s32 %v3703, %v3876
        %v3878 = vrot.slane %v3574, %v3877
        %v3879 = vsel %vm3708, %v3878, %v3874
        %v3880 = vlaneseq
        %v3881 = vshrl.u32 %v3880, 7
        %v3882 = vsub.s32 %v3710, %v3881
        %v3883 = vrot.slane %v3577, %v3882
        %v3884 = vsel %vm3715, %v3883, %v3879
        %v3885 = vlaneseq
        %v3886 = vshrl.u32 %v3885, 7
        %v3887 = vsub.s32 %v3717, %v3886
        %v3888 = vrot.slane %v3580, %v3887
        %v3889 = vsel %vm3722, %v3888, %v3884
        %v3890 = vlaneseq
        %v3891 = vshrl.u32 %v3890, 7
        %v3892 = vsub.s32 %v3724, %v3891
        %v3893 = vrot.slane %v3583, %v3892
        %v3894 = vsel %vm3729, %v3893, %v3889
        %v3895 = vlaneseq
        %v3896 = vshrl.u32 %v3895, 7
        %v3897 = vsub.s32 %v3731, %v3896
        %v3898 = vrot.slane %v3586, %v3897
        %v3899 = vsel %vm3736, %v3898, %v3894
        %v3900 = vlaneseq
        %v3901 = vshrl.u32 %v3900, 7
        %v3902 = vsub.s32 %v3738, %v3901
        %v3903 = vrot.slane %v3589, %v3902
        %v3904 = vsel %vm3743, %v3903, %v3899
        %v3905 = vlaneseq
        %v3906 = vshrl.u32 %v3905, 7
        %v3907 = vsub.s32 %v3745, %v3906
        %v3908 = vrot.slane %v3592, %v3907
        %v3909 = vsel %vm3750, %v3908, %v3904
        %v3910 = vlaneseq
        %v3911 = vshrl.u32 %v3910, 7
        %v3912 = vsub.s32 %v3642, %v3911
        %v3913 = vrot.slane %v3595, %v3912
        %v3914 = vlaneseq
        %v3915 = vshrl.u32 %v3914, 7
        %v3916 = vsub.s32 %v3647, %v3915
        %v3917 = vrot.slane %v3598, %v3916
        %v3918 = vsel %vm3652, %v3917, %v3913
        %v3919 = vlaneseq
        %v3920 = vshrl.u32 %v3919, 7
        %v3921 = vsub.s32 %v3654, %v3920
        %v3922 = vrot.slane %v3601, %v3921
        %v3923 = vsel %vm3659, %v3922, %v3918
        %v3924 = vlaneseq
        %v3925 = vshrl.u32 %v3924, 7
        %v3926 = vsub.s32 %v3661, %v3925
        %v3927 = vrot.slane %v3604, %v3926
        %v3928 = vsel %vm3666, %v3927, %v3923
        %v3929 = vlaneseq
        %v3930 = vshrl.u32 %v3929, 7
        %v3931 = vsub.s32 %v3668, %v3930
        %v3932 = vrot.slane %v3607, %v3931
        %v3933 = vsel %vm3673, %v3932, %v3928
        %v3934 = vlaneseq
        %v3935 = vshrl.u32 %v3934, 7
        %v3936 = vsub.s32 %v3675, %v3935
        %v3937 = vrot.slane %v3610, %v3936
        %v3938 = vsel %vm3680, %v3937, %v3933
        %v3939 = vlaneseq
        %v3940 = vshrl.u32 %v3939, 7
        %v3941 = vsub.s32 %v3682, %v3940
        %v3942 = vrot.slane %v3613, %v3941
        %v3943 = vsel %vm3687, %v3942, %v3938
        %v3944 = vlaneseq
        %v3945 = vshrl.u32 %v3944, 7
        %v3946 = vsub.s32 %v3689, %v3945
        %v3947 = vrot.slane %v3616, %v3946
        %v3948 = vsel %vm3694, %v3947, %v3943
        %v3949 = vlaneseq
        %v3950 = vshrl.u32 %v3949, 7
        %v3951 = vsub.s32 %v3696, %v3950
        %v3952 = vrot.slane %v3619, %v3951
        %v3953 = vsel %vm3701, %v3952, %v3948
        %v3954 = vlaneseq
        %v3955 = vshrl.u32 %v3954, 7
        %v3956 = vsub.s32 %v3703, %v3955
        %v3957 = vrot.slane %v3622, %v3956
        %v3958 = vsel %vm3708, %v3957, %v3953
        %v3959 = vlaneseq
        %v3960 = vshrl.u32 %v3959, 7
        %v3961 = vsub.s32 %v3710, %v3960
        %v3962 = vrot.slane %v3625, %v3961
        %v3963 = vsel %vm3715, %v3962, %v3958
        %v3964 = vlaneseq
        %v3965 = vshrl.u32 %v3964, 7
        %v3966 = vsub.s32 %v3717, %v3965
        %v3967 = vrot.slane %v3628, %v3966
        %v3968 = vsel %vm3722, %v3967, %v3963
        %v3969 = vlaneseq
        %v3970 = vshrl.u32 %v3969, 7
        %v3971 = vsub.s32 %v3724, %v3970
        %v3972 = vrot.slane %v3631, %v3971
        %v3973 = vsel %vm3729, %v3972, %v3968
        %v3974 = vlaneseq
        %v3975 = vshrl.u32 %v3974, 7
        %v3976 = vsub.s32 %v3731, %v3975
        %v3977 = vrot.slane %v3634, %v3976
        %v3978 = vsel %vm3736, %v3977, %v3973
        %v3979 = vlaneseq
        %v3980 = vshrl.u32 %v3979, 7
        %v3981 = vsub.s32 %v3738, %v3980
        %v3982 = vrot.slane %v3637, %v3981
        %v3983 = vsel %vm3743, %v3982, %v3978
        %v3984 = vlaneseq
        %v3985 = vshrl.u32 %v3984, 7
        %v3986 = vsub.s32 %v3745, %v3985
        %v3987 = vrot.slane %v3640, %v3986
        %v3988 = vsel %vm3750, %v3987, %v3983
        %vm3989 = vcmask 1041409
        %v3990 = vsel %vm3989, %v3909, %v3751
        %v3991 = vsel %vm3989, %v3988, %v3830
        %v3992 = vcombine.low %v3990, %v3991
        %v3994 = vunpack.c.l.s4 1983009808
        %v3995 = vunpack.c.0.s8 %v3994
        %v3996 = vlaneseq
        %v3997 = vshrl.u32 %v3996, 7
        %v3998 = vsub.s32 %v3995, %v3997
        %v3999 = vrot.slane %v3992, %v3998
        %v4001 = vadd.f32 %v312, %v3999
        %4002 = vst [vmem:[#allocation2] sm:$0xf] %v4001
        %p4003 = scmp.eq.s32.totalorder %s27, 1
        // Predicated region
        $region65: #{tpu_custom_call.1} parent=39 // pred_check
          %p4004 = pneg %p4003
        $region66: #{tpu_custom_call.1} parent=39 // pred_check_branch
          %4006 = sbr.rel (%p4004) target = $region68
        $region67: #{tpu_custom_call.1} parent=39 // pred_region
          %v4007 = vld [vmem:[#allocation2] sm:$0xf]
          %v4008 = vld [vmem:[#allocation6] sm:$0xff]
          %v4009 = vld [vmem:[#allocation6 + $0x8] sm:$0xff]
          %v4010 = vld [vmem:[#allocation6 + $0x10] sm:$0xff]
          %v4011 = vld [vmem:[#allocation6 + $0x18] sm:$0xff]
          %v4012 = vld [vmem:[#allocation6 + $0x20] sm:$0xff]
          %v4013 = vld [vmem:[#allocation6 + $0x28] sm:$0xff]
          %v4014 = vld [vmem:[#allocation6 + $0x30] sm:$0xff]
          %v4015 = vld [vmem:[#allocation6 + $0x38] sm:$0xff]
          %v4016 = vld [vmem:[#allocation6 + $0x40] sm:$0xff]
          %v4017 = vld [vmem:[#allocation6 + $0x48] sm:$0xff]
          %v4018 = vld [vmem:[#allocation6 + $0x50] sm:$0xff]
          %v4019 = vld [vmem:[#allocation6 + $0x58] sm:$0xff]
          %v4020 = vld [vmem:[#allocation6 + $0x60] sm:$0xff]
          %v4021 = vld [vmem:[#allocation6 + $0x68] sm:$0xff]
          %v4022 = vld [vmem:[#allocation6 + $0x70] sm:$0xff]
          %v4023 = vld [vmem:[#allocation6 + $0x78] sm:$0xff]
          %v4024 = vld [vmem:[#allocation6 + $0x80] sm:$0xff]
          %v4025 = vld [vmem:[#allocation6 + $0x88] sm:$0xff]
          %v4026 = vld [vmem:[#allocation6 + $0x90] sm:$0xff]
          %v4027 = vld [vmem:[#allocation6 + $0x98] sm:$0xff]
          %v4028 = vld [vmem:[#allocation6 + $0xa0] sm:$0xff]
          %v4029 = vld [vmem:[#allocation6 + $0xa8] sm:$0xff]
          %v4030 = vld [vmem:[#allocation6 + $0xb0] sm:$0xff]
          %v4031 = vld [vmem:[#allocation6 + $0xb8] sm:$0xff]
          %v4032 = vld [vmem:[#allocation6 + $0xc0] sm:$0xff]
          %v4033 = vld [vmem:[#allocation6 + $0xc8] sm:$0xff]
          %v4034 = vld [vmem:[#allocation6 + $0xd0] sm:$0xff]
          %v4035 = vld [vmem:[#allocation6 + $0xd8] sm:$0xff]
          %v4036 = vld [vmem:[#allocation6 + $0xe0] sm:$0xff]
          %v4037 = vld [vmem:[#allocation6 + $0xe8] sm:$0xff]
          %v4038 = vld [vmem:[#allocation6 + $0xf0] sm:$0xff]
          %v4039 = vld [vmem:[#allocation6 + $0xf8] sm:$0xff]
          %v4040 = vld [vmem:[#allocation6 + $0x100] sm:$0xff]
          %v4041 = vld [vmem:[#allocation6 + $0x108] sm:$0xff]
          %v4042 = vld [vmem:[#allocation6 + $0x110] sm:$0xff]
          %v4043 = vld [vmem:[#allocation6 + $0x118] sm:$0xff]
          %v4044 = vld [vmem:[#allocation6 + $0x120] sm:$0xff]
          %v4045 = vld [vmem:[#allocation6 + $0x128] sm:$0xff]
          %v4046 = vld [vmem:[#allocation6 + $0x130] sm:$0xff]
          %v4047 = vld [vmem:[#allocation6 + $0x138] sm:$0xff]
          %v4048 = vld [vmem:[#allocation6 + $0x140] sm:$0xff]
          %v4049 = vld [vmem:[#allocation6 + $0x148] sm:$0xff]
          %v4050 = vld [vmem:[#allocation6 + $0x150] sm:$0xff]
          %v4051 = vld [vmem:[#allocation6 + $0x158] sm:$0xff]
          %v4052 = vld [vmem:[#allocation6 + $0x160] sm:$0xff]
          %v4053 = vld [vmem:[#allocation6 + $0x168] sm:$0xff]
          %v4054 = vld [vmem:[#allocation6 + $0x170] sm:$0xff]
          %v4055 = vld [vmem:[#allocation6 + $0x178] sm:$0xff]
          %v4056 = vld [vmem:[#allocation6 + $0x180] sm:$0xff]
          %v4057 = vld [vmem:[#allocation6 + $0x188] sm:$0xff]
          %v4058 = vld [vmem:[#allocation6 + $0x190] sm:$0xff]
          %v4059 = vld [vmem:[#allocation6 + $0x198] sm:$0xff]
          %v4060 = vld [vmem:[#allocation6 + $0x1a0] sm:$0xff]
          %v4061 = vld [vmem:[#allocation6 + $0x1a8] sm:$0xff]
          %v4062 = vld [vmem:[#allocation6 + $0x1b0] sm:$0xff]
          %v4063 = vld [vmem:[#allocation6 + $0x1b8] sm:$0xff]
          %v4064 = vld [vmem:[#allocation6 + $0x1c0] sm:$0xff]
          %v4065 = vld [vmem:[#allocation6 + $0x1c8] sm:$0xff]
          %v4066 = vld [vmem:[#allocation6 + $0x1d0] sm:$0xff]
          %v4067 = vld [vmem:[#allocation6 + $0x1d8] sm:$0xff]
          %v4068 = vld [vmem:[#allocation6 + $0x1e0] sm:$0xff]
          %v4069 = vld [vmem:[#allocation6 + $0x1e8] sm:$0xff]
          %v4070 = vld [vmem:[#allocation6 + $0x1f0] sm:$0xff]
          %v4071 = vld [vmem:[#allocation6 + $0x1f8] sm:$0xff]
          %v4072 = vld [vmem:[#allocation6 + $0x200] sm:$0xff]
          %v4073 = vld [vmem:[#allocation6 + $0x208] sm:$0xff]
          %v4074 = vld [vmem:[#allocation6 + $0x210] sm:$0xff]
          %v4075 = vld [vmem:[#allocation6 + $0x218] sm:$0xff]
          %v4076 = vld [vmem:[#allocation6 + $0x220] sm:$0xff]
          %v4077 = vld [vmem:[#allocation6 + $0x228] sm:$0xff]
          %v4078 = vld [vmem:[#allocation6 + $0x230] sm:$0xff]
          %v4079 = vld [vmem:[#allocation6 + $0x238] sm:$0xff]
          %v4080 = vld [vmem:[#allocation6 + $0x240] sm:$0xff]
          %v4081 = vld [vmem:[#allocation6 + $0x248] sm:$0xff]
          %v4082 = vld [vmem:[#allocation6 + $0x250] sm:$0xff]
          %v4083 = vld [vmem:[#allocation6 + $0x258] sm:$0xff]
          %v4084 = vld [vmem:[#allocation6 + $0x260] sm:$0xff]
          %v4085 = vld [vmem:[#allocation6 + $0x268] sm:$0xff]
          %v4086 = vld [vmem:[#allocation6 + $0x270] sm:$0xff]
          %v4087 = vld [vmem:[#allocation6 + $0x278] sm:$0xff]
          %v4088 = vld [vmem:[#allocation6 + $0x280] sm:$0xff]
          %v4089 = vld [vmem:[#allocation6 + $0x288] sm:$0xff]
          %v4090 = vld [vmem:[#allocation6 + $0x290] sm:$0xff]
          %v4091 = vld [vmem:[#allocation6 + $0x298] sm:$0xff]
          %v4092 = vld [vmem:[#allocation6 + $0x2a0] sm:$0xff]
          %v4093 = vld [vmem:[#allocation6 + $0x2a8] sm:$0xff]
          %v4094 = vld [vmem:[#allocation6 + $0x2b0] sm:$0xff]
          %v4095 = vld [vmem:[#allocation6 + $0x2b8] sm:$0xff]
          %v4096 = vld [vmem:[#allocation6 + $0x2c0] sm:$0xff]
          %v4097 = vld [vmem:[#allocation6 + $0x2c8] sm:$0xff]
          %v4098 = vld [vmem:[#allocation6 + $0x2d0] sm:$0xff]
          %v4099 = vld [vmem:[#allocation6 + $0x2d8] sm:$0xff]
          %v4100 = vld [vmem:[#allocation6 + $0x2e0] sm:$0xff]
          %v4101 = vld [vmem:[#allocation6 + $0x2e8] sm:$0xff]
          %v4102 = vld [vmem:[#allocation6 + $0x2f0] sm:$0xff]
          %v4103 = vld [vmem:[#allocation6 + $0x2f8] sm:$0xff]
          %v4104 = vld [vmem:[#allocation6 + $0x300] sm:$0xff]
          %v4105 = vld [vmem:[#allocation6 + $0x308] sm:$0xff]
          %v4106 = vld [vmem:[#allocation6 + $0x310] sm:$0xff]
          %v4107 = vld [vmem:[#allocation6 + $0x318] sm:$0xff]
          %v4108 = vld [vmem:[#allocation6 + $0x320] sm:$0xff]
          %v4109 = vld [vmem:[#allocation6 + $0x328] sm:$0xff]
          %v4110 = vld [vmem:[#allocation6 + $0x330] sm:$0xff]
          %v4111 = vld [vmem:[#allocation6 + $0x338] sm:$0xff]
          %v4112 = vld [vmem:[#allocation6 + $0x340] sm:$0xff]
          %v4113 = vld [vmem:[#allocation6 + $0x348] sm:$0xff]
          %v4114 = vld [vmem:[#allocation6 + $0x350] sm:$0xff]
          %v4115 = vld [vmem:[#allocation6 + $0x358] sm:$0xff]
          %v4116 = vld [vmem:[#allocation6 + $0x360] sm:$0xff]
          %v4117 = vld [vmem:[#allocation6 + $0x368] sm:$0xff]
          %v4118 = vld [vmem:[#allocation6 + $0x370] sm:$0xff]
          %v4119 = vld [vmem:[#allocation6 + $0x378] sm:$0xff]
          %v4120 = vld [vmem:[#allocation6 + $0x380] sm:$0xff]
          %v4121 = vld [vmem:[#allocation6 + $0x388] sm:$0xff]
          %v4122 = vld [vmem:[#allocation6 + $0x390] sm:$0xff]
          %v4123 = vld [vmem:[#allocation6 + $0x398] sm:$0xff]
          %v4124 = vld [vmem:[#allocation6 + $0x3a0] sm:$0xff]
          %v4125 = vld [vmem:[#allocation6 + $0x3a8] sm:$0xff]
          %v4126 = vld [vmem:[#allocation6 + $0x3b0] sm:$0xff]
          %v4127 = vld [vmem:[#allocation6 + $0x3b8] sm:$0xff]
          %v4128 = vld [vmem:[#allocation6 + $0x3c0] sm:$0xff]
          %v4129 = vld [vmem:[#allocation6 + $0x3c8] sm:$0xff]
          %v4130 = vld [vmem:[#allocation6 + $0x3d0] sm:$0xff]
          %v4131 = vld [vmem:[#allocation6 + $0x3d8] sm:$0xff]
          %v4132 = vld [vmem:[#allocation6 + $0x3e0] sm:$0xff]
          %v4133 = vld [vmem:[#allocation6 + $0x3e8] sm:$0xff]
          %v4134 = vld [vmem:[#allocation6 + $0x3f0] sm:$0xff]
          %v4135 = vld [vmem:[#allocation6 + $0x3f8] sm:$0xff]
          %v4136 = vld [vmem:[#allocation6 + $0x400] sm:$0xff]
          %v4137 = vld [vmem:[#allocation6 + $0x408] sm:$0xff]
          %v4138 = vld [vmem:[#allocation6 + $0x410] sm:$0xff]
          %v4139 = vld [vmem:[#allocation6 + $0x418] sm:$0xff]
          %v4140 = vld [vmem:[#allocation6 + $0x420] sm:$0xff]
          %v4141 = vld [vmem:[#allocation6 + $0x428] sm:$0xff]
          %v4142 = vld [vmem:[#allocation6 + $0x430] sm:$0xff]
          %v4143 = vld [vmem:[#allocation6 + $0x438] sm:$0xff]
          %v4144 = vld [vmem:[#allocation6 + $0x440] sm:$0xff]
          %v4145 = vld [vmem:[#allocation6 + $0x448] sm:$0xff]
          %v4146 = vld [vmem:[#allocation6 + $0x450] sm:$0xff]
          %v4147 = vld [vmem:[#allocation6 + $0x458] sm:$0xff]
          %v4148 = vld [vmem:[#allocation6 + $0x460] sm:$0xff]
          %v4149 = vld [vmem:[#allocation6 + $0x468] sm:$0xff]
          %v4150 = vld [vmem:[#allocation6 + $0x470] sm:$0xff]
          %v4151 = vld [vmem:[#allocation6 + $0x478] sm:$0xff]
          %v4152 = vld [vmem:[#allocation6 + $0x480] sm:$0xff]
          %v4153 = vld [vmem:[#allocation6 + $0x488] sm:$0xff]
          %v4154 = vld [vmem:[#allocation6 + $0x490] sm:$0xff]
          %v4155 = vld [vmem:[#allocation6 + $0x498] sm:$0xff]
          %v4156 = vld [vmem:[#allocation6 + $0x4a0] sm:$0xff]
          %v4157 = vld [vmem:[#allocation6 + $0x4a8] sm:$0xff]
          %v4158 = vld [vmem:[#allocation6 + $0x4b0] sm:$0xff]
          %v4159 = vld [vmem:[#allocation6 + $0x4b8] sm:$0xff]
          %v4160 = vld [vmem:[#allocation6 + $0x4c0] sm:$0xff]
          %v4161 = vld [vmem:[#allocation6 + $0x4c8] sm:$0xff]
          %v4162 = vld [vmem:[#allocation6 + $0x4d0] sm:$0xff]
          %v4163 = vld [vmem:[#allocation6 + $0x4d8] sm:$0xff]
          %v4164 = vld [vmem:[#allocation6 + $0x4e0] sm:$0xff]
          %v4165 = vld [vmem:[#allocation6 + $0x4e8] sm:$0xff]
          %v4166 = vld [vmem:[#allocation6 + $0x4f0] sm:$0xff]
          %v4167 = vld [vmem:[#allocation6 + $0x4f8] sm:$0xff]
          %v4168 = vld [vmem:[#allocation6 + $0x500] sm:$0xff]
          %v4169 = vld [vmem:[#allocation6 + $0x508] sm:$0xff]
          %v4170 = vld [vmem:[#allocation6 + $0x510] sm:$0xff]
          %v4171 = vld [vmem:[#allocation6 + $0x518] sm:$0xff]
          %v4172 = vld [vmem:[#allocation6 + $0x520] sm:$0xff]
          %v4173 = vld [vmem:[#allocation6 + $0x528] sm:$0xff]
          %v4174 = vld [vmem:[#allocation6 + $0x530] sm:$0xff]
          %v4175 = vld [vmem:[#allocation6 + $0x538] sm:$0xff]
          %v4176 = vld [vmem:[#allocation6 + $0x540] sm:$0xff]
          %v4177 = vld [vmem:[#allocation6 + $0x548] sm:$0xff]
          %v4178 = vld [vmem:[#allocation6 + $0x550] sm:$0xff]
          %v4179 = vld [vmem:[#allocation6 + $0x558] sm:$0xff]
          %v4180 = vld [vmem:[#allocation6 + $0x560] sm:$0xff]
          %v4181 = vld [vmem:[#allocation6 + $0x568] sm:$0xff]
          %v4182 = vld [vmem:[#allocation6 + $0x570] sm:$0xff]
          %v4183 = vld [vmem:[#allocation6 + $0x578] sm:$0xff]
          %v4184 = vld [vmem:[#allocation6 + $0x580] sm:$0xff]
          %v4185 = vld [vmem:[#allocation6 + $0x588] sm:$0xff]
          %v4186 = vld [vmem:[#allocation6 + $0x590] sm:$0xff]
          %v4187 = vld [vmem:[#allocation6 + $0x598] sm:$0xff]
          %v4188 = vld [vmem:[#allocation6 + $0x5a0] sm:$0xff]
          %v4189 = vld [vmem:[#allocation6 + $0x5a8] sm:$0xff]
          %v4190 = vld [vmem:[#allocation6 + $0x5b0] sm:$0xff]
          %v4191 = vld [vmem:[#allocation6 + $0x5b8] sm:$0xff]
          %v4192 = vld [vmem:[#allocation6 + $0x5c0] sm:$0xff]
          %v4193 = vld [vmem:[#allocation6 + $0x5c8] sm:$0xff]
          %v4194 = vld [vmem:[#allocation6 + $0x5d0] sm:$0xff]
          %v4195 = vld [vmem:[#allocation6 + $0x5d8] sm:$0xff]
          %v4196 = vld [vmem:[#allocation6 + $0x5e0] sm:$0xff]
          %v4197 = vld [vmem:[#allocation6 + $0x5e8] sm:$0xff]
          %v4198 = vld [vmem:[#allocation6 + $0x5f0] sm:$0xff]
          %v4199 = vld [vmem:[#allocation6 + $0x5f8] sm:$0xff]
          %v4200 = vld [vmem:[#allocation6 + $0x600] sm:$0xff]
          %v4201 = vld [vmem:[#allocation6 + $0x608] sm:$0xff]
          %v4202 = vld [vmem:[#allocation6 + $0x610] sm:$0xff]
          %v4203 = vld [vmem:[#allocation6 + $0x618] sm:$0xff]
          %v4204 = vld [vmem:[#allocation6 + $0x620] sm:$0xff]
          %v4205 = vld [vmem:[#allocation6 + $0x628] sm:$0xff]
          %v4206 = vld [vmem:[#allocation6 + $0x630] sm:$0xff]
          %v4207 = vld [vmem:[#allocation6 + $0x638] sm:$0xff]
          %v4208 = vld [vmem:[#allocation6 + $0x640] sm:$0xff]
          %v4209 = vld [vmem:[#allocation6 + $0x648] sm:$0xff]
          %v4210 = vld [vmem:[#allocation6 + $0x650] sm:$0xff]
          %v4211 = vld [vmem:[#allocation6 + $0x658] sm:$0xff]
          %v4212 = vld [vmem:[#allocation6 + $0x660] sm:$0xff]
          %v4213 = vld [vmem:[#allocation6 + $0x668] sm:$0xff]
          %v4214 = vld [vmem:[#allocation6 + $0x670] sm:$0xff]
          %v4215 = vld [vmem:[#allocation6 + $0x678] sm:$0xff]
          %v4216 = vld [vmem:[#allocation6 + $0x680] sm:$0xff]
          %v4217 = vld [vmem:[#allocation6 + $0x688] sm:$0xff]
          %v4218 = vld [vmem:[#allocation6 + $0x690] sm:$0xff]
          %v4219 = vld [vmem:[#allocation6 + $0x698] sm:$0xff]
          %v4220 = vld [vmem:[#allocation6 + $0x6a0] sm:$0xff]
          %v4221 = vld [vmem:[#allocation6 + $0x6a8] sm:$0xff]
          %v4222 = vld [vmem:[#allocation6 + $0x6b0] sm:$0xff]
          %v4223 = vld [vmem:[#allocation6 + $0x6b8] sm:$0xff]
          %v4224 = vld [vmem:[#allocation6 + $0x6c0] sm:$0xff]
          %v4225 = vld [vmem:[#allocation6 + $0x6c8] sm:$0xff]
          %v4226 = vld [vmem:[#allocation6 + $0x6d0] sm:$0xff]
          %v4227 = vld [vmem:[#allocation6 + $0x6d8] sm:$0xff]
          %v4228 = vld [vmem:[#allocation6 + $0x6e0] sm:$0xff]
          %v4229 = vld [vmem:[#allocation6 + $0x6e8] sm:$0xff]
          %v4230 = vld [vmem:[#allocation6 + $0x6f0] sm:$0xff]
          %v4231 = vld [vmem:[#allocation6 + $0x6f8] sm:$0xff]
          %v4232 = vld [vmem:[#allocation6 + $0x700] sm:$0xff]
          %v4233 = vld [vmem:[#allocation6 + $0x708] sm:$0xff]
          %v4234 = vld [vmem:[#allocation6 + $0x710] sm:$0xff]
          %v4235 = vld [vmem:[#allocation6 + $0x718] sm:$0xff]
          %v4236 = vld [vmem:[#allocation6 + $0x720] sm:$0xff]
          %v4237 = vld [vmem:[#allocation6 + $0x728] sm:$0xff]
          %v4238 = vld [vmem:[#allocation6 + $0x730] sm:$0xff]
          %v4239 = vld [vmem:[#allocation6 + $0x738] sm:$0xff]
          %v4240 = vld [vmem:[#allocation6 + $0x740] sm:$0xff]
          %v4241 = vld [vmem:[#allocation6 + $0x748] sm:$0xff]
          %v4242 = vld [vmem:[#allocation6 + $0x750] sm:$0xff]
          %v4243 = vld [vmem:[#allocation6 + $0x758] sm:$0xff]
          %v4244 = vld [vmem:[#allocation6 + $0x760] sm:$0xff]
          %v4245 = vld [vmem:[#allocation6 + $0x768] sm:$0xff]
          %v4246 = vld [vmem:[#allocation6 + $0x770] sm:$0xff]
          %v4247 = vld [vmem:[#allocation6 + $0x778] sm:$0xff]
          %v4248 = vld [vmem:[#allocation6 + $0x780] sm:$0xff]
          %v4249 = vld [vmem:[#allocation6 + $0x788] sm:$0xff]
          %v4250 = vld [vmem:[#allocation6 + $0x790] sm:$0xff]
          %v4251 = vld [vmem:[#allocation6 + $0x798] sm:$0xff]
          %v4252 = vld [vmem:[#allocation6 + $0x7a0] sm:$0xff]
          %v4253 = vld [vmem:[#allocation6 + $0x7a8] sm:$0xff]
          %v4254 = vld [vmem:[#allocation6 + $0x7b0] sm:$0xff]
          %v4255 = vld [vmem:[#allocation6 + $0x7b8] sm:$0xff]
          %v4256 = vld [vmem:[#allocation6 + $0x7c0] sm:$0xff]
          %v4257 = vld [vmem:[#allocation6 + $0x7c8] sm:$0xff]
          %v4258 = vld [vmem:[#allocation6 + $0x7d0] sm:$0xff]
          %v4259 = vld [vmem:[#allocation6 + $0x7d8] sm:$0xff]
          %v4260 = vld [vmem:[#allocation6 + $0x7e0] sm:$0xff]
          %v4261 = vld [vmem:[#allocation6 + $0x7e8] sm:$0xff]
          %v4262 = vld [vmem:[#allocation6 + $0x7f0] sm:$0xff]
          %v4263 = vld [vmem:[#allocation6 + $0x7f8] sm:$0xff]
          %v4264 = vld [vmem:[#allocation6 + $0x800] sm:$0xff]
          %v4265 = vld [vmem:[#allocation6 + $0x808] sm:$0xff]
          %v4266 = vld [vmem:[#allocation6 + $0x810] sm:$0xff]
          %v4267 = vld [vmem:[#allocation6 + $0x818] sm:$0xff]
          %v4268 = vld [vmem:[#allocation6 + $0x820] sm:$0xff]
          %v4269 = vld [vmem:[#allocation6 + $0x828] sm:$0xff]
          %v4270 = vld [vmem:[#allocation6 + $0x830] sm:$0xff]
          %v4271 = vld [vmem:[#allocation6 + $0x838] sm:$0xff]
          %v4272 = vld [vmem:[#allocation6 + $0x840] sm:$0xff]
          %v4273 = vld [vmem:[#allocation6 + $0x848] sm:$0xff]
          %v4274 = vld [vmem:[#allocation6 + $0x850] sm:$0xff]
          %v4275 = vld [vmem:[#allocation6 + $0x858] sm:$0xff]
          %v4276 = vld [vmem:[#allocation6 + $0x860] sm:$0xff]
          %v4277 = vld [vmem:[#allocation6 + $0x868] sm:$0xff]
          %v4278 = vld [vmem:[#allocation6 + $0x870] sm:$0xff]
          %v4279 = vld [vmem:[#allocation6 + $0x878] sm:$0xff]
          %v4280 = vld [vmem:[#allocation6 + $0x880] sm:$0xff]
          %v4281 = vld [vmem:[#allocation6 + $0x888] sm:$0xff]
          %v4282 = vld [vmem:[#allocation6 + $0x890] sm:$0xff]
          %v4283 = vld [vmem:[#allocation6 + $0x898] sm:$0xff]
          %v4284 = vld [vmem:[#allocation6 + $0x8a0] sm:$0xff]
          %v4285 = vld [vmem:[#allocation6 + $0x8a8] sm:$0xff]
          %v4286 = vld [vmem:[#allocation6 + $0x8b0] sm:$0xff]
          %v4287 = vld [vmem:[#allocation6 + $0x8b8] sm:$0xff]
          %v4288 = vld [vmem:[#allocation6 + $0x8c0] sm:$0xff]
          %v4289 = vld [vmem:[#allocation6 + $0x8c8] sm:$0xff]
          %v4290 = vld [vmem:[#allocation6 + $0x8d0] sm:$0xff]
          %v4291 = vld [vmem:[#allocation6 + $0x8d8] sm:$0xff]
          %v4292 = vld [vmem:[#allocation6 + $0x8e0] sm:$0xff]
          %v4293 = vld [vmem:[#allocation6 + $0x8e8] sm:$0xff]
          %v4294 = vld [vmem:[#allocation6 + $0x8f0] sm:$0xff]
          %v4295 = vld [vmem:[#allocation6 + $0x8f8] sm:$0xff]
          %v4296 = vld [vmem:[#allocation6 + $0x900] sm:$0xff]
          %v4297 = vld [vmem:[#allocation6 + $0x908] sm:$0xff]
          %v4298 = vld [vmem:[#allocation6 + $0x910] sm:$0xff]
          %v4299 = vld [vmem:[#allocation6 + $0x918] sm:$0xff]
          %v4300 = vld [vmem:[#allocation6 + $0x920] sm:$0xff]
          %v4301 = vld [vmem:[#allocation6 + $0x928] sm:$0xff]
          %v4302 = vld [vmem:[#allocation6 + $0x930] sm:$0xff]
          %v4303 = vld [vmem:[#allocation6 + $0x938] sm:$0xff]
          %v4304 = vld [vmem:[#allocation6 + $0x940] sm:$0xff]
          %v4305 = vld [vmem:[#allocation6 + $0x948] sm:$0xff]
          %v4306 = vld [vmem:[#allocation6 + $0x950] sm:$0xff]
          %v4307 = vld [vmem:[#allocation6 + $0x958] sm:$0xff]
          %v4308 = vld [vmem:[#allocation6 + $0x960] sm:$0xff]
          %v4309 = vld [vmem:[#allocation6 + $0x968] sm:$0xff]
          %v4310 = vld [vmem:[#allocation6 + $0x970] sm:$0xff]
          %v4311 = vld [vmem:[#allocation6 + $0x978] sm:$0xff]
          %v4312 = vld [vmem:[#allocation6 + $0x980] sm:$0xff]
          %v4313 = vld [vmem:[#allocation6 + $0x988] sm:$0xff]
          %v4314 = vld [vmem:[#allocation6 + $0x990] sm:$0xff]
          %v4315 = vld [vmem:[#allocation6 + $0x998] sm:$0xff]
          %v4316 = vld [vmem:[#allocation6 + $0x9a0] sm:$0xff]
          %v4317 = vld [vmem:[#allocation6 + $0x9a8] sm:$0xff]
          %v4318 = vld [vmem:[#allocation6 + $0x9b0] sm:$0xff]
          %v4319 = vld [vmem:[#allocation6 + $0x9b8] sm:$0xff]
          %v4320 = vld [vmem:[#allocation6 + $0x9c0] sm:$0xff]
          %v4321 = vld [vmem:[#allocation6 + $0x9c8] sm:$0xff]
          %v4322 = vld [vmem:[#allocation6 + $0x9d0] sm:$0xff]
          %v4323 = vld [vmem:[#allocation6 + $0x9d8] sm:$0xff]
          %v4324 = vld [vmem:[#allocation6 + $0x9e0] sm:$0xff]
          %v4325 = vld [vmem:[#allocation6 + $0x9e8] sm:$0xff]
          %v4326 = vld [vmem:[#allocation6 + $0x9f0] sm:$0xff]
          %v4327 = vld [vmem:[#allocation6 + $0x9f8] sm:$0xff]
          %v4328 = vld [vmem:[#allocation6 + $0xa00] sm:$0xff]
          %v4329 = vld [vmem:[#allocation6 + $0xa08] sm:$0xff]
          %v4330 = vld [vmem:[#allocation6 + $0xa10] sm:$0xff]
          %v4331 = vld [vmem:[#allocation6 + $0xa18] sm:$0xff]
          %v4332 = vld [vmem:[#allocation6 + $0xa20] sm:$0xff]
          %v4333 = vld [vmem:[#allocation6 + $0xa28] sm:$0xff]
          %v4334 = vld [vmem:[#allocation6 + $0xa30] sm:$0xff]
          %v4335 = vld [vmem:[#allocation6 + $0xa38] sm:$0xff]
          %v4336 = vld [vmem:[#allocation6 + $0xa40] sm:$0xff]
          %v4337 = vld [vmem:[#allocation6 + $0xa48] sm:$0xff]
          %v4338 = vld [vmem:[#allocation6 + $0xa50] sm:$0xff]
          %v4339 = vld [vmem:[#allocation6 + $0xa58] sm:$0xff]
          %v4340 = vld [vmem:[#allocation6 + $0xa60] sm:$0xff]
          %v4341 = vld [vmem:[#allocation6 + $0xa68] sm:$0xff]
          %v4342 = vld [vmem:[#allocation6 + $0xa70] sm:$0xff]
          %v4343 = vld [vmem:[#allocation6 + $0xa78] sm:$0xff]
          %v4344 = vld [vmem:[#allocation6 + $0xa80] sm:$0xff]
          %v4345 = vld [vmem:[#allocation6 + $0xa88] sm:$0xff]
          %v4346 = vld [vmem:[#allocation6 + $0xa90] sm:$0xff]
          %v4347 = vld [vmem:[#allocation6 + $0xa98] sm:$0xff]
          %v4348 = vld [vmem:[#allocation6 + $0xaa0] sm:$0xff]
          %v4349 = vld [vmem:[#allocation6 + $0xaa8] sm:$0xff]
          %v4350 = vld [vmem:[#allocation6 + $0xab0] sm:$0xff]
          %v4351 = vld [vmem:[#allocation6 + $0xab8] sm:$0xff]
          %v4352 = vld [vmem:[#allocation6 + $0xac0] sm:$0xff]
          %v4353 = vld [vmem:[#allocation6 + $0xac8] sm:$0xff]
          %v4354 = vld [vmem:[#allocation6 + $0xad0] sm:$0xff]
          %v4355 = vld [vmem:[#allocation6 + $0xad8] sm:$0xff]
          %v4356 = vld [vmem:[#allocation6 + $0xae0] sm:$0xff]
          %v4357 = vld [vmem:[#allocation6 + $0xae8] sm:$0xff]
          %v4358 = vld [vmem:[#allocation6 + $0xaf0] sm:$0xff]
          %v4359 = vld [vmem:[#allocation6 + $0xaf8] sm:$0xff]
          %v4360 = vld [vmem:[#allocation6 + $0xb00] sm:$0xff]
          %v4361 = vld [vmem:[#allocation6 + $0xb08] sm:$0xff]
          %v4362 = vld [vmem:[#allocation6 + $0xb10] sm:$0xff]
          %v4363 = vld [vmem:[#allocation6 + $0xb18] sm:$0xff]
          %v4364 = vld [vmem:[#allocation6 + $0xb20] sm:$0xff]
          %v4365 = vld [vmem:[#allocation6 + $0xb28] sm:$0xff]
          %v4366 = vld [vmem:[#allocation6 + $0xb30] sm:$0xff]
          %v4367 = vld [vmem:[#allocation6 + $0xb38] sm:$0xff]
          %v4368 = vld [vmem:[#allocation6 + $0xb40] sm:$0xff]
          %v4369 = vld [vmem:[#allocation6 + $0xb48] sm:$0xff]
          %v4370 = vld [vmem:[#allocation6 + $0xb50] sm:$0xff]
          %v4371 = vld [vmem:[#allocation6 + $0xb58] sm:$0xff]
          %v4372 = vld [vmem:[#allocation6 + $0xb60] sm:$0xff]
          %v4373 = vld [vmem:[#allocation6 + $0xb68] sm:$0xff]
          %v4374 = vld [vmem:[#allocation6 + $0xb70] sm:$0xff]
          %v4375 = vld [vmem:[#allocation6 + $0xb78] sm:$0xff]
          %v4376 = vld [vmem:[#allocation6 + $0xb80] sm:$0xff]
          %v4377 = vld [vmem:[#allocation6 + $0xb88] sm:$0xff]
          %v4378 = vld [vmem:[#allocation6 + $0xb90] sm:$0xff]
          %v4379 = vld [vmem:[#allocation6 + $0xb98] sm:$0xff]
          %v4380 = vld [vmem:[#allocation6 + $0xba0] sm:$0xff]
          %v4381 = vld [vmem:[#allocation6 + $0xba8] sm:$0xff]
          %v4382 = vld [vmem:[#allocation6 + $0xbb0] sm:$0xff]
          %v4383 = vld [vmem:[#allocation6 + $0xbb8] sm:$0xff]
          %v4384 = vld [vmem:[#allocation6 + $0xbc0] sm:$0xff]
          %v4385 = vld [vmem:[#allocation6 + $0xbc8] sm:$0xff]
          %v4386 = vld [vmem:[#allocation6 + $0xbd0] sm:$0xff]
          %v4387 = vld [vmem:[#allocation6 + $0xbd8] sm:$0xff]
          %v4388 = vld [vmem:[#allocation6 + $0xbe0] sm:$0xff]
          %v4389 = vld [vmem:[#allocation6 + $0xbe8] sm:$0xff]
          %v4390 = vld [vmem:[#allocation6 + $0xbf0] sm:$0xff]
          %v4391 = vld [vmem:[#allocation6 + $0xbf8] sm:$0xff]
          %v4392 = vld [vmem:[#allocation6 + $0xc00] sm:$0xff]
          %v4393 = vld [vmem:[#allocation6 + $0xc08] sm:$0xff]
          %v4394 = vld [vmem:[#allocation6 + $0xc10] sm:$0xff]
          %v4395 = vld [vmem:[#allocation6 + $0xc18] sm:$0xff]
          %v4396 = vld [vmem:[#allocation6 + $0xc20] sm:$0xff]
          %v4397 = vld [vmem:[#allocation6 + $0xc28] sm:$0xff]
          %v4398 = vld [vmem:[#allocation6 + $0xc30] sm:$0xff]
          %v4399 = vld [vmem:[#allocation6 + $0xc38] sm:$0xff]
          %v4400 = vld [vmem:[#allocation6 + $0xc40] sm:$0xff]
          %v4401 = vld [vmem:[#allocation6 + $0xc48] sm:$0xff]
          %v4402 = vld [vmem:[#allocation6 + $0xc50] sm:$0xff]
          %v4403 = vld [vmem:[#allocation6 + $0xc58] sm:$0xff]
          %v4404 = vld [vmem:[#allocation6 + $0xc60] sm:$0xff]
          %v4405 = vld [vmem:[#allocation6 + $0xc68] sm:$0xff]
          %v4406 = vld [vmem:[#allocation6 + $0xc70] sm:$0xff]
          %v4407 = vld [vmem:[#allocation6 + $0xc78] sm:$0xff]
          %v4408 = vld [vmem:[#allocation6 + $0xc80] sm:$0xff]
          %v4409 = vld [vmem:[#allocation6 + $0xc88] sm:$0xff]
          %v4410 = vld [vmem:[#allocation6 + $0xc90] sm:$0xff]
          %v4411 = vld [vmem:[#allocation6 + $0xc98] sm:$0xff]
          %v4412 = vld [vmem:[#allocation6 + $0xca0] sm:$0xff]
          %v4413 = vld [vmem:[#allocation6 + $0xca8] sm:$0xff]
          %v4414 = vld [vmem:[#allocation6 + $0xcb0] sm:$0xff]
          %v4415 = vld [vmem:[#allocation6 + $0xcb8] sm:$0xff]
          %v4416 = vld [vmem:[#allocation6 + $0xcc0] sm:$0xff]
          %v4417 = vld [vmem:[#allocation6 + $0xcc8] sm:$0xff]
          %v4418 = vld [vmem:[#allocation6 + $0xcd0] sm:$0xff]
          %v4419 = vld [vmem:[#allocation6 + $0xcd8] sm:$0xff]
          %v4420 = vld [vmem:[#allocation6 + $0xce0] sm:$0xff]
          %v4421 = vld [vmem:[#allocation6 + $0xce8] sm:$0xff]
          %v4422 = vld [vmem:[#allocation6 + $0xcf0] sm:$0xff]
          %v4423 = vld [vmem:[#allocation6 + $0xcf8] sm:$0xff]
          %v4424 = vld [vmem:[#allocation6 + $0xd00] sm:$0xff]
          %v4425 = vld [vmem:[#allocation6 + $0xd08] sm:$0xff]
          %v4426 = vld [vmem:[#allocation6 + $0xd10] sm:$0xff]
          %v4427 = vld [vmem:[#allocation6 + $0xd18] sm:$0xff]
          %v4428 = vld [vmem:[#allocation6 + $0xd20] sm:$0xff]
          %v4429 = vld [vmem:[#allocation6 + $0xd28] sm:$0xff]
          %v4430 = vld [vmem:[#allocation6 + $0xd30] sm:$0xff]
          %v4431 = vld [vmem:[#allocation6 + $0xd38] sm:$0xff]
          %v4432 = vld [vmem:[#allocation6 + $0xd40] sm:$0xff]
          %v4433 = vld [vmem:[#allocation6 + $0xd48] sm:$0xff]
          %v4434 = vld [vmem:[#allocation6 + $0xd50] sm:$0xff]
          %v4435 = vld [vmem:[#allocation6 + $0xd58] sm:$0xff]
          %v4436 = vld [vmem:[#allocation6 + $0xd60] sm:$0xff]
          %v4437 = vld [vmem:[#allocation6 + $0xd68] sm:$0xff]
          %v4438 = vld [vmem:[#allocation6 + $0xd70] sm:$0xff]
          %v4439 = vld [vmem:[#allocation6 + $0xd78] sm:$0xff]
          %v4440 = vld [vmem:[#allocation6 + $0xd80] sm:$0xff]
          %v4441 = vld [vmem:[#allocation6 + $0xd88] sm:$0xff]
          %v4442 = vld [vmem:[#allocation6 + $0xd90] sm:$0xff]
          %v4443 = vld [vmem:[#allocation6 + $0xd98] sm:$0xff]
          %v4444 = vld [vmem:[#allocation6 + $0xda0] sm:$0xff]
          %v4445 = vld [vmem:[#allocation6 + $0xda8] sm:$0xff]
          %v4446 = vld [vmem:[#allocation6 + $0xdb0] sm:$0xff]
          %v4447 = vld [vmem:[#allocation6 + $0xdb8] sm:$0xff]
          %v4448 = vld [vmem:[#allocation6 + $0xdc0] sm:$0xff]
          %v4449 = vld [vmem:[#allocation6 + $0xdc8] sm:$0xff]
          %v4450 = vld [vmem:[#allocation6 + $0xdd0] sm:$0xff]
          %v4451 = vld [vmem:[#allocation6 + $0xdd8] sm:$0xff]
          %v4452 = vld [vmem:[#allocation6 + $0xde0] sm:$0xff]
          %v4453 = vld [vmem:[#allocation6 + $0xde8] sm:$0xff]
          %v4454 = vld [vmem:[#allocation6 + $0xdf0] sm:$0xff]
          %v4455 = vld [vmem:[#allocation6 + $0xdf8] sm:$0xff]
          %v4456 = vld [vmem:[#allocation6 + $0xe00] sm:$0xff]
          %v4457 = vld [vmem:[#allocation6 + $0xe08] sm:$0xff]
          %v4458 = vld [vmem:[#allocation6 + $0xe10] sm:$0xff]
          %v4459 = vld [vmem:[#allocation6 + $0xe18] sm:$0xff]
          %v4460 = vld [vmem:[#allocation6 + $0xe20] sm:$0xff]
          %v4461 = vld [vmem:[#allocation6 + $0xe28] sm:$0xff]
          %v4462 = vld [vmem:[#allocation6 + $0xe30] sm:$0xff]
          %v4463 = vld [vmem:[#allocation6 + $0xe38] sm:$0xff]
          %v4464 = vld [vmem:[#allocation6 + $0xe40] sm:$0xff]
          %v4465 = vld [vmem:[#allocation6 + $0xe48] sm:$0xff]
          %v4466 = vld [vmem:[#allocation6 + $0xe50] sm:$0xff]
          %v4467 = vld [vmem:[#allocation6 + $0xe58] sm:$0xff]
          %v4468 = vld [vmem:[#allocation6 + $0xe60] sm:$0xff]
          %v4469 = vld [vmem:[#allocation6 + $0xe68] sm:$0xff]
          %v4470 = vld [vmem:[#allocation6 + $0xe70] sm:$0xff]
          %v4471 = vld [vmem:[#allocation6 + $0xe78] sm:$0xff]
          %v4472 = vld [vmem:[#allocation6 + $0xe80] sm:$0xff]
          %v4473 = vld [vmem:[#allocation6 + $0xe88] sm:$0xff]
          %v4474 = vld [vmem:[#allocation6 + $0xe90] sm:$0xff]
          %v4475 = vld [vmem:[#allocation6 + $0xe98] sm:$0xff]
          %v4476 = vld [vmem:[#allocation6 + $0xea0] sm:$0xff]
          %v4477 = vld [vmem:[#allocation6 + $0xea8] sm:$0xff]
          %v4478 = vld [vmem:[#allocation6 + $0xeb0] sm:$0xff]
          %v4479 = vld [vmem:[#allocation6 + $0xeb8] sm:$0xff]
          %v4480 = vld [vmem:[#allocation6 + $0xec0] sm:$0xff]
          %v4481 = vld [vmem:[#allocation6 + $0xec8] sm:$0xff]
          %v4482 = vld [vmem:[#allocation6 + $0xed0] sm:$0xff]
          %v4483 = vld [vmem:[#allocation6 + $0xed8] sm:$0xff]
          %v4484 = vld [vmem:[#allocation6 + $0xee0] sm:$0xff]
          %v4485 = vld [vmem:[#allocation6 + $0xee8] sm:$0xff]
          %v4486 = vld [vmem:[#allocation6 + $0xef0] sm:$0xff]
          %v4487 = vld [vmem:[#allocation6 + $0xef8] sm:$0xff]
          %v4488 = vld [vmem:[#allocation6 + $0xf00] sm:$0xff]
          %v4489 = vld [vmem:[#allocation6 + $0xf08] sm:$0xff]
          %v4490 = vld [vmem:[#allocation6 + $0xf10] sm:$0xff]
          %v4491 = vld [vmem:[#allocation6 + $0xf18] sm:$0xff]
          %v4492 = vld [vmem:[#allocation6 + $0xf20] sm:$0xff]
          %v4493 = vld [vmem:[#allocation6 + $0xf28] sm:$0xff]
          %v4494 = vld [vmem:[#allocation6 + $0xf30] sm:$0xff]
          %v4495 = vld [vmem:[#allocation6 + $0xf38] sm:$0xff]
          %v4496 = vld [vmem:[#allocation6 + $0xf40] sm:$0xff]
          %v4497 = vld [vmem:[#allocation6 + $0xf48] sm:$0xff]
          %v4498 = vld [vmem:[#allocation6 + $0xf50] sm:$0xff]
          %v4499 = vld [vmem:[#allocation6 + $0xf58] sm:$0xff]
          %v4500 = vld [vmem:[#allocation6 + $0xf60] sm:$0xff]
          %v4501 = vld [vmem:[#allocation6 + $0xf68] sm:$0xff]
          %v4502 = vld [vmem:[#allocation6 + $0xf70] sm:$0xff]
          %v4503 = vld [vmem:[#allocation6 + $0xf78] sm:$0xff]
          %v4504 = vld [vmem:[#allocation6 + $0xf80] sm:$0xff]
          %v4505 = vld [vmem:[#allocation6 + $0xf88] sm:$0xff]
          %v4506 = vld [vmem:[#allocation6 + $0xf90] sm:$0xff]
          %v4507 = vld [vmem:[#allocation6 + $0xf98] sm:$0xff]
          %v4508 = vld [vmem:[#allocation6 + $0xfa0] sm:$0xff]
          %v4509 = vld [vmem:[#allocation6 + $0xfa8] sm:$0xff]
          %v4510 = vld [vmem:[#allocation6 + $0xfb0] sm:$0xff]
          %v4511 = vld [vmem:[#allocation6 + $0xfb8] sm:$0xff]
          %v4512 = vld [vmem:[#allocation6 + $0xfc0] sm:$0xff]
          %v4513 = vld [vmem:[#allocation6 + $0xfc8] sm:$0xff]
          %v4514 = vld [vmem:[#allocation6 + $0xfd0] sm:$0xff]
          %v4515 = vld [vmem:[#allocation6 + $0xfd8] sm:$0xff]
          %v4516 = vld [vmem:[#allocation6 + $0xfe0] sm:$0xff]
          %v4517 = vld [vmem:[#allocation6 + $0xfe8] sm:$0xff]
          %v4518 = vld [vmem:[#allocation6 + $0xff0] sm:$0xff]
          %v4519 = vld [vmem:[#allocation6 + $0xff8] sm:$0xff]
          %v4520 = vld [vmem:[#allocation8] sm:$0xff]
          %v4521 = vld [vmem:[#allocation8 + $0x8] sm:$0xff]
          %v4524 = vlaneseq
          %v4525 = vshrl.u32 %v4524, 7
          %v4526 = vsub.s32 0, %v4525
          %v4527 = vrot.slane %v4520, %v4526
          %v4528 = vlaneseq
          %v4529 = vshrl.u32 %v4528, 7
          %v4530 = vsub.s32 1, %v4529
          %v4531 = vrot.slane %v4520, %v4530
          %v4532 = vlaneseq
          %v4533 = vshrl.u32 %v4532, 7
          %v4534 = vsub.s32 2, %v4533
          %v4535 = vrot.slane %v4520, %v4534
          %v4536 = vlaneseq
          %v4537 = vshrl.u32 %v4536, 7
          %v4538 = vsub.s32 3, %v4537
          %v4539 = vrot.slane %v4520, %v4538
          %v4540 = vlaneseq
          %v4541 = vshrl.u32 %v4540, 7
          %v4542 = vsub.s32 4, %v4541
          %v4543 = vrot.slane %v4520, %v4542
          %v4544 = vlaneseq
          %v4545 = vshrl.u32 %v4544, 7
          %v4546 = vsub.s32 5, %v4545
          %v4547 = vrot.slane %v4520, %v4546
          %v4548 = vlaneseq
          %v4549 = vshrl.u32 %v4548, 7
          %v4550 = vsub.s32 6, %v4549
          %v4551 = vrot.slane %v4520, %v4550
          %v4552 = vlaneseq
          %v4553 = vshrl.u32 %v4552, 7
          %v4554 = vsub.s32 7, %v4553
          %v4555 = vrot.slane %v4520, %v4554
          %v4556 = vlaneseq
          %v4557 = vshrl.u32 %v4556, 7
          %v4558 = vsub.s32 0, %v4557
          %v4559 = vrot.slane %v4521, %v4558
          %v4560 = vlaneseq
          %v4561 = vshrl.u32 %v4560, 7
          %v4562 = vsub.s32 1, %v4561
          %v4563 = vrot.slane %v4521, %v4562
          %v4564 = vlaneseq
          %v4565 = vshrl.u32 %v4564, 7
          %v4566 = vsub.s32 2, %v4565
          %v4567 = vrot.slane %v4521, %v4566
          %v4568 = vlaneseq
          %v4569 = vshrl.u32 %v4568, 7
          %v4570 = vsub.s32 3, %v4569
          %v4571 = vrot.slane %v4521, %v4570
          %v4572 = vlaneseq
          %v4573 = vshrl.u32 %v4572, 7
          %v4574 = vsub.s32 4, %v4573
          %v4575 = vrot.slane %v4521, %v4574
          %v4576 = vlaneseq
          %v4577 = vshrl.u32 %v4576, 7
          %v4578 = vsub.s32 5, %v4577
          %v4579 = vrot.slane %v4521, %v4578
          %v4580 = vlaneseq
          %v4581 = vshrl.u32 %v4580, 7
          %v4582 = vsub.s32 6, %v4581
          %v4583 = vrot.slane %v4521, %v4582
          %v4584 = vlaneseq
          %v4585 = vshrl.u32 %v4584, 7
          %v4586 = vsub.s32 7, %v4585
          %v4587 = vrot.slane %v4521, %v4586
          %v4606 = vunpack.c.l.s4 1983009808
          %v4607 = vunpack.c.0.s8 %v4606
          %v4608 = vlaneseq
          %v4609 = vshrl.u32 %v4608, 7
          %v4610 = vsub.s32 %v4607, %v4609
          %v4611 = vrot.slane %v4007, %v4610
          %v4612 = vcombine.high %v4611, %v4611
          %4615 = vmatprep.subr.mxu0 %v4249
          %4616 = vmatpush1.msra.mxu0 %v4248
          %4617 = vmatprep.subr.mxu0 %v4233
          %4618 = vmatpush1.msra.mxu0 %v4232
          %4619 = vmatprep.subr.mxu0 %v4217
          %4620 = vmatpush1.msra.mxu0 %v4216
          %4621 = vmatprep.subr.mxu0 %v4201
          %4622 = vmatpush1.msra.mxu0 %v4200
          %4623 = vmatprep.subr.mxu0 %v4185
          %4624 = vmatpush1.msra.mxu0 %v4184
          %4625 = vmatprep.subr.mxu0 %v4169
          %4626 = vmatpush1.msra.mxu0 %v4168
          %4627 = vmatprep.subr.mxu0 %v4153
          %4628 = vmatpush1.msra.mxu0 %v4152
          %4629 = vmatprep.subr.mxu0 %v4137
          %4630 = vmatpush1.msra.mxu0 %v4136
          %4631 = vmatprep.subr.mxu0 %v4121
          %4632 = vmatpush1.msra.mxu0 %v4120
          %4633 = vmatprep.subr.mxu0 %v4105
          %4634 = vmatpush1.msra.mxu0 %v4104
          %4635 = vmatprep.subr.mxu0 %v4089
          %4636 = vmatpush1.msra.mxu0 %v4088
          %4637 = vmatprep.subr.mxu0 %v4073
          %4638 = vmatpush1.msra.mxu0 %v4072
          %4639 = vmatprep.subr.mxu0 %v4057
          %4640 = vmatpush1.msra.mxu0 %v4056
          %4641 = vmatprep.subr.mxu0 %v4041
          %4642 = vmatpush1.msra.mxu0 %v4040
          %4643 = vmatprep.subr.mxu0 %v4025
          %4644 = vmatpush1.msra.mxu0 %v4024
          %4645 = vmatprep.subr.mxu0 %v4009
          %4646 = vmatpush1.msra.mxu0 %v4008
          %4647 = vmatprep.subr.mxu0 %v4505
          %4648 = vmatpush2.msra.mxu0 %v4504
          %4649 = vmatprep.subr.mxu0 %v4489
          %4650 = vmatpush2.msra.mxu0 %v4488
          %4651 = vmatprep.subr.mxu0 %v4473
          %4652 = vmatpush2.msra.mxu0 %v4472
          %4653 = vmatprep.subr.mxu0 %v4457
          %4654 = vmatpush2.msra.mxu0 %v4456
          %4655 = vmatprep.subr.mxu0 %v4441
          %4656 = vmatpush2.msra.mxu0 %v4440
          %4657 = vmatprep.subr.mxu0 %v4425
          %4658 = vmatpush2.msra.mxu0 %v4424
          %4659 = vmatprep.subr.mxu0 %v4409
          %4660 = vmatpush2.msra.mxu0 %v4408
          %4661 = vmatprep.subr.mxu0 %v4393
          %4662 = vmatpush2.msra.mxu0 %v4392
          %4663 = vmatprep.subr.mxu0 %v4377
          %4664 = vmatpush2.msra.mxu0 %v4376
          %4665 = vmatprep.subr.mxu0 %v4361
          %4666 = vmatpush2.msra.mxu0 %v4360
          %4667 = vmatprep.subr.mxu0 %v4345
          %4668 = vmatpush2.msra.mxu0 %v4344
          %4669 = vmatprep.subr.mxu0 %v4329
          %4670 = vmatpush2.msra.mxu0 %v4328
          %4671 = vmatprep.subr.mxu0 %v4313
          %4672 = vmatpush2.msra.mxu0 %v4312
          %4673 = vmatprep.subr.mxu0 %v4297
          %4674 = vmatpush2.msra.mxu0 %v4296
          %4675 = vmatprep.subr.mxu0 %v4281
          %4676 = vmatpush2.msra.mxu0 %v4280
          %4677 = vmatprep.subr.mxu0 %v4265
          %4678 = vmatpush2.msra.mxu0 %v4264
          %4679 = vmatprep.mubr.f32.mxu0 %v4612
          %4680 = vmatmul.mubr.f32.gmra.mxu0 %v4611
          %v4681 = vpop.f32.mrf.mxu0
          %v4682 = vadd.f32 %v4527, %v4681
          %v4683 = vpop.f32.mrf.mxu0
          %v4684 = vadd.f32 %v4531, %v4683
          %4685 = vdwg.mxu0
          %4686 = vmatprep.subr.mxu0 %v4251
          %4687 = vmatpush1.msra.mxu0 %v4250
          %4688 = vmatprep.subr.mxu0 %v4235
          %4689 = vmatpush1.msra.mxu0 %v4234
          %4690 = vmatprep.subr.mxu0 %v4219
          %4691 = vmatpush1.msra.mxu0 %v4218
          %4692 = vmatprep.subr.mxu0 %v4203
          %4693 = vmatpush1.msra.mxu0 %v4202
          %4694 = vmatprep.subr.mxu0 %v4187
          %4695 = vmatpush1.msra.mxu0 %v4186
          %4696 = vmatprep.subr.mxu0 %v4171
          %4697 = vmatpush1.msra.mxu0 %v4170
          %4698 = vmatprep.subr.mxu0 %v4155
          %4699 = vmatpush1.msra.mxu0 %v4154
          %4700 = vmatprep.subr.mxu0 %v4139
          %4701 = vmatpush1.msra.mxu0 %v4138
          %4702 = vmatprep.subr.mxu0 %v4123
          %4703 = vmatpush1.msra.mxu0 %v4122
          %4704 = vmatprep.subr.mxu0 %v4107
          %4705 = vmatpush1.msra.mxu0 %v4106
          %4706 = vmatprep.subr.mxu0 %v4091
          %4707 = vmatpush1.msra.mxu0 %v4090
          %4708 = vmatprep.subr.mxu0 %v4075
          %4709 = vmatpush1.msra.mxu0 %v4074
          %4710 = vmatprep.subr.mxu0 %v4059
          %4711 = vmatpush1.msra.mxu0 %v4058
          %4712 = vmatprep.subr.mxu0 %v4043
          %4713 = vmatpush1.msra.mxu0 %v4042
          %4714 = vmatprep.subr.mxu0 %v4027
          %4715 = vmatpush1.msra.mxu0 %v4026
          %4716 = vmatprep.subr.mxu0 %v4011
          %4717 = vmatpush1.msra.mxu0 %v4010
          %4718 = vmatprep.subr.mxu0 %v4507
          %4719 = vmatpush2.msra.mxu0 %v4506
          %4720 = vmatprep.subr.mxu0 %v4491
          %4721 = vmatpush2.msra.mxu0 %v4490
          %4722 = vmatprep.subr.mxu0 %v4475
          %4723 = vmatpush2.msra.mxu0 %v4474
          %4724 = vmatprep.subr.mxu0 %v4459
          %4725 = vmatpush2.msra.mxu0 %v4458
          %4726 = vmatprep.subr.mxu0 %v4443
          %4727 = vmatpush2.msra.mxu0 %v4442
          %4728 = vmatprep.subr.mxu0 %v4427
          %4729 = vmatpush2.msra.mxu0 %v4426
          %4730 = vmatprep.subr.mxu0 %v4411
          %4731 = vmatpush2.msra.mxu0 %v4410
          %4732 = vmatprep.subr.mxu0 %v4395
          %4733 = vmatpush2.msra.mxu0 %v4394
          %4734 = vmatprep.subr.mxu0 %v4379
          %4735 = vmatpush2.msra.mxu0 %v4378
          %4736 = vmatprep.subr.mxu0 %v4363
          %4737 = vmatpush2.msra.mxu0 %v4362
          %4738 = vmatprep.subr.mxu0 %v4347
          %4739 = vmatpush2.msra.mxu0 %v4346
          %4740 = vmatprep.subr.mxu0 %v4331
          %4741 = vmatpush2.msra.mxu0 %v4330
          %4742 = vmatprep.subr.mxu0 %v4315
          %4743 = vmatpush2.msra.mxu0 %v4314
          %4744 = vmatprep.subr.mxu0 %v4299
          %4745 = vmatpush2.msra.mxu0 %v4298
          %4746 = vmatprep.subr.mxu0 %v4283
          %4747 = vmatpush2.msra.mxu0 %v4282
          %4748 = vmatprep.subr.mxu0 %v4267
          %4749 = vmatpush2.msra.mxu0 %v4266
          %4750 = vmatprep.mubr.f32.mxu0 %v4612
          %4751 = vmatmul.mubr.f32.gmra.mxu0 %v4611
          %v4752 = vpop.f32.mrf.mxu0
          %v4753 = vadd.f32 %v4535, %v4752
          %v4754 = vpop.f32.mrf.mxu0
          %v4755 = vadd.f32 %v4539, %v4754
          %4756 = vdwg.mxu0
          %4757 = vmatprep.subr.mxu0 %v4253
          %4758 = vmatpush1.msra.mxu0 %v4252
          %4759 = vmatprep.subr.mxu0 %v4237
          %4760 = vmatpush1.msra.mxu0 %v4236
          %4761 = vmatprep.subr.mxu0 %v4221
          %4762 = vmatpush1.msra.mxu0 %v4220
          %4763 = vmatprep.subr.mxu0 %v4205
          %4764 = vmatpush1.msra.mxu0 %v4204
          %4765 = vmatprep.subr.mxu0 %v4189
          %4766 = vmatpush1.msra.mxu0 %v4188
          %4767 = vmatprep.subr.mxu0 %v4173
          %4768 = vmatpush1.msra.mxu0 %v4172
          %4769 = vmatprep.subr.mxu0 %v4157
          %4770 = vmatpush1.msra.mxu0 %v4156
          %4771 = vmatprep.subr.mxu0 %v4141
          %4772 = vmatpush1.msra.mxu0 %v4140
          %4773 = vmatprep.subr.mxu0 %v4125
          %4774 = vmatpush1.msra.mxu0 %v4124
          %4775 = vmatprep.subr.mxu0 %v4109
          %4776 = vmatpush1.msra.mxu0 %v4108
          %4777 = vmatprep.subr.mxu0 %v4093
          %4778 = vmatpush1.msra.mxu0 %v4092
          %4779 = vmatprep.subr.mxu0 %v4077
          %4780 = vmatpush1.msra.mxu0 %v4076
          %4781 = vmatprep.subr.mxu0 %v4061
          %4782 = vmatpush1.msra.mxu0 %v4060
          %4783 = vmatprep.subr.mxu0 %v4045
          %4784 = vmatpush1.msra.mxu0 %v4044
          %4785 = vmatprep.subr.mxu0 %v4029
          %4786 = vmatpush1.msra.mxu0 %v4028
          %4787 = vmatprep.subr.mxu0 %v4013
          %4788 = vmatpush1.msra.mxu0 %v4012
          %4789 = vmatprep.subr.mxu0 %v4509
          %4790 = vmatpush2.msra.mxu0 %v4508
          %4791 = vmatprep.subr.mxu0 %v4493
          %4792 = vmatpush2.msra.mxu0 %v4492
          %4793 = vmatprep.subr.mxu0 %v4477
          %4794 = vmatpush2.msra.mxu0 %v4476
          %4795 = vmatprep.subr.mxu0 %v4461
          %4796 = vmatpush2.msra.mxu0 %v4460
          %4797 = vmatprep.subr.mxu0 %v4445
          %4798 = vmatpush2.msra.mxu0 %v4444
          %4799 = vmatprep.subr.mxu0 %v4429
          %4800 = vmatpush2.msra.mxu0 %v4428
          %4801 = vmatprep.subr.mxu0 %v4413
          %4802 = vmatpush2.msra.mxu0 %v4412
          %4803 = vmatprep.subr.mxu0 %v4397
          %4804 = vmatpush2.msra.mxu0 %v4396
          %4805 = vmatprep.subr.mxu0 %v4381
          %4806 = vmatpush2.msra.mxu0 %v4380
          %4807 = vmatprep.subr.mxu0 %v4365
          %4808 = vmatpush2.msra.mxu0 %v4364
          %4809 = vmatprep.subr.mxu0 %v4349
          %4810 = vmatpush2.msra.mxu0 %v4348
          %4811 = vmatprep.subr.mxu0 %v4333
          %4812 = vmatpush2.msra.mxu0 %v4332
          %4813 = vmatprep.subr.mxu0 %v4317
          %4814 = vmatpush2.msra.mxu0 %v4316
          %4815 = vmatprep.subr.mxu0 %v4301
          %4816 = vmatpush2.msra.mxu0 %v4300
          %4817 = vmatprep.subr.mxu0 %v4285
          %4818 = vmatpush2.msra.mxu0 %v4284
          %4819 = vmatprep.subr.mxu0 %v4269
          %4820 = vmatpush2.msra.mxu0 %v4268
          %4821 = vmatprep.mubr.f32.mxu0 %v4612
          %4822 = vmatmul.mubr.f32.gmra.mxu0 %v4611
          %v4823 = vpop.f32.mrf.mxu0
          %v4824 = vadd.f32 %v4543, %v4823
          %v4825 = vpop.f32.mrf.mxu0
          %v4826 = vadd.f32 %v4547, %v4825
          %4827 = vdwg.mxu0
          %4828 = vmatprep.subr.mxu0 %v4255
          %4829 = vmatpush1.msra.mxu0 %v4254
          %4830 = vmatprep.subr.mxu0 %v4239
          %4831 = vmatpush1.msra.mxu0 %v4238
          %4832 = vmatprep.subr.mxu0 %v4223
          %4833 = vmatpush1.msra.mxu0 %v4222
          %4834 = vmatprep.subr.mxu0 %v4207
          %4835 = vmatpush1.msra.mxu0 %v4206
          %4836 = vmatprep.subr.mxu0 %v4191
          %4837 = vmatpush1.msra.mxu0 %v4190
          %4838 = vmatprep.subr.mxu0 %v4175
          %4839 = vmatpush1.msra.mxu0 %v4174
          %4840 = vmatprep.subr.mxu0 %v4159
          %4841 = vmatpush1.msra.mxu0 %v4158
          %4842 = vmatprep.subr.mxu0 %v4143
          %4843 = vmatpush1.msra.mxu0 %v4142
          %4844 = vmatprep.subr.mxu0 %v4127
          %4845 = vmatpush1.msra.mxu0 %v4126
          %4846 = vmatprep.subr.mxu0 %v4111
          %4847 = vmatpush1.msra.mxu0 %v4110
          %4848 = vmatprep.subr.mxu0 %v4095
          %4849 = vmatpush1.msra.mxu0 %v4094
          %4850 = vmatprep.subr.mxu0 %v4079
          %4851 = vmatpush1.msra.mxu0 %v4078
          %4852 = vmatprep.subr.mxu0 %v4063
          %4853 = vmatpush1.msra.mxu0 %v4062
          %4854 = vmatprep.subr.mxu0 %v4047
          %4855 = vmatpush1.msra.mxu0 %v4046
          %4856 = vmatprep.subr.mxu0 %v4031
          %4857 = vmatpush1.msra.mxu0 %v4030
          %4858 = vmatprep.subr.mxu0 %v4015
          %4859 = vmatpush1.msra.mxu0 %v4014
          %4860 = vmatprep.subr.mxu0 %v4511
          %4861 = vmatpush2.msra.mxu0 %v4510
          %4862 = vmatprep.subr.mxu0 %v4495
          %4863 = vmatpush2.msra.mxu0 %v4494
          %4864 = vmatprep.subr.mxu0 %v4479
          %4865 = vmatpush2.msra.mxu0 %v4478
          %4866 = vmatprep.subr.mxu0 %v4463
          %4867 = vmatpush2.msra.mxu0 %v4462
          %4868 = vmatprep.subr.mxu0 %v4447
          %4869 = vmatpush2.msra.mxu0 %v4446
          %4870 = vmatprep.subr.mxu0 %v4431
          %4871 = vmatpush2.msra.mxu0 %v4430
          %4872 = vmatprep.subr.mxu0 %v4415
          %4873 = vmatpush2.msra.mxu0 %v4414
          %4874 = vmatprep.subr.mxu0 %v4399
          %4875 = vmatpush2.msra.mxu0 %v4398
          %4876 = vmatprep.subr.mxu0 %v4383
          %4877 = vmatpush2.msra.mxu0 %v4382
          %4878 = vmatprep.subr.mxu0 %v4367
          %4879 = vmatpush2.msra.mxu0 %v4366
          %4880 = vmatprep.subr.mxu0 %v4351
          %4881 = vmatpush2.msra.mxu0 %v4350
          %4882 = vmatprep.subr.mxu0 %v4335
          %4883 = vmatpush2.msra.mxu0 %v4334
          %4884 = vmatprep.subr.mxu0 %v4319
          %4885 = vmatpush2.msra.mxu0 %v4318
          %4886 = vmatprep.subr.mxu0 %v4303
          %4887 = vmatpush2.msra.mxu0 %v4302
          %4888 = vmatprep.subr.mxu0 %v4287
          %4889 = vmatpush2.msra.mxu0 %v4286
          %4890 = vmatprep.subr.mxu0 %v4271
          %4891 = vmatpush2.msra.mxu0 %v4270
          %4892 = vmatprep.mubr.f32.mxu0 %v4612
          %4893 = vmatmul.mubr.f32.gmra.mxu0 %v4611
          %v4894 = vpop.f32.mrf.mxu0
          %v4895 = vadd.f32 %v4551, %v4894
          %v4896 = vpop.f32.mrf.mxu0
          %v4897 = vadd.f32 %v4555, %v4896
          %4898 = vdwg.mxu0
          %4899 = vmatprep.subr.mxu0 %v4257
          %4900 = vmatpush1.msra.mxu0 %v4256
          %4901 = vmatprep.subr.mxu0 %v4241
          %4902 = vmatpush1.msra.mxu0 %v4240
          %4903 = vmatprep.subr.mxu0 %v4225
          %4904 = vmatpush1.msra.mxu0 %v4224
          %4905 = vmatprep.subr.mxu0 %v4209
          %4906 = vmatpush1.msra.mxu0 %v4208
          %4907 = vmatprep.subr.mxu0 %v4193
          %4908 = vmatpush1.msra.mxu0 %v4192
          %4909 = vmatprep.subr.mxu0 %v4177
          %4910 = vmatpush1.msra.mxu0 %v4176
          %4911 = vmatprep.subr.mxu0 %v4161
          %4912 = vmatpush1.msra.mxu0 %v4160
          %4913 = vmatprep.subr.mxu0 %v4145
          %4914 = vmatpush1.msra.mxu0 %v4144
          %4915 = vmatprep.subr.mxu0 %v4129
          %4916 = vmatpush1.msra.mxu0 %v4128
          %4917 = vmatprep.subr.mxu0 %v4113
          %4918 = vmatpush1.msra.mxu0 %v4112
          %4919 = vmatprep.subr.mxu0 %v4097
          %4920 = vmatpush1.msra.mxu0 %v4096
          %4921 = vmatprep.subr.mxu0 %v4081
          %4922 = vmatpush1.msra.mxu0 %v4080
          %4923 = vmatprep.subr.mxu0 %v4065
          %4924 = vmatpush1.msra.mxu0 %v4064
          %4925 = vmatprep.subr.mxu0 %v4049
          %4926 = vmatpush1.msra.mxu0 %v4048
          %4927 = vmatprep.subr.mxu0 %v4033
          %4928 = vmatpush1.msra.mxu0 %v4032
          %4929 = vmatprep.subr.mxu0 %v4017
          %4930 = vmatpush1.msra.mxu0 %v4016
          %4931 = vmatprep.subr.mxu0 %v4513
          %4932 = vmatpush2.msra.mxu0 %v4512
          %4933 = vmatprep.subr.mxu0 %v4497
          %4934 = vmatpush2.msra.mxu0 %v4496
          %4935 = vmatprep.subr.mxu0 %v4481
          %4936 = vmatpush2.msra.mxu0 %v4480
          %4937 = vmatprep.subr.mxu0 %v4465
          %4938 = vmatpush2.msra.mxu0 %v4464
          %4939 = vmatprep.subr.mxu0 %v4449
          %4940 = vmatpush2.msra.mxu0 %v4448
          %4941 = vmatprep.subr.mxu0 %v4433
          %4942 = vmatpush2.msra.mxu0 %v4432
          %4943 = vmatprep.subr.mxu0 %v4417
          %4944 = vmatpush2.msra.mxu0 %v4416
          %4945 = vmatprep.subr.mxu0 %v4401
          %4946 = vmatpush2.msra.mxu0 %v4400
          %4947 = vmatprep.subr.mxu0 %v4385
          %4948 = vmatpush2.msra.mxu0 %v4384
          %4949 = vmatprep.subr.mxu0 %v4369
          %4950 = vmatpush2.msra.mxu0 %v4368
          %4951 = vmatprep.subr.mxu0 %v4353
          %4952 = vmatpush2.msra.mxu0 %v4352
          %4953 = vmatprep.subr.mxu0 %v4337
          %4954 = vmatpush2.msra.mxu0 %v4336
          %4955 = vmatprep.subr.mxu0 %v4321
          %4956 = vmatpush2.msra.mxu0 %v4320
          %4957 = vmatprep.subr.mxu0 %v4305
          %4958 = vmatpush2.msra.mxu0 %v4304
          %4959 = vmatprep.subr.mxu0 %v4289
          %4960 = vmatpush2.msra.mxu0 %v4288
          %4961 = vmatprep.subr.mxu0 %v4273
          %4962 = vmatpush2.msra.mxu0 %v4272
          %4963 = vmatprep.mubr.f32.mxu0 %v4612
          %4964 = vmatmul.mubr.f32.gmra.mxu0 %v4611
          %v4965 = vpop.f32.mrf.mxu0
          %v4966 = vadd.f32 %v4559, %v4965
          %v4967 = vpop.f32.mrf.mxu0
          %v4968 = vadd.f32 %v4563, %v4967
          %4969 = vdwg.mxu0
          %4970 = vmatprep.subr.mxu0 %v4259
          %4971 = vmatpush1.msra.mxu0 %v4258
          %4972 = vmatprep.subr.mxu0 %v4243
          %4973 = vmatpush1.msra.mxu0 %v4242
          %4974 = vmatprep.subr.mxu0 %v4227
          %4975 = vmatpush1.msra.mxu0 %v4226
          %4976 = vmatprep.subr.mxu0 %v4211
          %4977 = vmatpush1.msra.mxu0 %v4210
          %4978 = vmatprep.subr.mxu0 %v4195
          %4979 = vmatpush1.msra.mxu0 %v4194
          %4980 = vmatprep.subr.mxu0 %v4179
          %4981 = vmatpush1.msra.mxu0 %v4178
          %4982 = vmatprep.subr.mxu0 %v4163
          %4983 = vmatpush1.msra.mxu0 %v4162
          %4984 = vmatprep.subr.mxu0 %v4147
          %4985 = vmatpush1.msra.mxu0 %v4146
          %4986 = vmatprep.subr.mxu0 %v4131
          %4987 = vmatpush1.msra.mxu0 %v4130
          %4988 = vmatprep.subr.mxu0 %v4115
          %4989 = vmatpush1.msra.mxu0 %v4114
          %4990 = vmatprep.subr.mxu0 %v4099
          %4991 = vmatpush1.msra.mxu0 %v4098
          %4992 = vmatprep.subr.mxu0 %v4083
          %4993 = vmatpush1.msra.mxu0 %v4082
          %4994 = vmatprep.subr.mxu0 %v4067
          %4995 = vmatpush1.msra.mxu0 %v4066
          %4996 = vmatprep.subr.mxu0 %v4051
          %4997 = vmatpush1.msra.mxu0 %v4050
          %4998 = vmatprep.subr.mxu0 %v4035
          %4999 = vmatpush1.msra.mxu0 %v4034
          %5000 = vmatprep.subr.mxu0 %v4019
          %5001 = vmatpush1.msra.mxu0 %v4018
          %5002 = vmatprep.subr.mxu0 %v4515
          %5003 = vmatpush2.msra.mxu0 %v4514
          %5004 = vmatprep.subr.mxu0 %v4499
          %5005 = vmatpush2.msra.mxu0 %v4498
          %5006 = vmatprep.subr.mxu0 %v4483
          %5007 = vmatpush2.msra.mxu0 %v4482
          %5008 = vmatprep.subr.mxu0 %v4467
          %5009 = vmatpush2.msra.mxu0 %v4466
          %5010 = vmatprep.subr.mxu0 %v4451
          %5011 = vmatpush2.msra.mxu0 %v4450
          %5012 = vmatprep.subr.mxu0 %v4435
          %5013 = vmatpush2.msra.mxu0 %v4434
          %5014 = vmatprep.subr.mxu0 %v4419
          %5015 = vmatpush2.msra.mxu0 %v4418
          %5016 = vmatprep.subr.mxu0 %v4403
          %5017 = vmatpush2.msra.mxu0 %v4402
          %5018 = vmatprep.subr.mxu0 %v4387
          %5019 = vmatpush2.msra.mxu0 %v4386
          %5020 = vmatprep.subr.mxu0 %v4371
          %5021 = vmatpush2.msra.mxu0 %v4370
          %5022 = vmatprep.subr.mxu0 %v4355
          %5023 = vmatpush2.msra.mxu0 %v4354
          %5024 = vmatprep.subr.mxu0 %v4339
          %5025 = vmatpush2.msra.mxu0 %v4338
          %5026 = vmatprep.subr.mxu0 %v4323
          %5027 = vmatpush2.msra.mxu0 %v4322
          %5028 = vmatprep.subr.mxu0 %v4307
          %5029 = vmatpush2.msra.mxu0 %v4306
          %5030 = vmatprep.subr.mxu0 %v4291
          %5031 = vmatpush2.msra.mxu0 %v4290
          %5032 = vmatprep.subr.mxu0 %v4275
          %5033 = vmatpush2.msra.mxu0 %v4274
          %5034 = vmatprep.mubr.f32.mxu0 %v4612
          %5035 = vmatmul.mubr.f32.gmra.mxu0 %v4611
          %v5036 = vpop.f32.mrf.mxu0
          %v5037 = vadd.f32 %v4567, %v5036
          %v5038 = vpop.f32.mrf.mxu0
          %v5039 = vadd.f32 %v4571, %v5038
          %5040 = vdwg.mxu0
          %5041 = vmatprep.subr.mxu0 %v4261
          %5042 = vmatpush1.msra.mxu0 %v4260
          %5043 = vmatprep.subr.mxu0 %v4245
          %5044 = vmatpush1.msra.mxu0 %v4244
          %5045 = vmatprep.subr.mxu0 %v4229
          %5046 = vmatpush1.msra.mxu0 %v4228
          %5047 = vmatprep.subr.mxu0 %v4213
          %5048 = vmatpush1.msra.mxu0 %v4212
          %5049 = vmatprep.subr.mxu0 %v4197
          %5050 = vmatpush1.msra.mxu0 %v4196
          %5051 = vmatprep.subr.mxu0 %v4181
          %5052 = vmatpush1.msra.mxu0 %v4180
          %5053 = vmatprep.subr.mxu0 %v4165
          %5054 = vmatpush1.msra.mxu0 %v4164
          %5055 = vmatprep.subr.mxu0 %v4149
          %5056 = vmatpush1.msra.mxu0 %v4148
          %5057 = vmatprep.subr.mxu0 %v4133
          %5058 = vmatpush1.msra.mxu0 %v4132
          %5059 = vmatprep.subr.mxu0 %v4117
          %5060 = vmatpush1.msra.mxu0 %v4116
          %5061 = vmatprep.subr.mxu0 %v4101
          %5062 = vmatpush1.msra.mxu0 %v4100
          %5063 = vmatprep.subr.mxu0 %v4085
          %5064 = vmatpush1.msra.mxu0 %v4084
          %5065 = vmatprep.subr.mxu0 %v4069
          %5066 = vmatpush1.msra.mxu0 %v4068
          %5067 = vmatprep.subr.mxu0 %v4053
          %5068 = vmatpush1.msra.mxu0 %v4052
          %5069 = vmatprep.subr.mxu0 %v4037
          %5070 = vmatpush1.msra.mxu0 %v4036
          %5071 = vmatprep.subr.mxu0 %v4021
          %5072 = vmatpush1.msra.mxu0 %v4020
          %5073 = vmatprep.subr.mxu0 %v4517
          %5074 = vmatpush2.msra.mxu0 %v4516
          %5075 = vmatprep.subr.mxu0 %v4501
          %5076 = vmatpush2.msra.mxu0 %v4500
          %5077 = vmatprep.subr.mxu0 %v4485
          %5078 = vmatpush2.msra.mxu0 %v4484
          %5079 = vmatprep.subr.mxu0 %v4469
          %5080 = vmatpush2.msra.mxu0 %v4468
          %5081 = vmatprep.subr.mxu0 %v4453
          %5082 = vmatpush2.msra.mxu0 %v4452
          %5083 = vmatprep.subr.mxu0 %v4437
          %5084 = vmatpush2.msra.mxu0 %v4436
          %5085 = vmatprep.subr.mxu0 %v4421
          %5086 = vmatpush2.msra.mxu0 %v4420
          %5087 = vmatprep.subr.mxu0 %v4405
          %5088 = vmatpush2.msra.mxu0 %v4404
          %5089 = vmatprep.subr.mxu0 %v4389
          %5090 = vmatpush2.msra.mxu0 %v4388
          %5091 = vmatprep.subr.mxu0 %v4373
          %5092 = vmatpush2.msra.mxu0 %v4372
          %5093 = vmatprep.subr.mxu0 %v4357
          %5094 = vmatpush2.msra.mxu0 %v4356
          %5095 = vmatprep.subr.mxu0 %v4341
          %5096 = vmatpush2.msra.mxu0 %v4340
          %5097 = vmatprep.subr.mxu0 %v4325
          %5098 = vmatpush2.msra.mxu0 %v4324
          %5099 = vmatprep.subr.mxu0 %v4309
          %5100 = vmatpush2.msra.mxu0 %v4308
          %5101 = vmatprep.subr.mxu0 %v4293
          %5102 = vmatpush2.msra.mxu0 %v4292
          %5103 = vmatprep.subr.mxu0 %v4277
          %5104 = vmatpush2.msra.mxu0 %v4276
          %5105 = vmatprep.mubr.f32.mxu0 %v4612
          %5106 = vmatmul.mubr.f32.gmra.mxu0 %v4611
          %v5107 = vpop.f32.mrf.mxu0
          %v5108 = vadd.f32 %v4575, %v5107
          %v5109 = vpop.f32.mrf.mxu0
          %v5110 = vadd.f32 %v4579, %v5109
          %5111 = vdwg.mxu0
          %5112 = vmatprep.subr.mxu0 %v4263
          %5113 = vmatpush1.msra.mxu0 %v4262
          %5114 = vmatprep.subr.mxu0 %v4247
          %5115 = vmatpush1.msra.mxu0 %v4246
          %5116 = vmatprep.subr.mxu0 %v4231
          %5117 = vmatpush1.msra.mxu0 %v4230
          %5118 = vmatprep.subr.mxu0 %v4215
          %5119 = vmatpush1.msra.mxu0 %v4214
          %5120 = vmatprep.subr.mxu0 %v4199
          %5121 = vmatpush1.msra.mxu0 %v4198
          %5122 = vmatprep.subr.mxu0 %v4183
          %5123 = vmatpush1.msra.mxu0 %v4182
          %5124 = vmatprep.subr.mxu0 %v4167
          %5125 = vmatpush1.msra.mxu0 %v4166
          %5126 = vmatprep.subr.mxu0 %v4151
          %5127 = vmatpush1.msra.mxu0 %v4150
          %5128 = vmatprep.subr.mxu0 %v4135
          %5129 = vmatpush1.msra.mxu0 %v4134
          %5130 = vmatprep.subr.mxu0 %v4119
          %5131 = vmatpush1.msra.mxu0 %v4118
          %5132 = vmatprep.subr.mxu0 %v4103
          %5133 = vmatpush1.msra.mxu0 %v4102
          %5134 = vmatprep.subr.mxu0 %v4087
          %5135 = vmatpush1.msra.mxu0 %v4086
          %5136 = vmatprep.subr.mxu0 %v4071
          %5137 = vmatpush1.msra.mxu0 %v4070
          %5138 = vmatprep.subr.mxu0 %v4055
          %5139 = vmatpush1.msra.mxu0 %v4054
          %5140 = vmatprep.subr.mxu0 %v4039
          %5141 = vmatpush1.msra.mxu0 %v4038
          %5142 = vmatprep.subr.mxu0 %v4023
          %5143 = vmatpush1.msra.mxu0 %v4022
          %5144 = vmatprep.subr.mxu0 %v4519
          %5145 = vmatpush2.msra.mxu0 %v4518
          %5146 = vmatprep.subr.mxu0 %v4503
          %5147 = vmatpush2.msra.mxu0 %v4502
          %5148 = vmatprep.subr.mxu0 %v4487
          %5149 = vmatpush2.msra.mxu0 %v4486
          %5150 = vmatprep.subr.mxu0 %v4471
          %5151 = vmatpush2.msra.mxu0 %v4470
          %5152 = vmatprep.subr.mxu0 %v4455
          %5153 = vmatpush2.msra.mxu0 %v4454
          %5154 = vmatprep.subr.mxu0 %v4439
          %5155 = vmatpush2.msra.mxu0 %v4438
          %5156 = vmatprep.subr.mxu0 %v4423
          %5157 = vmatpush2.msra.mxu0 %v4422
          %5158 = vmatprep.subr.mxu0 %v4407
          %5159 = vmatpush2.msra.mxu0 %v4406
          %5160 = vmatprep.subr.mxu0 %v4391
          %5161 = vmatpush2.msra.mxu0 %v4390
          %5162 = vmatprep.subr.mxu0 %v4375
          %5163 = vmatpush2.msra.mxu0 %v4374
          %5164 = vmatprep.subr.mxu0 %v4359
          %5165 = vmatpush2.msra.mxu0 %v4358
          %5166 = vmatprep.subr.mxu0 %v4343
          %5167 = vmatpush2.msra.mxu0 %v4342
          %5168 = vmatprep.subr.mxu0 %v4327
          %5169 = vmatpush2.msra.mxu0 %v4326
          %5170 = vmatprep.subr.mxu0 %v4311
          %5171 = vmatpush2.msra.mxu0 %v4310
          %5172 = vmatprep.subr.mxu0 %v4295
          %5173 = vmatpush2.msra.mxu0 %v4294
          %5174 = vmatprep.subr.mxu0 %v4279
          %5175 = vmatpush2.msra.mxu0 %v4278
          %5176 = vmatprep.mubr.f32.mxu0 %v4612
          %5177 = vmatmul.mubr.f32.gmra.mxu0 %v4611
          %v5178 = vpop.f32.mrf.mxu0
          %v5179 = vadd.f32 %v4583, %v5178
          %v5180 = vpop.f32.mrf.mxu0
          %v5181 = vadd.f32 %v4587, %v5180
          %5182 = vdwg.mxu0
          %v5183 = vxor.u32 %v4682, 2147483648
          %v5184 = vxor.u32 %v4684, 2147483648
          %v5185 = vxor.u32 %v4753, 2147483648
          %v5186 = vxor.u32 %v4755, 2147483648
          %v5187 = vxor.u32 %v4824, 2147483648
          %v5188 = vxor.u32 %v4826, 2147483648
          %v5189 = vxor.u32 %v4895, 2147483648
          %v5190 = vxor.u32 %v4897, 2147483648
          %v5191 = vxor.u32 %v4966, 2147483648
          %v5192 = vxor.u32 %v4968, 2147483648
          %v5193 = vxor.u32 %v5037, 2147483648
          %v5194 = vxor.u32 %v5039, 2147483648
          %v5195 = vxor.u32 %v5108, 2147483648
          %v5196 = vxor.u32 %v5110, 2147483648
          %v5197 = vxor.u32 %v5179, 2147483648
          %v5198 = vxor.u32 %v5181, 2147483648
          %v5199 = vmul.f32 %v5183, 1.442695
          %v5200 = vpow.pop %v5199
          %v5201 = vmul.f32 %v5184, 1.442695
          %v5202 = vpow.pop %v5201
          %v5203 = vmul.f32 %v5185, 1.442695
          %v5204 = vpow.pop %v5203
          %v5205 = vmul.f32 %v5186, 1.442695
          %v5206 = vpow.pop %v5205
          %v5207 = vmul.f32 %v5187, 1.442695
          %v5208 = vpow.pop %v5207
          %v5209 = vmul.f32 %v5188, 1.442695
          %v5210 = vpow.pop %v5209
          %v5211 = vmul.f32 %v5189, 1.442695
          %v5212 = vpow.pop %v5211
          %v5213 = vmul.f32 %v5190, 1.442695
          %v5214 = vpow.pop %v5213
          %v5215 = vmul.f32 %v5191, 1.442695
          %v5216 = vpow.pop %v5215
          %v5217 = vmul.f32 %v5192, 1.442695
          %v5218 = vpow.pop %v5217
          %v5219 = vmul.f32 %v5193, 1.442695
          %v5220 = vpow.pop %v5219
          %v5221 = vmul.f32 %v5194, 1.442695
          %v5222 = vpow.pop %v5221
          %v5223 = vmul.f32 %v5195, 1.442695
          %v5224 = vpow.pop %v5223
          %v5225 = vmul.f32 %v5196, 1.442695
          %v5226 = vpow.pop %v5225
          %v5227 = vmul.f32 %v5197, 1.442695
          %v5228 = vpow.pop %v5227
          %v5229 = vmul.f32 %v5198, 1.442695
          %v5230 = vpow.pop %v5229
          %v5231 = vadd.f32 %v5200, 1.0
          %v5232 = vadd.f32 %v5202, 1.0
          %v5233 = vadd.f32 %v5204, 1.0
          %v5234 = vadd.f32 %v5206, 1.0
          %v5235 = vadd.f32 %v5208, 1.0
          %v5236 = vadd.f32 %v5210, 1.0
          %v5237 = vadd.f32 %v5212, 1.0
          %v5238 = vadd.f32 %v5214, 1.0
          %v5239 = vadd.f32 %v5216, 1.0
          %v5240 = vadd.f32 %v5218, 1.0
          %v5241 = vadd.f32 %v5220, 1.0
          %v5242 = vadd.f32 %v5222, 1.0
          %v5243 = vadd.f32 %v5224, 1.0
          %v5244 = vadd.f32 %v5226, 1.0
          %v5245 = vadd.f32 %v5228, 1.0
          %v5246 = vadd.f32 %v5230, 1.0
          %v5247 = vrcp.pop %v5231
          %v5248 = vmul.f32 1.0, %v5247
          %v5249 = vrcp.pop %v5232
          %v5250 = vmul.f32 1.0, %v5249
          %v5251 = vrcp.pop %v5233
          %v5252 = vmul.f32 1.0, %v5251
          %v5253 = vrcp.pop %v5234
          %v5254 = vmul.f32 1.0, %v5253
          %v5255 = vrcp.pop %v5235
          %v5256 = vmul.f32 1.0, %v5255
          %v5257 = vrcp.pop %v5236
          %v5258 = vmul.f32 1.0, %v5257
          %v5259 = vrcp.pop %v5237
          %v5260 = vmul.f32 1.0, %v5259
          %v5261 = vrcp.pop %v5238
          %v5262 = vmul.f32 1.0, %v5261
          %v5263 = vrcp.pop %v5239
          %v5264 = vmul.f32 1.0, %v5263
          %v5265 = vrcp.pop %v5240
          %v5266 = vmul.f32 1.0, %v5265
          %v5267 = vrcp.pop %v5241
          %v5268 = vmul.f32 1.0, %v5267
          %v5269 = vrcp.pop %v5242
          %v5270 = vmul.f32 1.0, %v5269
          %v5271 = vrcp.pop %v5243
          %v5272 = vmul.f32 1.0, %v5271
          %v5273 = vrcp.pop %v5244
          %v5274 = vmul.f32 1.0, %v5273
          %v5275 = vrcp.pop %v5245
          %v5276 = vmul.f32 1.0, %v5275
          %v5277 = vrcp.pop %v5246
          %v5278 = vmul.f32 1.0, %v5277
          %v5279 = vmul.f32 %v4682, %v5248
          %v5280 = vmul.f32 %v4684, %v5250
          %v5281 = vmul.f32 %v4753, %v5252
          %v5282 = vmul.f32 %v4755, %v5254
          %v5283 = vmul.f32 %v4824, %v5256
          %v5284 = vmul.f32 %v4826, %v5258
          %v5285 = vmul.f32 %v4895, %v5260
          %v5286 = vmul.f32 %v4897, %v5262
          %v5287 = vmul.f32 %v4966, %v5264
          %v5288 = vmul.f32 %v4968, %v5266
          %v5289 = vmul.f32 %v5037, %v5268
          %v5290 = vmul.f32 %v5039, %v5270
          %v5291 = vmul.f32 %v5108, %v5272
          %v5292 = vmul.f32 %v5110, %v5274
          %v5293 = vmul.f32 %v5179, %v5276
          %v5294 = vmul.f32 %v5181, %v5278
          %v5295 = vld [vmem:[#allocation9] sm:$0xff]
          %v5296 = vld [vmem:[#allocation9 + $0x8] sm:$0xff]
          %v5297 = vld [vmem:[#allocation9 + $0x10] sm:$0xff]
          %v5298 = vld [vmem:[#allocation9 + $0x18] sm:$0xff]
          %v5299 = vld [vmem:[#allocation9 + $0x20] sm:$0xff]
          %v5300 = vld [vmem:[#allocation9 + $0x28] sm:$0xff]
          %v5301 = vld [vmem:[#allocation9 + $0x30] sm:$0xff]
          %v5302 = vld [vmem:[#allocation9 + $0x38] sm:$0xff]
          %v5303 = vld [vmem:[#allocation9 + $0x40] sm:$0xff]
          %v5304 = vld [vmem:[#allocation9 + $0x48] sm:$0xff]
          %v5305 = vld [vmem:[#allocation9 + $0x50] sm:$0xff]
          %v5306 = vld [vmem:[#allocation9 + $0x58] sm:$0xff]
          %v5307 = vld [vmem:[#allocation9 + $0x60] sm:$0xff]
          %v5308 = vld [vmem:[#allocation9 + $0x68] sm:$0xff]
          %v5309 = vld [vmem:[#allocation9 + $0x70] sm:$0xff]
          %v5310 = vld [vmem:[#allocation9 + $0x78] sm:$0xff]
          %v5311 = vld [vmem:[#allocation9 + $0x80] sm:$0xff]
          %v5312 = vld [vmem:[#allocation9 + $0x88] sm:$0xff]
          %v5313 = vld [vmem:[#allocation9 + $0x90] sm:$0xff]
          %v5314 = vld [vmem:[#allocation9 + $0x98] sm:$0xff]
          %v5315 = vld [vmem:[#allocation9 + $0xa0] sm:$0xff]
          %v5316 = vld [vmem:[#allocation9 + $0xa8] sm:$0xff]
          %v5317 = vld [vmem:[#allocation9 + $0xb0] sm:$0xff]
          %v5318 = vld [vmem:[#allocation9 + $0xb8] sm:$0xff]
          %v5319 = vld [vmem:[#allocation9 + $0xc0] sm:$0xff]
          %v5320 = vld [vmem:[#allocation9 + $0xc8] sm:$0xff]
          %v5321 = vld [vmem:[#allocation9 + $0xd0] sm:$0xff]
          %v5322 = vld [vmem:[#allocation9 + $0xd8] sm:$0xff]
          %v5323 = vld [vmem:[#allocation9 + $0xe0] sm:$0xff]
          %v5324 = vld [vmem:[#allocation9 + $0xe8] sm:$0xff]
          %v5325 = vld [vmem:[#allocation9 + $0xf0] sm:$0xff]
          %v5326 = vld [vmem:[#allocation9 + $0xf8] sm:$0xff]
          %v5327 = vld [vmem:[#allocation9 + $0x100] sm:$0xff]
          %v5328 = vld [vmem:[#allocation9 + $0x108] sm:$0xff]
          %v5329 = vld [vmem:[#allocation9 + $0x110] sm:$0xff]
          %v5330 = vld [vmem:[#allocation9 + $0x118] sm:$0xff]
          %v5331 = vld [vmem:[#allocation9 + $0x120] sm:$0xff]
          %v5332 = vld [vmem:[#allocation9 + $0x128] sm:$0xff]
          %v5333 = vld [vmem:[#allocation9 + $0x130] sm:$0xff]
          %v5334 = vld [vmem:[#allocation9 + $0x138] sm:$0xff]
          %v5335 = vld [vmem:[#allocation9 + $0x140] sm:$0xff]
          %v5336 = vld [vmem:[#allocation9 + $0x148] sm:$0xff]
          %v5337 = vld [vmem:[#allocation9 + $0x150] sm:$0xff]
          %v5338 = vld [vmem:[#allocation9 + $0x158] sm:$0xff]
          %v5339 = vld [vmem:[#allocation9 + $0x160] sm:$0xff]
          %v5340 = vld [vmem:[#allocation9 + $0x168] sm:$0xff]
          %v5341 = vld [vmem:[#allocation9 + $0x170] sm:$0xff]
          %v5342 = vld [vmem:[#allocation9 + $0x178] sm:$0xff]
          %v5343 = vld [vmem:[#allocation9 + $0x180] sm:$0xff]
          %v5344 = vld [vmem:[#allocation9 + $0x188] sm:$0xff]
          %v5345 = vld [vmem:[#allocation9 + $0x190] sm:$0xff]
          %v5346 = vld [vmem:[#allocation9 + $0x198] sm:$0xff]
          %v5347 = vld [vmem:[#allocation9 + $0x1a0] sm:$0xff]
          %v5348 = vld [vmem:[#allocation9 + $0x1a8] sm:$0xff]
          %v5349 = vld [vmem:[#allocation9 + $0x1b0] sm:$0xff]
          %v5350 = vld [vmem:[#allocation9 + $0x1b8] sm:$0xff]
          %v5351 = vld [vmem:[#allocation9 + $0x1c0] sm:$0xff]
          %v5352 = vld [vmem:[#allocation9 + $0x1c8] sm:$0xff]
          %v5353 = vld [vmem:[#allocation9 + $0x1d0] sm:$0xff]
          %v5354 = vld [vmem:[#allocation9 + $0x1d8] sm:$0xff]
          %v5355 = vld [vmem:[#allocation9 + $0x1e0] sm:$0xff]
          %v5356 = vld [vmem:[#allocation9 + $0x1e8] sm:$0xff]
          %v5357 = vld [vmem:[#allocation9 + $0x1f0] sm:$0xff]
          %v5358 = vld [vmem:[#allocation9 + $0x1f8] sm:$0xff]
          %v5359 = vld [vmem:[#allocation9 + $0x200] sm:$0xff]
          %v5360 = vld [vmem:[#allocation9 + $0x208] sm:$0xff]
          %v5361 = vld [vmem:[#allocation9 + $0x210] sm:$0xff]
          %v5362 = vld [vmem:[#allocation9 + $0x218] sm:$0xff]
          %v5363 = vld [vmem:[#allocation9 + $0x220] sm:$0xff]
          %v5364 = vld [vmem:[#allocation9 + $0x228] sm:$0xff]
          %v5365 = vld [vmem:[#allocation9 + $0x230] sm:$0xff]
          %v5366 = vld [vmem:[#allocation9 + $0x238] sm:$0xff]
          %v5367 = vld [vmem:[#allocation9 + $0x240] sm:$0xff]
          %v5368 = vld [vmem:[#allocation9 + $0x248] sm:$0xff]
          %v5369 = vld [vmem:[#allocation9 + $0x250] sm:$0xff]
          %v5370 = vld [vmem:[#allocation9 + $0x258] sm:$0xff]
          %v5371 = vld [vmem:[#allocation9 + $0x260] sm:$0xff]
          %v5372 = vld [vmem:[#allocation9 + $0x268] sm:$0xff]
          %v5373 = vld [vmem:[#allocation9 + $0x270] sm:$0xff]
          %v5374 = vld [vmem:[#allocation9 + $0x278] sm:$0xff]
          %v5375 = vld [vmem:[#allocation9 + $0x280] sm:$0xff]
          %v5376 = vld [vmem:[#allocation9 + $0x288] sm:$0xff]
          %v5377 = vld [vmem:[#allocation9 + $0x290] sm:$0xff]
          %v5378 = vld [vmem:[#allocation9 + $0x298] sm:$0xff]
          %v5379 = vld [vmem:[#allocation9 + $0x2a0] sm:$0xff]
          %v5380 = vld [vmem:[#allocation9 + $0x2a8] sm:$0xff]
          %v5381 = vld [vmem:[#allocation9 + $0x2b0] sm:$0xff]
          %v5382 = vld [vmem:[#allocation9 + $0x2b8] sm:$0xff]
          %v5383 = vld [vmem:[#allocation9 + $0x2c0] sm:$0xff]
          %v5384 = vld [vmem:[#allocation9 + $0x2c8] sm:$0xff]
          %v5385 = vld [vmem:[#allocation9 + $0x2d0] sm:$0xff]
          %v5386 = vld [vmem:[#allocation9 + $0x2d8] sm:$0xff]
          %v5387 = vld [vmem:[#allocation9 + $0x2e0] sm:$0xff]
          %v5388 = vld [vmem:[#allocation9 + $0x2e8] sm:$0xff]
          %v5389 = vld [vmem:[#allocation9 + $0x2f0] sm:$0xff]
          %v5390 = vld [vmem:[#allocation9 + $0x2f8] sm:$0xff]
          %v5391 = vld [vmem:[#allocation9 + $0x300] sm:$0xff]
          %v5392 = vld [vmem:[#allocation9 + $0x308] sm:$0xff]
          %v5393 = vld [vmem:[#allocation9 + $0x310] sm:$0xff]
          %v5394 = vld [vmem:[#allocation9 + $0x318] sm:$0xff]
          %v5395 = vld [vmem:[#allocation9 + $0x320] sm:$0xff]
          %v5396 = vld [vmem:[#allocation9 + $0x328] sm:$0xff]
          %v5397 = vld [vmem:[#allocation9 + $0x330] sm:$0xff]
          %v5398 = vld [vmem:[#allocation9 + $0x338] sm:$0xff]
          %v5399 = vld [vmem:[#allocation9 + $0x340] sm:$0xff]
          %v5400 = vld [vmem:[#allocation9 + $0x348] sm:$0xff]
          %v5401 = vld [vmem:[#allocation9 + $0x350] sm:$0xff]
          %v5402 = vld [vmem:[#allocation9 + $0x358] sm:$0xff]
          %v5403 = vld [vmem:[#allocation9 + $0x360] sm:$0xff]
          %v5404 = vld [vmem:[#allocation9 + $0x368] sm:$0xff]
          %v5405 = vld [vmem:[#allocation9 + $0x370] sm:$0xff]
          %v5406 = vld [vmem:[#allocation9 + $0x378] sm:$0xff]
          %v5407 = vld [vmem:[#allocation9 + $0x380] sm:$0xff]
          %v5408 = vld [vmem:[#allocation9 + $0x388] sm:$0xff]
          %v5409 = vld [vmem:[#allocation9 + $0x390] sm:$0xff]
          %v5410 = vld [vmem:[#allocation9 + $0x398] sm:$0xff]
          %v5411 = vld [vmem:[#allocation9 + $0x3a0] sm:$0xff]
          %v5412 = vld [vmem:[#allocation9 + $0x3a8] sm:$0xff]
          %v5413 = vld [vmem:[#allocation9 + $0x3b0] sm:$0xff]
          %v5414 = vld [vmem:[#allocation9 + $0x3b8] sm:$0xff]
          %v5415 = vld [vmem:[#allocation9 + $0x3c0] sm:$0xff]
          %v5416 = vld [vmem:[#allocation9 + $0x3c8] sm:$0xff]
          %v5417 = vld [vmem:[#allocation9 + $0x3d0] sm:$0xff]
          %v5418 = vld [vmem:[#allocation9 + $0x3d8] sm:$0xff]
          %v5419 = vld [vmem:[#allocation9 + $0x3e0] sm:$0xff]
          %v5420 = vld [vmem:[#allocation9 + $0x3e8] sm:$0xff]
          %v5421 = vld [vmem:[#allocation9 + $0x3f0] sm:$0xff]
          %v5422 = vld [vmem:[#allocation9 + $0x3f8] sm:$0xff]
          %v5423 = vld [vmem:[#allocation9 + $0x400] sm:$0xff]
          %v5424 = vld [vmem:[#allocation9 + $0x408] sm:$0xff]
          %v5425 = vld [vmem:[#allocation9 + $0x410] sm:$0xff]
          %v5426 = vld [vmem:[#allocation9 + $0x418] sm:$0xff]
          %v5427 = vld [vmem:[#allocation9 + $0x420] sm:$0xff]
          %v5428 = vld [vmem:[#allocation9 + $0x428] sm:$0xff]
          %v5429 = vld [vmem:[#allocation9 + $0x430] sm:$0xff]
          %v5430 = vld [vmem:[#allocation9 + $0x438] sm:$0xff]
          %v5431 = vld [vmem:[#allocation9 + $0x440] sm:$0xff]
          %v5432 = vld [vmem:[#allocation9 + $0x448] sm:$0xff]
          %v5433 = vld [vmem:[#allocation9 + $0x450] sm:$0xff]
          %v5434 = vld [vmem:[#allocation9 + $0x458] sm:$0xff]
          %v5435 = vld [vmem:[#allocation9 + $0x460] sm:$0xff]
          %v5436 = vld [vmem:[#allocation9 + $0x468] sm:$0xff]
          %v5437 = vld [vmem:[#allocation9 + $0x470] sm:$0xff]
          %v5438 = vld [vmem:[#allocation9 + $0x478] sm:$0xff]
          %v5439 = vld [vmem:[#allocation9 + $0x480] sm:$0xff]
          %v5440 = vld [vmem:[#allocation9 + $0x488] sm:$0xff]
          %v5441 = vld [vmem:[#allocation9 + $0x490] sm:$0xff]
          %v5442 = vld [vmem:[#allocation9 + $0x498] sm:$0xff]
          %v5443 = vld [vmem:[#allocation9 + $0x4a0] sm:$0xff]
          %v5444 = vld [vmem:[#allocation9 + $0x4a8] sm:$0xff]
          %v5445 = vld [vmem:[#allocation9 + $0x4b0] sm:$0xff]
          %v5446 = vld [vmem:[#allocation9 + $0x4b8] sm:$0xff]
          %v5447 = vld [vmem:[#allocation9 + $0x4c0] sm:$0xff]
          %v5448 = vld [vmem:[#allocation9 + $0x4c8] sm:$0xff]
          %v5449 = vld [vmem:[#allocation9 + $0x4d0] sm:$0xff]
          %v5450 = vld [vmem:[#allocation9 + $0x4d8] sm:$0xff]
          %v5451 = vld [vmem:[#allocation9 + $0x4e0] sm:$0xff]
          %v5452 = vld [vmem:[#allocation9 + $0x4e8] sm:$0xff]
          %v5453 = vld [vmem:[#allocation9 + $0x4f0] sm:$0xff]
          %v5454 = vld [vmem:[#allocation9 + $0x4f8] sm:$0xff]
          %v5455 = vld [vmem:[#allocation9 + $0x500] sm:$0xff]
          %v5456 = vld [vmem:[#allocation9 + $0x508] sm:$0xff]
          %v5457 = vld [vmem:[#allocation9 + $0x510] sm:$0xff]
          %v5458 = vld [vmem:[#allocation9 + $0x518] sm:$0xff]
          %v5459 = vld [vmem:[#allocation9 + $0x520] sm:$0xff]
          %v5460 = vld [vmem:[#allocation9 + $0x528] sm:$0xff]
          %v5461 = vld [vmem:[#allocation9 + $0x530] sm:$0xff]
          %v5462 = vld [vmem:[#allocation9 + $0x538] sm:$0xff]
          %v5463 = vld [vmem:[#allocation9 + $0x540] sm:$0xff]
          %v5464 = vld [vmem:[#allocation9 + $0x548] sm:$0xff]
          %v5465 = vld [vmem:[#allocation9 + $0x550] sm:$0xff]
          %v5466 = vld [vmem:[#allocation9 + $0x558] sm:$0xff]
          %v5467 = vld [vmem:[#allocation9 + $0x560] sm:$0xff]
          %v5468 = vld [vmem:[#allocation9 + $0x568] sm:$0xff]
          %v5469 = vld [vmem:[#allocation9 + $0x570] sm:$0xff]
          %v5470 = vld [vmem:[#allocation9 + $0x578] sm:$0xff]
          %v5471 = vld [vmem:[#allocation9 + $0x580] sm:$0xff]
          %v5472 = vld [vmem:[#allocation9 + $0x588] sm:$0xff]
          %v5473 = vld [vmem:[#allocation9 + $0x590] sm:$0xff]
          %v5474 = vld [vmem:[#allocation9 + $0x598] sm:$0xff]
          %v5475 = vld [vmem:[#allocation9 + $0x5a0] sm:$0xff]
          %v5476 = vld [vmem:[#allocation9 + $0x5a8] sm:$0xff]
          %v5477 = vld [vmem:[#allocation9 + $0x5b0] sm:$0xff]
          %v5478 = vld [vmem:[#allocation9 + $0x5b8] sm:$0xff]
          %v5479 = vld [vmem:[#allocation9 + $0x5c0] sm:$0xff]
          %v5480 = vld [vmem:[#allocation9 + $0x5c8] sm:$0xff]
          %v5481 = vld [vmem:[#allocation9 + $0x5d0] sm:$0xff]
          %v5482 = vld [vmem:[#allocation9 + $0x5d8] sm:$0xff]
          %v5483 = vld [vmem:[#allocation9 + $0x5e0] sm:$0xff]
          %v5484 = vld [vmem:[#allocation9 + $0x5e8] sm:$0xff]
          %v5485 = vld [vmem:[#allocation9 + $0x5f0] sm:$0xff]
          %v5486 = vld [vmem:[#allocation9 + $0x5f8] sm:$0xff]
          %v5487 = vld [vmem:[#allocation9 + $0x600] sm:$0xff]
          %v5488 = vld [vmem:[#allocation9 + $0x608] sm:$0xff]
          %v5489 = vld [vmem:[#allocation9 + $0x610] sm:$0xff]
          %v5490 = vld [vmem:[#allocation9 + $0x618] sm:$0xff]
          %v5491 = vld [vmem:[#allocation9 + $0x620] sm:$0xff]
          %v5492 = vld [vmem:[#allocation9 + $0x628] sm:$0xff]
          %v5493 = vld [vmem:[#allocation9 + $0x630] sm:$0xff]
          %v5494 = vld [vmem:[#allocation9 + $0x638] sm:$0xff]
          %v5495 = vld [vmem:[#allocation9 + $0x640] sm:$0xff]
          %v5496 = vld [vmem:[#allocation9 + $0x648] sm:$0xff]
          %v5497 = vld [vmem:[#allocation9 + $0x650] sm:$0xff]
          %v5498 = vld [vmem:[#allocation9 + $0x658] sm:$0xff]
          %v5499 = vld [vmem:[#allocation9 + $0x660] sm:$0xff]
          %v5500 = vld [vmem:[#allocation9 + $0x668] sm:$0xff]
          %v5501 = vld [vmem:[#allocation9 + $0x670] sm:$0xff]
          %v5502 = vld [vmem:[#allocation9 + $0x678] sm:$0xff]
          %v5503 = vld [vmem:[#allocation9 + $0x680] sm:$0xff]
          %v5504 = vld [vmem:[#allocation9 + $0x688] sm:$0xff]
          %v5505 = vld [vmem:[#allocation9 + $0x690] sm:$0xff]
          %v5506 = vld [vmem:[#allocation9 + $0x698] sm:$0xff]
          %v5507 = vld [vmem:[#allocation9 + $0x6a0] sm:$0xff]
          %v5508 = vld [vmem:[#allocation9 + $0x6a8] sm:$0xff]
          %v5509 = vld [vmem:[#allocation9 + $0x6b0] sm:$0xff]
          %v5510 = vld [vmem:[#allocation9 + $0x6b8] sm:$0xff]
          %v5511 = vld [vmem:[#allocation9 + $0x6c0] sm:$0xff]
          %v5512 = vld [vmem:[#allocation9 + $0x6c8] sm:$0xff]
          %v5513 = vld [vmem:[#allocation9 + $0x6d0] sm:$0xff]
          %v5514 = vld [vmem:[#allocation9 + $0x6d8] sm:$0xff]
          %v5515 = vld [vmem:[#allocation9 + $0x6e0] sm:$0xff]
          %v5516 = vld [vmem:[#allocation9 + $0x6e8] sm:$0xff]
          %v5517 = vld [vmem:[#allocation9 + $0x6f0] sm:$0xff]
          %v5518 = vld [vmem:[#allocation9 + $0x6f8] sm:$0xff]
          %v5519 = vld [vmem:[#allocation9 + $0x700] sm:$0xff]
          %v5520 = vld [vmem:[#allocation9 + $0x708] sm:$0xff]
          %v5521 = vld [vmem:[#allocation9 + $0x710] sm:$0xff]
          %v5522 = vld [vmem:[#allocation9 + $0x718] sm:$0xff]
          %v5523 = vld [vmem:[#allocation9 + $0x720] sm:$0xff]
          %v5524 = vld [vmem:[#allocation9 + $0x728] sm:$0xff]
          %v5525 = vld [vmem:[#allocation9 + $0x730] sm:$0xff]
          %v5526 = vld [vmem:[#allocation9 + $0x738] sm:$0xff]
          %v5527 = vld [vmem:[#allocation9 + $0x740] sm:$0xff]
          %v5528 = vld [vmem:[#allocation9 + $0x748] sm:$0xff]
          %v5529 = vld [vmem:[#allocation9 + $0x750] sm:$0xff]
          %v5530 = vld [vmem:[#allocation9 + $0x758] sm:$0xff]
          %v5531 = vld [vmem:[#allocation9 + $0x760] sm:$0xff]
          %v5532 = vld [vmem:[#allocation9 + $0x768] sm:$0xff]
          %v5533 = vld [vmem:[#allocation9 + $0x770] sm:$0xff]
          %v5534 = vld [vmem:[#allocation9 + $0x778] sm:$0xff]
          %v5535 = vld [vmem:[#allocation9 + $0x780] sm:$0xff]
          %v5536 = vld [vmem:[#allocation9 + $0x788] sm:$0xff]
          %v5537 = vld [vmem:[#allocation9 + $0x790] sm:$0xff]
          %v5538 = vld [vmem:[#allocation9 + $0x798] sm:$0xff]
          %v5539 = vld [vmem:[#allocation9 + $0x7a0] sm:$0xff]
          %v5540 = vld [vmem:[#allocation9 + $0x7a8] sm:$0xff]
          %v5541 = vld [vmem:[#allocation9 + $0x7b0] sm:$0xff]
          %v5542 = vld [vmem:[#allocation9 + $0x7b8] sm:$0xff]
          %v5543 = vld [vmem:[#allocation9 + $0x7c0] sm:$0xff]
          %v5544 = vld [vmem:[#allocation9 + $0x7c8] sm:$0xff]
          %v5545 = vld [vmem:[#allocation9 + $0x7d0] sm:$0xff]
          %v5546 = vld [vmem:[#allocation9 + $0x7d8] sm:$0xff]
          %v5547 = vld [vmem:[#allocation9 + $0x7e0] sm:$0xff]
          %v5548 = vld [vmem:[#allocation9 + $0x7e8] sm:$0xff]
          %v5549 = vld [vmem:[#allocation9 + $0x7f0] sm:$0xff]
          %v5550 = vld [vmem:[#allocation9 + $0x7f8] sm:$0xff]
          %v5551 = vld [vmem:[#allocation11] sm:$0x1]
          %v5553 = vlaneseq
          %v5554 = vshrl.u32 %v5553, 7
          %v5555 = vsub.s32 0, %v5554
          %v5556 = vrot.slane %v5551, %v5555
          %5558 = vmatprep.subr.mxu0 0.0
          %5559 = vmatpush1.msra.mxu0 %v5310
          %5560 = vmatprep.subr.mxu0 0.0
          %5561 = vmatpush1.msra.mxu0 %v5309
          %5562 = vmatprep.subr.mxu0 0.0
          %5563 = vmatpush1.msra.mxu0 %v5308
          %5564 = vmatprep.subr.mxu0 0.0
          %5565 = vmatpush1.msra.mxu0 %v5307
          %5566 = vmatprep.subr.mxu0 0.0
          %5567 = vmatpush1.msra.mxu0 %v5306
          %5568 = vmatprep.subr.mxu0 0.0
          %5569 = vmatpush1.msra.mxu0 %v5305
          %5570 = vmatprep.subr.mxu0 0.0
          %5571 = vmatpush1.msra.mxu0 %v5304
          %5572 = vmatprep.subr.mxu0 0.0
          %5573 = vmatpush1.msra.mxu0 %v5303
          %5574 = vmatprep.subr.mxu0 0.0
          %5575 = vmatpush1.msra.mxu0 %v5302
          %5576 = vmatprep.subr.mxu0 0.0
          %5577 = vmatpush1.msra.mxu0 %v5301
          %5578 = vmatprep.subr.mxu0 0.0
          %5579 = vmatpush1.msra.mxu0 %v5300
          %5580 = vmatprep.subr.mxu0 0.0
          %5581 = vmatpush1.msra.mxu0 %v5299
          %5582 = vmatprep.subr.mxu0 0.0
          %5583 = vmatpush1.msra.mxu0 %v5298
          %5584 = vmatprep.subr.mxu0 0.0
          %5585 = vmatpush1.msra.mxu0 %v5297
          %5586 = vmatprep.subr.mxu0 0.0
          %5587 = vmatpush1.msra.mxu0 %v5296
          %5588 = vmatprep.subr.mxu0 0.0
          %5589 = vmatpush1.msra.mxu0 %v5295
          %5590 = vmatprep.subr.mxu0 0.0
          %5591 = vmatpush2.msra.mxu0 %v5326
          %5592 = vmatprep.subr.mxu0 0.0
          %5593 = vmatpush2.msra.mxu0 %v5325
          %5594 = vmatprep.subr.mxu0 0.0
          %5595 = vmatpush2.msra.mxu0 %v5324
          %5596 = vmatprep.subr.mxu0 0.0
          %5597 = vmatpush2.msra.mxu0 %v5323
          %5598 = vmatprep.subr.mxu0 0.0
          %5599 = vmatpush2.msra.mxu0 %v5322
          %5600 = vmatprep.subr.mxu0 0.0
          %5601 = vmatpush2.msra.mxu0 %v5321
          %5602 = vmatprep.subr.mxu0 0.0
          %5603 = vmatpush2.msra.mxu0 %v5320
          %5604 = vmatprep.subr.mxu0 0.0
          %5605 = vmatpush2.msra.mxu0 %v5319
          %5606 = vmatprep.subr.mxu0 0.0
          %5607 = vmatpush2.msra.mxu0 %v5318
          %5608 = vmatprep.subr.mxu0 0.0
          %5609 = vmatpush2.msra.mxu0 %v5317
          %5610 = vmatprep.subr.mxu0 0.0
          %5611 = vmatpush2.msra.mxu0 %v5316
          %5612 = vmatprep.subr.mxu0 0.0
          %5613 = vmatpush2.msra.mxu0 %v5315
          %5614 = vmatprep.subr.mxu0 0.0
          %5615 = vmatpush2.msra.mxu0 %v5314
          %5616 = vmatprep.subr.mxu0 0.0
          %5617 = vmatpush2.msra.mxu0 %v5313
          %5618 = vmatprep.subr.mxu0 0.0
          %5619 = vmatpush2.msra.mxu0 %v5312
          %5620 = vmatprep.subr.mxu0 0.0
          %5621 = vmatpush2.msra.mxu0 %v5311
          %5622 = vmatprep.mubr.f32.mxu0 %v5280
          %5623 = vmatmul.mubr.f32.gmra.mxu0 %v5279
          %v5624 = vpop.f32.mrf.mxu0
          %v5625 = vadd.f32 %v5556, %v5624
          %v5626 = vpop.f32.mrf.mxu0
          %5627 = vdwg.mxu0
          %5628 = vmatprep.subr.mxu0 0.0
          %5629 = vmatpush1.msra.mxu0 %v5342
          %5630 = vmatprep.subr.mxu0 0.0
          %5631 = vmatpush1.msra.mxu0 %v5341
          %5632 = vmatprep.subr.mxu0 0.0
          %5633 = vmatpush1.msra.mxu0 %v5340
          %5634 = vmatprep.subr.mxu0 0.0
          %5635 = vmatpush1.msra.mxu0 %v5339
          %5636 = vmatprep.subr.mxu0 0.0
          %5637 = vmatpush1.msra.mxu0 %v5338
          %5638 = vmatprep.subr.mxu0 0.0
          %5639 = vmatpush1.msra.mxu0 %v5337
          %5640 = vmatprep.subr.mxu0 0.0
          %5641 = vmatpush1.msra.mxu0 %v5336
          %5642 = vmatprep.subr.mxu0 0.0
          %5643 = vmatpush1.msra.mxu0 %v5335
          %5644 = vmatprep.subr.mxu0 0.0
          %5645 = vmatpush1.msra.mxu0 %v5334
          %5646 = vmatprep.subr.mxu0 0.0
          %5647 = vmatpush1.msra.mxu0 %v5333
          %5648 = vmatprep.subr.mxu0 0.0
          %5649 = vmatpush1.msra.mxu0 %v5332
          %5650 = vmatprep.subr.mxu0 0.0
          %5651 = vmatpush1.msra.mxu0 %v5331
          %5652 = vmatprep.subr.mxu0 0.0
          %5653 = vmatpush1.msra.mxu0 %v5330
          %5654 = vmatprep.subr.mxu0 0.0
          %5655 = vmatpush1.msra.mxu0 %v5329
          %5656 = vmatprep.subr.mxu0 0.0
          %5657 = vmatpush1.msra.mxu0 %v5328
          %5658 = vmatprep.subr.mxu0 0.0
          %5659 = vmatpush1.msra.mxu0 %v5327
          %5660 = vmatprep.subr.mxu0 0.0
          %5661 = vmatpush2.msra.mxu0 %v5358
          %5662 = vmatprep.subr.mxu0 0.0
          %5663 = vmatpush2.msra.mxu0 %v5357
          %5664 = vmatprep.subr.mxu0 0.0
          %5665 = vmatpush2.msra.mxu0 %v5356
          %5666 = vmatprep.subr.mxu0 0.0
          %5667 = vmatpush2.msra.mxu0 %v5355
          %5668 = vmatprep.subr.mxu0 0.0
          %5669 = vmatpush2.msra.mxu0 %v5354
          %5670 = vmatprep.subr.mxu0 0.0
          %5671 = vmatpush2.msra.mxu0 %v5353
          %5672 = vmatprep.subr.mxu0 0.0
          %5673 = vmatpush2.msra.mxu0 %v5352
          %5674 = vmatprep.subr.mxu0 0.0
          %5675 = vmatpush2.msra.mxu0 %v5351
          %5676 = vmatprep.subr.mxu0 0.0
          %5677 = vmatpush2.msra.mxu0 %v5350
          %5678 = vmatprep.subr.mxu0 0.0
          %5679 = vmatpush2.msra.mxu0 %v5349
          %5680 = vmatprep.subr.mxu0 0.0
          %5681 = vmatpush2.msra.mxu0 %v5348
          %5682 = vmatprep.subr.mxu0 0.0
          %5683 = vmatpush2.msra.mxu0 %v5347
          %5684 = vmatprep.subr.mxu0 0.0
          %5685 = vmatpush2.msra.mxu0 %v5346
          %5686 = vmatprep.subr.mxu0 0.0
          %5687 = vmatpush2.msra.mxu0 %v5345
          %5688 = vmatprep.subr.mxu0 0.0
          %5689 = vmatpush2.msra.mxu0 %v5344
          %5690 = vmatprep.subr.mxu0 0.0
          %5691 = vmatpush2.msra.mxu0 %v5343
          %5692 = vmatprep.mubr.f32.mxu0 %v5282
          %5693 = vmatmul.mubr.f32.gmra.mxu0 %v5281
          %v5694 = vpop.f32.mrf.mxu0
          %v5695 = vadd.f32 %v5625, %v5694
          %v5696 = vpop.f32.mrf.mxu0
          %5697 = vdwg.mxu0
          %5698 = vmatprep.subr.mxu0 0.0
          %5699 = vmatpush1.msra.mxu0 %v5374
          %5700 = vmatprep.subr.mxu0 0.0
          %5701 = vmatpush1.msra.mxu0 %v5373
          %5702 = vmatprep.subr.mxu0 0.0
          %5703 = vmatpush1.msra.mxu0 %v5372
          %5704 = vmatprep.subr.mxu0 0.0
          %5705 = vmatpush1.msra.mxu0 %v5371
          %5706 = vmatprep.subr.mxu0 0.0
          %5707 = vmatpush1.msra.mxu0 %v5370
          %5708 = vmatprep.subr.mxu0 0.0
          %5709 = vmatpush1.msra.mxu0 %v5369
          %5710 = vmatprep.subr.mxu0 0.0
          %5711 = vmatpush1.msra.mxu0 %v5368
          %5712 = vmatprep.subr.mxu0 0.0
          %5713 = vmatpush1.msra.mxu0 %v5367
          %5714 = vmatprep.subr.mxu0 0.0
          %5715 = vmatpush1.msra.mxu0 %v5366
          %5716 = vmatprep.subr.mxu0 0.0
          %5717 = vmatpush1.msra.mxu0 %v5365
          %5718 = vmatprep.subr.mxu0 0.0
          %5719 = vmatpush1.msra.mxu0 %v5364
          %5720 = vmatprep.subr.mxu0 0.0
          %5721 = vmatpush1.msra.mxu0 %v5363
          %5722 = vmatprep.subr.mxu0 0.0
          %5723 = vmatpush1.msra.mxu0 %v5362
          %5724 = vmatprep.subr.mxu0 0.0
          %5725 = vmatpush1.msra.mxu0 %v5361
          %5726 = vmatprep.subr.mxu0 0.0
          %5727 = vmatpush1.msra.mxu0 %v5360
          %5728 = vmatprep.subr.mxu0 0.0
          %5729 = vmatpush1.msra.mxu0 %v5359
          %5730 = vmatprep.subr.mxu0 0.0
          %5731 = vmatpush2.msra.mxu0 %v5390
          %5732 = vmatprep.subr.mxu0 0.0
          %5733 = vmatpush2.msra.mxu0 %v5389
          %5734 = vmatprep.subr.mxu0 0.0
          %5735 = vmatpush2.msra.mxu0 %v5388
          %5736 = vmatprep.subr.mxu0 0.0
          %5737 = vmatpush2.msra.mxu0 %v5387
          %5738 = vmatprep.subr.mxu0 0.0
          %5739 = vmatpush2.msra.mxu0 %v5386
          %5740 = vmatprep.subr.mxu0 0.0
          %5741 = vmatpush2.msra.mxu0 %v5385
          %5742 = vmatprep.subr.mxu0 0.0
          %5743 = vmatpush2.msra.mxu0 %v5384
          %5744 = vmatprep.subr.mxu0 0.0
          %5745 = vmatpush2.msra.mxu0 %v5383
          %5746 = vmatprep.subr.mxu0 0.0
          %5747 = vmatpush2.msra.mxu0 %v5382
          %5748 = vmatprep.subr.mxu0 0.0
          %5749 = vmatpush2.msra.mxu0 %v5381
          %5750 = vmatprep.subr.mxu0 0.0
          %5751 = vmatpush2.msra.mxu0 %v5380
          %5752 = vmatprep.subr.mxu0 0.0
          %5753 = vmatpush2.msra.mxu0 %v5379
          %5754 = vmatprep.subr.mxu0 0.0
          %5755 = vmatpush2.msra.mxu0 %v5378
          %5756 = vmatprep.subr.mxu0 0.0
          %5757 = vmatpush2.msra.mxu0 %v5377
          %5758 = vmatprep.subr.mxu0 0.0
          %5759 = vmatpush2.msra.mxu0 %v5376
          %5760 = vmatprep.subr.mxu0 0.0
          %5761 = vmatpush2.msra.mxu0 %v5375
          %5762 = vmatprep.mubr.f32.mxu0 %v5284
          %5763 = vmatmul.mubr.f32.gmra.mxu0 %v5283
          %v5764 = vpop.f32.mrf.mxu0
          %v5765 = vadd.f32 %v5695, %v5764
          %v5766 = vpop.f32.mrf.mxu0
          %5767 = vdwg.mxu0
          %5768 = vmatprep.subr.mxu0 0.0
          %5769 = vmatpush1.msra.mxu0 %v5406
          %5770 = vmatprep.subr.mxu0 0.0
          %5771 = vmatpush1.msra.mxu0 %v5405
          %5772 = vmatprep.subr.mxu0 0.0
          %5773 = vmatpush1.msra.mxu0 %v5404
          %5774 = vmatprep.subr.mxu0 0.0
          %5775 = vmatpush1.msra.mxu0 %v5403
          %5776 = vmatprep.subr.mxu0 0.0
          %5777 = vmatpush1.msra.mxu0 %v5402
          %5778 = vmatprep.subr.mxu0 0.0
          %5779 = vmatpush1.msra.mxu0 %v5401
          %5780 = vmatprep.subr.mxu0 0.0
          %5781 = vmatpush1.msra.mxu0 %v5400
          %5782 = vmatprep.subr.mxu0 0.0
          %5783 = vmatpush1.msra.mxu0 %v5399
          %5784 = vmatprep.subr.mxu0 0.0
          %5785 = vmatpush1.msra.mxu0 %v5398
          %5786 = vmatprep.subr.mxu0 0.0
          %5787 = vmatpush1.msra.mxu0 %v5397
          %5788 = vmatprep.subr.mxu0 0.0
          %5789 = vmatpush1.msra.mxu0 %v5396
          %5790 = vmatprep.subr.mxu0 0.0
          %5791 = vmatpush1.msra.mxu0 %v5395
          %5792 = vmatprep.subr.mxu0 0.0
          %5793 = vmatpush1.msra.mxu0 %v5394
          %5794 = vmatprep.subr.mxu0 0.0
          %5795 = vmatpush1.msra.mxu0 %v5393
          %5796 = vmatprep.subr.mxu0 0.0
          %5797 = vmatpush1.msra.mxu0 %v5392
          %5798 = vmatprep.subr.mxu0 0.0
          %5799 = vmatpush1.msra.mxu0 %v5391
          %5800 = vmatprep.subr.mxu0 0.0
          %5801 = vmatpush2.msra.mxu0 %v5422
          %5802 = vmatprep.subr.mxu0 0.0
          %5803 = vmatpush2.msra.mxu0 %v5421
          %5804 = vmatprep.subr.mxu0 0.0
          %5805 = vmatpush2.msra.mxu0 %v5420
          %5806 = vmatprep.subr.mxu0 0.0
          %5807 = vmatpush2.msra.mxu0 %v5419
          %5808 = vmatprep.subr.mxu0 0.0
          %5809 = vmatpush2.msra.mxu0 %v5418
          %5810 = vmatprep.subr.mxu0 0.0
          %5811 = vmatpush2.msra.mxu0 %v5417
          %5812 = vmatprep.subr.mxu0 0.0
          %5813 = vmatpush2.msra.mxu0 %v5416
          %5814 = vmatprep.subr.mxu0 0.0
          %5815 = vmatpush2.msra.mxu0 %v5415
          %5816 = vmatprep.subr.mxu0 0.0
          %5817 = vmatpush2.msra.mxu0 %v5414
          %5818 = vmatprep.subr.mxu0 0.0
          %5819 = vmatpush2.msra.mxu0 %v5413
          %5820 = vmatprep.subr.mxu0 0.0
          %5821 = vmatpush2.msra.mxu0 %v5412
          %5822 = vmatprep.subr.mxu0 0.0
          %5823 = vmatpush2.msra.mxu0 %v5411
          %5824 = vmatprep.subr.mxu0 0.0
          %5825 = vmatpush2.msra.mxu0 %v5410
          %5826 = vmatprep.subr.mxu0 0.0
          %5827 = vmatpush2.msra.mxu0 %v5409
          %5828 = vmatprep.subr.mxu0 0.0
          %5829 = vmatpush2.msra.mxu0 %v5408
          %5830 = vmatprep.subr.mxu0 0.0
          %5831 = vmatpush2.msra.mxu0 %v5407
          %5832 = vmatprep.mubr.f32.mxu0 %v5286
          %5833 = vmatmul.mubr.f32.gmra.mxu0 %v5285
          %v5834 = vpop.f32.mrf.mxu0
          %v5835 = vadd.f32 %v5765, %v5834
          %v5836 = vpop.f32.mrf.mxu0
          %5837 = vdwg.mxu0
          %5838 = vmatprep.subr.mxu0 0.0
          %5839 = vmatpush1.msra.mxu0 %v5438
          %5840 = vmatprep.subr.mxu0 0.0
          %5841 = vmatpush1.msra.mxu0 %v5437
          %5842 = vmatprep.subr.mxu0 0.0
          %5843 = vmatpush1.msra.mxu0 %v5436
          %5844 = vmatprep.subr.mxu0 0.0
          %5845 = vmatpush1.msra.mxu0 %v5435
          %5846 = vmatprep.subr.mxu0 0.0
          %5847 = vmatpush1.msra.mxu0 %v5434
          %5848 = vmatprep.subr.mxu0 0.0
          %5849 = vmatpush1.msra.mxu0 %v5433
          %5850 = vmatprep.subr.mxu0 0.0
          %5851 = vmatpush1.msra.mxu0 %v5432
          %5852 = vmatprep.subr.mxu0 0.0
          %5853 = vmatpush1.msra.mxu0 %v5431
          %5854 = vmatprep.subr.mxu0 0.0
          %5855 = vmatpush1.msra.mxu0 %v5430
          %5856 = vmatprep.subr.mxu0 0.0
          %5857 = vmatpush1.msra.mxu0 %v5429
          %5858 = vmatprep.subr.mxu0 0.0
          %5859 = vmatpush1.msra.mxu0 %v5428
          %5860 = vmatprep.subr.mxu0 0.0
          %5861 = vmatpush1.msra.mxu0 %v5427
          %5862 = vmatprep.subr.mxu0 0.0
          %5863 = vmatpush1.msra.mxu0 %v5426
          %5864 = vmatprep.subr.mxu0 0.0
          %5865 = vmatpush1.msra.mxu0 %v5425
          %5866 = vmatprep.subr.mxu0 0.0
          %5867 = vmatpush1.msra.mxu0 %v5424
          %5868 = vmatprep.subr.mxu0 0.0
          %5869 = vmatpush1.msra.mxu0 %v5423
          %5870 = vmatprep.subr.mxu0 0.0
          %5871 = vmatpush2.msra.mxu0 %v5454
          %5872 = vmatprep.subr.mxu0 0.0
          %5873 = vmatpush2.msra.mxu0 %v5453
          %5874 = vmatprep.subr.mxu0 0.0
          %5875 = vmatpush2.msra.mxu0 %v5452
          %5876 = vmatprep.subr.mxu0 0.0
          %5877 = vmatpush2.msra.mxu0 %v5451
          %5878 = vmatprep.subr.mxu0 0.0
          %5879 = vmatpush2.msra.mxu0 %v5450
          %5880 = vmatprep.subr.mxu0 0.0
          %5881 = vmatpush2.msra.mxu0 %v5449
          %5882 = vmatprep.subr.mxu0 0.0
          %5883 = vmatpush2.msra.mxu0 %v5448
          %5884 = vmatprep.subr.mxu0 0.0
          %5885 = vmatpush2.msra.mxu0 %v5447
          %5886 = vmatprep.subr.mxu0 0.0
          %5887 = vmatpush2.msra.mxu0 %v5446
          %5888 = vmatprep.subr.mxu0 0.0
          %5889 = vmatpush2.msra.mxu0 %v5445
          %5890 = vmatprep.subr.mxu0 0.0
          %5891 = vmatpush2.msra.mxu0 %v5444
          %5892 = vmatprep.subr.mxu0 0.0
          %5893 = vmatpush2.msra.mxu0 %v5443
          %5894 = vmatprep.subr.mxu0 0.0
          %5895 = vmatpush2.msra.mxu0 %v5442
          %5896 = vmatprep.subr.mxu0 0.0
          %5897 = vmatpush2.msra.mxu0 %v5441
          %5898 = vmatprep.subr.mxu0 0.0
          %5899 = vmatpush2.msra.mxu0 %v5440
          %5900 = vmatprep.subr.mxu0 0.0
          %5901 = vmatpush2.msra.mxu0 %v5439
          %5902 = vmatprep.mubr.f32.mxu0 %v5288
          %5903 = vmatmul.mubr.f32.gmra.mxu0 %v5287
          %v5904 = vpop.f32.mrf.mxu0
          %v5905 = vadd.f32 %v5835, %v5904
          %v5906 = vpop.f32.mrf.mxu0
          %5907 = vdwg.mxu0
          %5908 = vmatprep.subr.mxu0 0.0
          %5909 = vmatpush1.msra.mxu0 %v5470
          %5910 = vmatprep.subr.mxu0 0.0
          %5911 = vmatpush1.msra.mxu0 %v5469
          %5912 = vmatprep.subr.mxu0 0.0
          %5913 = vmatpush1.msra.mxu0 %v5468
          %5914 = vmatprep.subr.mxu0 0.0
          %5915 = vmatpush1.msra.mxu0 %v5467
          %5916 = vmatprep.subr.mxu0 0.0
          %5917 = vmatpush1.msra.mxu0 %v5466
          %5918 = vmatprep.subr.mxu0 0.0
          %5919 = vmatpush1.msra.mxu0 %v5465
          %5920 = vmatprep.subr.mxu0 0.0
          %5921 = vmatpush1.msra.mxu0 %v5464
          %5922 = vmatprep.subr.mxu0 0.0
          %5923 = vmatpush1.msra.mxu0 %v5463
          %5924 = vmatprep.subr.mxu0 0.0
          %5925 = vmatpush1.msra.mxu0 %v5462
          %5926 = vmatprep.subr.mxu0 0.0
          %5927 = vmatpush1.msra.mxu0 %v5461
          %5928 = vmatprep.subr.mxu0 0.0
          %5929 = vmatpush1.msra.mxu0 %v5460
          %5930 = vmatprep.subr.mxu0 0.0
          %5931 = vmatpush1.msra.mxu0 %v5459
          %5932 = vmatprep.subr.mxu0 0.0
          %5933 = vmatpush1.msra.mxu0 %v5458
          %5934 = vmatprep.subr.mxu0 0.0
          %5935 = vmatpush1.msra.mxu0 %v5457
          %5936 = vmatprep.subr.mxu0 0.0
          %5937 = vmatpush1.msra.mxu0 %v5456
          %5938 = vmatprep.subr.mxu0 0.0
          %5939 = vmatpush1.msra.mxu0 %v5455
          %5940 = vmatprep.subr.mxu0 0.0
          %5941 = vmatpush2.msra.mxu0 %v5486
          %5942 = vmatprep.subr.mxu0 0.0
          %5943 = vmatpush2.msra.mxu0 %v5485
          %5944 = vmatprep.subr.mxu0 0.0
          %5945 = vmatpush2.msra.mxu0 %v5484
          %5946 = vmatprep.subr.mxu0 0.0
          %5947 = vmatpush2.msra.mxu0 %v5483
          %5948 = vmatprep.subr.mxu0 0.0
          %5949 = vmatpush2.msra.mxu0 %v5482
          %5950 = vmatprep.subr.mxu0 0.0
          %5951 = vmatpush2.msra.mxu0 %v5481
          %5952 = vmatprep.subr.mxu0 0.0
          %5953 = vmatpush2.msra.mxu0 %v5480
          %5954 = vmatprep.subr.mxu0 0.0
          %5955 = vmatpush2.msra.mxu0 %v5479
          %5956 = vmatprep.subr.mxu0 0.0
          %5957 = vmatpush2.msra.mxu0 %v5478
          %5958 = vmatprep.subr.mxu0 0.0
          %5959 = vmatpush2.msra.mxu0 %v5477
          %5960 = vmatprep.subr.mxu0 0.0
          %5961 = vmatpush2.msra.mxu0 %v5476
          %5962 = vmatprep.subr.mxu0 0.0
          %5963 = vmatpush2.msra.mxu0 %v5475
          %5964 = vmatprep.subr.mxu0 0.0
          %5965 = vmatpush2.msra.mxu0 %v5474
          %5966 = vmatprep.subr.mxu0 0.0
          %5967 = vmatpush2.msra.mxu0 %v5473
          %5968 = vmatprep.subr.mxu0 0.0
          %5969 = vmatpush2.msra.mxu0 %v5472
          %5970 = vmatprep.subr.mxu0 0.0
          %5971 = vmatpush2.msra.mxu0 %v5471
          %5972 = vmatprep.mubr.f32.mxu0 %v5290
          %5973 = vmatmul.mubr.f32.gmra.mxu0 %v5289
          %v5974 = vpop.f32.mrf.mxu0
          %v5975 = vadd.f32 %v5905, %v5974
          %v5976 = vpop.f32.mrf.mxu0
          %5977 = vdwg.mxu0
          %5978 = vmatprep.subr.mxu0 0.0
          %5979 = vmatpush1.msra.mxu0 %v5502
          %5980 = vmatprep.subr.mxu0 0.0
          %5981 = vmatpush1.msra.mxu0 %v5501
          %5982 = vmatprep.subr.mxu0 0.0
          %5983 = vmatpush1.msra.mxu0 %v5500
          %5984 = vmatprep.subr.mxu0 0.0
          %5985 = vmatpush1.msra.mxu0 %v5499
          %5986 = vmatprep.subr.mxu0 0.0
          %5987 = vmatpush1.msra.mxu0 %v5498
          %5988 = vmatprep.subr.mxu0 0.0
          %5989 = vmatpush1.msra.mxu0 %v5497
          %5990 = vmatprep.subr.mxu0 0.0
          %5991 = vmatpush1.msra.mxu0 %v5496
          %5992 = vmatprep.subr.mxu0 0.0
          %5993 = vmatpush1.msra.mxu0 %v5495
          %5994 = vmatprep.subr.mxu0 0.0
          %5995 = vmatpush1.msra.mxu0 %v5494
          %5996 = vmatprep.subr.mxu0 0.0
          %5997 = vmatpush1.msra.mxu0 %v5493
          %5998 = vmatprep.subr.mxu0 0.0
          %5999 = vmatpush1.msra.mxu0 %v5492
          %6000 = vmatprep.subr.mxu0 0.0
          %6001 = vmatpush1.msra.mxu0 %v5491
          %6002 = vmatprep.subr.mxu0 0.0
          %6003 = vmatpush1.msra.mxu0 %v5490
          %6004 = vmatprep.subr.mxu0 0.0
          %6005 = vmatpush1.msra.mxu0 %v5489
          %6006 = vmatprep.subr.mxu0 0.0
          %6007 = vmatpush1.msra.mxu0 %v5488
          %6008 = vmatprep.subr.mxu0 0.0
          %6009 = vmatpush1.msra.mxu0 %v5487
          %6010 = vmatprep.subr.mxu0 0.0
          %6011 = vmatpush2.msra.mxu0 %v5518
          %6012 = vmatprep.subr.mxu0 0.0
          %6013 = vmatpush2.msra.mxu0 %v5517
          %6014 = vmatprep.subr.mxu0 0.0
          %6015 = vmatpush2.msra.mxu0 %v5516
          %6016 = vmatprep.subr.mxu0 0.0
          %6017 = vmatpush2.msra.mxu0 %v5515
          %6018 = vmatprep.subr.mxu0 0.0
          %6019 = vmatpush2.msra.mxu0 %v5514
          %6020 = vmatprep.subr.mxu0 0.0
          %6021 = vmatpush2.msra.mxu0 %v5513
          %6022 = vmatprep.subr.mxu0 0.0
          %6023 = vmatpush2.msra.mxu0 %v5512
          %6024 = vmatprep.subr.mxu0 0.0
          %6025 = vmatpush2.msra.mxu0 %v5511
          %6026 = vmatprep.subr.mxu0 0.0
          %6027 = vmatpush2.msra.mxu0 %v5510
          %6028 = vmatprep.subr.mxu0 0.0
          %6029 = vmatpush2.msra.mxu0 %v5509
          %6030 = vmatprep.subr.mxu0 0.0
          %6031 = vmatpush2.msra.mxu0 %v5508
          %6032 = vmatprep.subr.mxu0 0.0
          %6033 = vmatpush2.msra.mxu0 %v5507
          %6034 = vmatprep.subr.mxu0 0.0
          %6035 = vmatpush2.msra.mxu0 %v5506
          %6036 = vmatprep.subr.mxu0 0.0
          %6037 = vmatpush2.msra.mxu0 %v5505
          %6038 = vmatprep.subr.mxu0 0.0
          %6039 = vmatpush2.msra.mxu0 %v5504
          %6040 = vmatprep.subr.mxu0 0.0
          %6041 = vmatpush2.msra.mxu0 %v5503
          %6042 = vmatprep.mubr.f32.mxu0 %v5292
          %6043 = vmatmul.mubr.f32.gmra.mxu0 %v5291
          %v6044 = vpop.f32.mrf.mxu0
          %v6045 = vadd.f32 %v5975, %v6044
          %v6046 = vpop.f32.mrf.mxu0
          %6047 = vdwg.mxu0
          %6048 = vmatprep.subr.mxu0 0.0
          %6049 = vmatpush1.msra.mxu0 %v5534
          %6050 = vmatprep.subr.mxu0 0.0
          %6051 = vmatpush1.msra.mxu0 %v5533
          %6052 = vmatprep.subr.mxu0 0.0
          %6053 = vmatpush1.msra.mxu0 %v5532
          %6054 = vmatprep.subr.mxu0 0.0
          %6055 = vmatpush1.msra.mxu0 %v5531
          %6056 = vmatprep.subr.mxu0 0.0
          %6057 = vmatpush1.msra.mxu0 %v5530
          %6058 = vmatprep.subr.mxu0 0.0
          %6059 = vmatpush1.msra.mxu0 %v5529
          %6060 = vmatprep.subr.mxu0 0.0
          %6061 = vmatpush1.msra.mxu0 %v5528
          %6062 = vmatprep.subr.mxu0 0.0
          %6063 = vmatpush1.msra.mxu0 %v5527
          %6064 = vmatprep.subr.mxu0 0.0
          %6065 = vmatpush1.msra.mxu0 %v5526
          %6066 = vmatprep.subr.mxu0 0.0
          %6067 = vmatpush1.msra.mxu0 %v5525
          %6068 = vmatprep.subr.mxu0 0.0
          %6069 = vmatpush1.msra.mxu0 %v5524
          %6070 = vmatprep.subr.mxu0 0.0
          %6071 = vmatpush1.msra.mxu0 %v5523
          %6072 = vmatprep.subr.mxu0 0.0
          %6073 = vmatpush1.msra.mxu0 %v5522
          %6074 = vmatprep.subr.mxu0 0.0
          %6075 = vmatpush1.msra.mxu0 %v5521
          %6076 = vmatprep.subr.mxu0 0.0
          %6077 = vmatpush1.msra.mxu0 %v5520
          %6078 = vmatprep.subr.mxu0 0.0
          %6079 = vmatpush1.msra.mxu0 %v5519
          %6080 = vmatprep.subr.mxu0 0.0
          %6081 = vmatpush2.msra.mxu0 %v5550
          %6082 = vmatprep.subr.mxu0 0.0
          %6083 = vmatpush2.msra.mxu0 %v5549
          %6084 = vmatprep.subr.mxu0 0.0
          %6085 = vmatpush2.msra.mxu0 %v5548
          %6086 = vmatprep.subr.mxu0 0.0
          %6087 = vmatpush2.msra.mxu0 %v5547
          %6088 = vmatprep.subr.mxu0 0.0
          %6089 = vmatpush2.msra.mxu0 %v5546
          %6090 = vmatprep.subr.mxu0 0.0
          %6091 = vmatpush2.msra.mxu0 %v5545
          %6092 = vmatprep.subr.mxu0 0.0
          %6093 = vmatpush2.msra.mxu0 %v5544
          %6094 = vmatprep.subr.mxu0 0.0
          %6095 = vmatpush2.msra.mxu0 %v5543
          %6096 = vmatprep.subr.mxu0 0.0
          %6097 = vmatpush2.msra.mxu0 %v5542
          %6098 = vmatprep.subr.mxu0 0.0
          %6099 = vmatpush2.msra.mxu0 %v5541
          %6100 = vmatprep.subr.mxu0 0.0
          %6101 = vmatpush2.msra.mxu0 %v5540
          %6102 = vmatprep.subr.mxu0 0.0
          %6103 = vmatpush2.msra.mxu0 %v5539
          %6104 = vmatprep.subr.mxu0 0.0
          %6105 = vmatpush2.msra.mxu0 %v5538
          %6106 = vmatprep.subr.mxu0 0.0
          %6107 = vmatpush2.msra.mxu0 %v5537
          %6108 = vmatprep.subr.mxu0 0.0
          %6109 = vmatpush2.msra.mxu0 %v5536
          %6110 = vmatprep.subr.mxu0 0.0
          %6111 = vmatpush2.msra.mxu0 %v5535
          %6112 = vmatprep.mubr.f32.mxu0 %v5294
          %6113 = vmatmul.mubr.f32.gmra.mxu0 %v5293
          %v6114 = vpop.f32.mrf.mxu0
          %v6115 = vadd.f32 %v6045, %v6114
          %v6116 = vpop.f32.mrf.mxu0
          %6117 = vdwg.mxu0
          %6118 = vst [vmem:[#allocation12] sm:$0x3] %v6115
        $region68: #{tpu_custom_call.1} parent=39 // pred_fallthru
          _
        // Predicated region
        $region69: #{tpu_custom_call.1} parent=39 // pred_check
          %p6119 = pneg %p164
        $region70: #{tpu_custom_call.1} parent=39 // pred_check_branch
          %6121 = sbr.rel (%p6119) target = $region72
        $region71: #{tpu_custom_call.1} parent=39 // pred_region
          %s6123 = ssub.s32 32, 32
          %6124 = vsyncadd [#allocation5], %s6123
          %s6125 = smul.addr %s26, 32
          %s6126 = scalar_lea.hbm %s5, %s6125
          %s6128 = sshll.u32 [#allocation12], 4
          %s6129 = int_to_ptr.vmem [resolvable:$true] %s6128
          %6131 = dma.vmem_to_hbm [thread:$0]  %s6129, 32, %s6126, [#allocation5]
        $region72: #{tpu_custom_call.1} parent=39 // pred_fallthru
          _
        // Predicated region
        $region73: #{tpu_custom_call.1} parent=39 // pred_check
          %p6132 = pneg %p164
        $region74: #{tpu_custom_call.1} parent=39 // pred_check_branch
          %6134 = sbr.rel (%p6132) target = $region76
        $region75: #{tpu_custom_call.1} parent=39 // pred_region
          %6135 = dma.done [#allocation5], 32
        $region76: #{tpu_custom_call.1} parent=39 // pred_fallthru
          _
      $region40: #{tpu_custom_call.1} parent=5 // pred_fallthru
        _
      %p6136 = scmp.le.s32.totalorder 2, %s17
      // Predicated region
      $region77: #{tpu_custom_call.1} parent=5 // pred_check
        %p6137 = pneg %p6136
      $region78: #{tpu_custom_call.1} parent=5 // pred_check_branch
        %6139 = sbr.rel (%p6137) target = $region80
      $region79: #{tpu_custom_call.1} parent=5 // pred_region
        %s6140 = ssub.s32 %s17, 2
      $region80: #{tpu_custom_call.1} parent=5 // pred_fallthru
        _
    $region6: #{tpu_custom_call.1} parent=1 // loop_footer
      %s21 = sadd.s32 1, %s17
    $region7: #{tpu_custom_call.1} parent=1 // loop_footer_branch
      %16 = sbr.rel target = $region3
    $region8: #{tpu_custom_call.1} parent=1 // loop_exit
      _
    %6141 = vsyncpa [#allocation4], 1
    %s6142 = scalar_lea.sflag [#allocation4], 1
    %6143 = vsyncpa %s6142, 1
    %6144 = vsyncpa [#allocation7], 1
    %6145 = vsyncpa [#allocation10], 1
    %6146 = vsyncpa [#allocation5], 1
    %s6147 = scalar_lea.sflag [#allocation5], 1
    %6148 = vsyncpa %s6147, 1

</llo_original>
